<compile_context>
chip_gen: v7x
topology: tpu7x:2x2x1
jax: 0.10.0
libtpu: 0.0.40
codegen_flags: <defaults>
</compile_context>

<pallas_src>
import functools

import jax
import jax.numpy as jnp
from jax.experimental import pallas as pl
from jax.experimental.pallas import tpu as pltpu

EXPANSION = 4


# --------------------------------------------------------------------------- #
# Kernels
# --------------------------------------------------------------------------- #
def _bottleneck_proj_kernel(x_ref,
                            w1_ref, b1_ref,
                            w2_ref, b2_ref,
                            w3_ref, wd_ref, b3_ref,
                            o_ref):
    """Bottleneck with projection shortcut on a (TM, C_in_p) tile of pixels.

    BN scales are pre-folded into the weights; conv3 and the downsample
    projection are two accumulating MXU dots (residual fused, biases merged).
    """
    x = x_ref[...]                                                  # bf16 (TM, C_in_p)

    # conv1 (1x1) + bn1(shift) + relu
    h = jnp.dot(x, w1_ref[...], preferred_element_type=jnp.float32)
    h = jnp.maximum(h + b1_ref[...], 0.0)

    # conv2 (1x1, stride=1) + bn2(shift) + relu
    h = jnp.dot(h.astype(jnp.bfloat16), w2_ref[...],
                preferred_element_type=jnp.float32)
    h = jnp.maximum(h + b2_ref[...], 0.0)

    # dropout: eval mode -> identity

    # conv3 + bn3  and  downsample(conv1x1 + bn) + residual: one f32 accumulator.
    out = jnp.dot(h.astype(jnp.bfloat16), w3_ref[...],
                  preferred_element_type=jnp.float32)
    out = out + jnp.dot(x, wd_ref[...], preferred_element_type=jnp.float32)
    o_ref[...] = jnp.maximum(out + b3_ref[...], 0.0).astype(o_ref.dtype)


def _bottleneck_identity_kernel(x_ref,
                                w1_ref, b1_ref,
                                w2_ref, b2_ref,
                                w3_ref, b3_ref,
                                o_ref):
    """Bottleneck with Identity shortcut (stride==1, in_planes == expansion*planes)."""
    x = x_ref[...]                                                  # bf16 (TM, C_p)

    h = jnp.dot(x, w1_ref[...], preferred_element_type=jnp.float32)
    h = jnp.maximum(h + b1_ref[...], 0.0)

    h = jnp.dot(h.astype(jnp.bfloat16), w2_ref[...],
                preferred_element_type=jnp.float32)
    h = jnp.maximum(h + b2_ref[...], 0.0)

    out = jnp.dot(h.astype(jnp.bfloat16), w3_ref[...],
                  preferred_element_type=jnp.float32)
    out = out + b3_ref[...] + x.astype(jnp.float32)                 # identity residual
    o_ref[...] = jnp.maximum(out, 0.0).astype(o_ref.dtype)


# --------------------------------------------------------------------------- #
# Parameter preparation (runs once, outside the hot path)
# --------------------------------------------------------------------------- #
def _round_up(n, m):
    return ((n + m - 1) // m) * m


def _fold_bn(gamma, beta, mean, var, eps=1e-5):
    scale = gamma / jnp.sqrt(var + eps)
    shift = beta - mean * scale
    return scale.reshape(1, -1), shift.reshape(1, -1)


def prepare_params(params):
    """Fold BN scales into the weights, merge the conv3/downsample biases, pad
    channels to multiples of 128 (lane-dense), cast weights to bf16."""
    has_projection = "wd" in params

    w1 = params["w1"] * params["s1"]          # (C_in, P)
    w2 = params["w2"] * params["s2"]          # (P, P)
    w3 = params["w3"] * params["s3"]          # (P, C_out)
    b1, b2, b3 = params["b1"], params["b2"], params["b3"]

    C_in, planes = w1.shape
    C_out = w3.shape[1]
    C_in_p = _round_up(C_in, 128)
    P_p = _round_up(planes, 128)
    C_out_p = _round_up(C_out, 128)

    def pad_w(w, rows, cols):
        return jnp.pad(w, ((0, rows - w.shape[0]), (0, cols - w.shape[1])))

    def pad_b(b, cols):
        return jnp.pad(b, ((0, 0), (0, cols - b.shape[1])))

    prepped = {
        "w1": pad_w(w1, C_in_p, P_p).astype(jnp.bfloat16),
        "b1": pad_b(b1, P_p).astype(jnp.float32),
        "w2": pad_w(w2, P_p, P_p).astype(jnp.bfloat16),
        "b2": pad_b(b2, P_p).astype(jnp.float32),
        "w3": pad_w(w3, P_p, C_out_p).astype(jnp.bfloat16),
    }
    if has_projection:
        wd = params["wd"] * params["sd"]      # (C_in, C_out)
        prepped["wd"] = pad_w(wd, C_in_p, C_out_p).astype(jnp.bfloat16)
        prepped["b3"] = pad_b(b3 + params["bd"], C_out_p).astype(jnp.float32)
    else:
        prepped["b3"] = pad_b(b3, C_out_p).astype(jnp.float32)

    meta = dict(C_in=C_in, planes=planes, C_out=C_out,
                C_in_p=C_in_p, P_p=P_p, C_out_p=C_out_p,
                has_projection=has_projection)
    return prepped, meta


# --------------------------------------------------------------------------- #
# Tiling / VMEM budget helpers
# --------------------------------------------------------------------------- #
def _vmem_capacity_budget():
    """3/4 of this chip's VMEM, falling back to a conservative 48 MiB."""
    try:
        return int(pltpu.get_tpu_info().vmem_capacity_bytes) * 3 // 4
    except Exception:
        return 48 * 1024 * 1024


def _vmem_estimate(tile_m, C_in_p, P_p, C_out_p, has_projection, single_buffer):
    wb = 1 if single_buffer else 2
    w_bytes = 2 * (C_in_p * P_p + P_p * P_p + P_p * C_out_p
                   + (C_in_p * C_out_p if has_projection else 0))   # bf16 weights
    b_bytes = 4 * (2 * P_p + C_out_p)                                # f32 biases
    act_bytes = 2 * 2 * tile_m * (C_in_p + C_out_p)                  # bf16 x/out, 2 bufs
    return wb * (w_bytes + b_bytes) + act_bytes


def _pick_tile_m(M, max_tile=512):
    """Pick a row-tile (multiple of 16) giving an even, >=2-tile grid when possible."""
    M16 = _round_up(max(M, 16), 16)
    if M16 <= max_tile:
        return max(_round_up((M16 + 1) // 2, 16), 16)     # 2 tiles -> both v7x TCs fed
    n = -(-M16 // max_tile)
    if n % 2:
        n += 1                                            # even grid for 2-TC balance
    return max(_round_up(-(-M16 // n), 16), 16)


# --------------------------------------------------------------------------- #
# Forward wrappers
# --------------------------------------------------------------------------- #
def bottleneck_forward_nhwc(x_nhwc, prepped, meta, *, tile_m=None,
                            single_buffer_weights=True, return_padded=False):
    """Hot path: NHWC in, NHWC out (bf16, no layout transposes)."""
    N, H, W, C_in = x_nhwc.shape
    assert C_in == meta["C_in"]
    C_in_p, P_p, C_out_p = meta["C_in_p"], meta["P_p"], meta["C_out_p"]
    C_out = meta["C_out"]
    has_projection = meta["has_projection"]
    if not has_projection:
        assert C_in_p == C_out_p, "identity shortcut requires C_in == C_out"

    M = N * H * W
    if tile_m is None:
        tile_m = _pick_tile_m(M)

    # Respect this generation's VMEM budget (v7x: 64 MiB/TC) by shrinking the
    # row tile rather than over-subscribing.
    vmem_cap = _vmem_capacity_budget()
    while tile_m > 64 and _vmem_estimate(tile_m, C_in_p, P_p, C_out_p,
                                         has_projection,
                                         single_buffer_weights) > vmem_cap:
        tile_m = max(64, tile_m // 2)
    vmem_limit = int(min(vmem_cap, max(
        2 * _vmem_estimate(tile_m, C_in_p, P_p, C_out_p, has_projection,
                           single_buffer_weights),
        32 * 1024 * 1024)))

    n_tiles = pl.cdiv(M, tile_m)
    M_pad = n_tiles * tile_m

    # Wrapper-side pad/cast only when actually needed (real ResNet stages have
    # 128-multiple channels and tile-divisible pixel counts -> zero extra HBM passes).
    x = x_nhwc.reshape(M, C_in)
    if M_pad != M or C_in_p != C_in:
        x = jnp.pad(x, ((0, M_pad - M), (0, C_in_p - C_in)))
    if x.dtype != jnp.bfloat16:
        x = x.astype(jnp.bfloat16)

    # Grid-invariant operands: single-buffer (constant index_map => no re-DMA).
    def const_spec(shape):
        if single_buffer_weights:
            return pl.BlockSpec(shape, lambda i: (0, 0),
                                pipeline_mode=pl.Buffered(1))
        return pl.BlockSpec(shape, lambda i: (0, 0))

    row = lambda i: (i, 0)

    if has_projection:
        kernel = _bottleneck_proj_kernel
        in_specs = [
            pl.BlockSpec((tile_m, C_in_p), row),      # x tile (bf16)
            const_spec((C_in_p, P_p)),                # w1 * s1
            const_spec((1, P_p)),                     # b1
            const_spec((P_p, P_p)),                   # w2 * s2
            const_spec((1, P_p)),                     # b2
            const_spec((P_p, C_out_p)),               # w3 * s3
            const_spec((C_in_p, C_out_p)),            # wd * sd
            const_spec((1, C_out_p)),                 # b3 + bd
        ]
        operands = (x, prepped["w1"], prepped["b1"], prepped["w2"], prepped["b2"],
                    prepped["w3"], prepped["wd"], prepped["b3"])
    else:
        kernel = _bottleneck_identity_kernel
        in_specs = [
            pl.BlockSpec((tile_m, C_in_p), row),      # x tile (bf16)
            const_spec((C_in_p, P_p)),                # w1 * s1
            const_spec((1, P_p)),                     # b1
            const_spec((P_p, P_p)),                   # w2 * s2
            const_spec((1, P_p)),                     # b2
            const_spec((P_p, C_out_p)),               # w3 * s3
            const_spec((1, C_out_p)),                 # b3
        ]
        operands = (x, prepped["w1"], prepped["b1"], prepped["w2"], prepped["b2"],
                    prepped["w3"], prepped["b3"])

    out_flat = pl.pallas_call(
        kernel,
        out_shape=jax.ShapeDtypeStruct((M_pad, C_out_p), jnp.bfloat16),
        grid_spec=pltpu.PrefetchScalarGridSpec(
            num_scalar_prefetch=0,
            grid=(n_tiles,),
            in_specs=in_specs,
            out_specs=pl.BlockSpec((tile_m, C_out_p), row),
        ),
        compiler_params=pltpu.CompilerParams(
            dimension_semantics=("parallel",),
            vmem_limit_bytes=vmem_limit,
        ),
    )(*operands)

    if return_padded:
        # Feed the padded (M_pad, C_out_p) bf16 slab straight into the next layer.
        return out_flat
    return out_flat[:M, :C_out].reshape(N, H, W, C_out)


def bottleneck_forward(x_nchw, prepped, meta, *, tile_m=None,
                       single_buffer_weights=True):
    """PyTorch-parity NCHW/f32 wrapper.  For best performance keep the whole
    network NHWC-bf16 and call `bottleneck_forward_nhwc` (with return_padded)
    directly — these transposes/casts are full HBM passes over the activation."""
    x = jnp.transpose(x_nchw, (0, 2, 3, 1))
    y = bottleneck_forward_nhwc(x, prepped, meta, tile_m=tile_m,
                                single_buffer_weights=single_buffer_weights)
    return jnp.transpose(y, (0, 3, 1, 2)).astype(jnp.float32)


# --------------------------------------------------------------------------- #
# Synthetic parameters + pure-JAX reference
# --------------------------------------------------------------------------- #
def make_params(key, in_planes, planes, stride=1):
    """Deterministic synthetic parameters (conv weights + folded BN stats)."""
    C_out = EXPANSION * planes
    has_projection = (stride != 1) or (in_planes != C_out)
    ks = jax.random.split(key, 8)

    def conv_w(k, cin, cout):
        # PyTorch conv weight is (cout, cin, 1, 1); stored as (cin, cout).
        return 0.1 * jax.random.normal(k, (cin, cout), jnp.float32)

    def bn(k, c):
        k1, k2, k3, k4 = jax.random.split(k, 4)
        gamma = 1.0 + 0.1 * jax.random.normal(k1, (c,), jnp.float32)
        beta = 0.1 * jax.random.normal(k2, (c,), jnp.float32)
        mean = 0.1 * jax.random.normal(k3, (c,), jnp.float32)
        var = 0.5 + jax.random.uniform(k4, (c,), jnp.float32)
        return _fold_bn(gamma, beta, mean, var)

    s1, b1 = bn(ks[1], planes)
    s2, b2 = bn(ks[3], planes)
    s3, b3 = bn(ks[5], C_out)
    params = {
        "w1": conv_w(ks[0], in_planes, planes), "s1": s1, "b1": b1,
        "w2": conv_w(ks[2], planes, planes), "s2": s2, "b2": b2,
        "w3": conv_w(ks[4], planes, C_out), "s3": s3, "b3": b3,
    }
    if has_projection:
        sd, bd = bn(ks[7], C_out)
        params.update({"wd": conv_w(ks[6], in_planes, C_out), "sd": sd, "bd": bd})
    return params


def _reference_forward(x_nchw, params):
    """Pure-JAX f32 reference of the same eval-mode bottleneck."""
    N, C, H, W = x_nchw.shape
    x = jnp.transpose(x_nchw, (0, 2, 3, 1)).reshape(-1, C)
    h = jnp.maximum(x @ params["w1"] * params["s1"] + params["b1"], 0.0)
    h = jnp.maximum(h @ params["w2"] * params["s2"] + params["b2"], 0.0)
    h = h @ params["w3"] * params["s3"] + params["b3"]
    if "wd" in params:
        sc = x @ params["wd"] * params["sd"] + params["bd"]
    else:
        sc = x
    out = jnp.maximum(h + sc, 0.0)
    C_out = out.shape[-1]
    return jnp.transpose(out.reshape(N, H, W, C_out), (0, 3, 1, 2))


# --------------------------------------------------------------------------- #
# Demo / self-test
# --------------------------------------------------------------------------- #
if __name__ == "__main__":
    key = jax.random.PRNGKey(0)
    k_x1, k_p1, k_x2, k_p2 = jax.random.split(key, 4)

    # ---- Test 1: projection shortcut (in_planes != expansion*planes) ----
    # batch=2, in_planes=16, planes=8 (-> 32 out channels), 16x16 spatial.
    N, in_planes, planes, H, W = 2, 16, 8, 16, 16
    x1 = jax.random.normal(k_x1, (N, in_planes, H, W), jnp.float32)
    p1 = make_params(k_p1, in_planes, planes)
    prepped1, meta1 = prepare_params(p1)

    single_buffer = True
    fwd1 = jax.jit(functools.partial(bottleneck_forward, meta=meta1,
                                     single_buffer_weights=True))
    try:
        out1 = jax.block_until_ready(fwd1(x1, prepped1))
    except Exception:
        # pl.Buffered(1) single-buffering not supported on this JAX build;
        # fall back to default double-buffered constant operands.
        single_buffer = False
        fwd1 = jax.jit(functools.partial(bottleneck_forward, meta=meta1,
                                         single_buffer_weights=False))
        out1 = jax.block_until_ready(fwd1(x1, prepped1))

    ref1 = _reference_forward(x1, p1)
    assert out1.shape == (N, EXPANSION * planes, H, W)
    assert jnp.allclose(out1, ref1, atol=5e-2, rtol=5e-2), \
        "projection-path mismatch vs JAX reference"

    # ---- Test 2: identity shortcut (stride=1, in_planes == expansion*planes) ----
    in_planes2, planes2 = 32, 8
    x2 = jax.random.normal(k_x2, (N, in_planes2, H, W), jnp.float32)
    p2 = make_params(k_p2, in_planes2, planes2)
    prepped2, meta2 = prepare_params(p2)
    fwd2 = jax.jit(functools.partial(bottleneck_forward, meta=meta2,
                                     single_buffer_weights=single_buffer))
    out2 = jax.block_until_ready(fwd2(x2, prepped2))
    ref2 = _reference_forward(x2, p2)
    assert out2.shape == (N, EXPANSION * planes2, H, W)
    assert jnp.allclose(out2, ref2, atol=5e-2, rtol=5e-2), \
        "identity-path mismatch vs JAX reference"

    print("KERNEL_OK")
</pallas_src>

<mosaic_0001>
module attributes {stable_mosaic.version = 11 : i64} {
  func.func @_bottleneck_proj_kernel(%arg0: i32, %arg1: memref<256x128xbf16, #tpu.memory_space<vmem>>, %arg2: memref<128x128xbf16, #tpu.memory_space<vmem>>, %arg3: memref<1x128xf32, #tpu.memory_space<vmem>>, %arg4: memref<128x128xbf16, #tpu.memory_space<vmem>>, %arg5: memref<1x128xf32, #tpu.memory_space<vmem>>, %arg6: memref<128x128xbf16, #tpu.memory_space<vmem>>, %arg7: memref<128x128xbf16, #tpu.memory_space<vmem>>, %arg8: memref<1x128xf32, #tpu.memory_space<vmem>>, %arg9: memref<256x128xbf16, #tpu.memory_space<vmem>>) attributes {dimension_semantics = [#tpu.dimension_semantics<parallel>], iteration_bounds = array<i64: 2>, scalar_prefetch = 0 : i64, scratch_operands = 0 : i64, tpu.core_type = #tpu.core_type<tc>, window_params = [{transform_indices = @transform_0, window_bounds = array<i64: 256, 128>}, {pipeline_mode = #tpu.pipeline_mode<synchronous>, transform_indices = @transform_1, window_bounds = array<i64: 128, 128>}, {pipeline_mode = #tpu.pipeline_mode<synchronous>, transform_indices = @transform_2, window_bounds = array<i64: 1, 128>}, {pipeline_mode = #tpu.pipeline_mode<synchronous>, transform_indices = @transform_3, window_bounds = array<i64: 128, 128>}, {pipeline_mode = #tpu.pipeline_mode<synchronous>, transform_indices = @transform_4, window_bounds = array<i64: 1, 128>}, {pipeline_mode = #tpu.pipeline_mode<synchronous>, transform_indices = @transform_5, window_bounds = array<i64: 128, 128>}, {pipeline_mode = #tpu.pipeline_mode<synchronous>, transform_indices = @transform_6, window_bounds = array<i64: 128, 128>}, {pipeline_mode = #tpu.pipeline_mode<synchronous>, transform_indices = @transform_7, window_bounds = array<i64: 1, 128>}, {transform_indices = @transform_8, window_bounds = array<i64: 256, 128>}]} {
    %c0 = arith.constant 0 : index
    %c0_0 = arith.constant 0 : index
    %0 = vector.load %arg1[%c0, %c0_0] : memref<256x128xbf16, #tpu.memory_space<vmem>>, vector<256x128xbf16>
    %c0_1 = arith.constant 0 : index
    %c0_2 = arith.constant 0 : index
    %1 = vector.load %arg2[%c0_1, %c0_2] : memref<128x128xbf16, #tpu.memory_space<vmem>>, vector<128x128xbf16>
    %cst = arith.constant dense<0.000000e+00> : vector<256x128xf32>
    %2 = tpu.matmul %0, %1, %cst {dimension_numbers = #tpu.dot_dimension_numbers<[1], [0], [0], [1], [0, 0, 1, 1], [], []>} : vector<256x128xbf16>, vector<128x128xbf16>, vector<256x128xf32> -> vector<256x128xf32>
    %c0_3 = arith.constant 0 : index
    %c0_4 = arith.constant 0 : index
    %3 = vector.load %arg3[%c0_3, %c0_4] : memref<1x128xf32, #tpu.memory_space<vmem>>, vector<1x128xf32>
    %4 = vector.broadcast %3 : vector<1x128xf32> to vector<256x128xf32>
    %5 = arith.addf %2, %4 : vector<256x128xf32>
    %cst_5 = arith.constant 0.000000e+00 : f32
    %6 = vector.broadcast %cst_5 : f32 to vector<256x128xf32>
    %7 = arith.maximumf %5, %6 : vector<256x128xf32>
    %8 = arith.truncf %7 : vector<256x128xf32> to vector<256x128xbf16>
    %c0_6 = arith.constant 0 : index
    %c0_7 = arith.constant 0 : index
    %9 = vector.load %arg4[%c0_6, %c0_7] : memref<128x128xbf16, #tpu.memory_space<vmem>>, vector<128x128xbf16>
    %cst_8 = arith.constant dense<0.000000e+00> : vector<256x128xf32>
    %10 = tpu.matmul %8, %9, %cst_8 {dimension_numbers = #tpu.dot_dimension_numbers<[1], [0], [0], [1], [0, 0, 1, 1], [], []>} : vector<256x128xbf16>, vector<128x128xbf16>, vector<256x128xf32> -> vector<256x128xf32>
    %c0_9 = arith.constant 0 : index
    %c0_10 = arith.constant 0 : index
    %11 = vector.load %arg5[%c0_9, %c0_10] : memref<1x128xf32, #tpu.memory_space<vmem>>, vector<1x128xf32>
    %12 = vector.broadcast %11 : vector<1x128xf32> to vector<256x128xf32>
    %13 = arith.addf %10, %12 : vector<256x128xf32>
    %cst_11 = arith.constant 0.000000e+00 : f32
    %14 = vector.broadcast %cst_11 : f32 to vector<256x128xf32>
    %15 = arith.maximumf %13, %14 : vector<256x128xf32>
    %16 = arith.truncf %15 : vector<256x128xf32> to vector<256x128xbf16>
    %c0_12 = arith.constant 0 : index
    %c0_13 = arith.constant 0 : index
    %17 = vector.load %arg6[%c0_12, %c0_13] : memref<128x128xbf16, #tpu.memory_space<vmem>>, vector<128x128xbf16>
    %cst_14 = arith.constant dense<0.000000e+00> : vector<256x128xf32>
    %18 = tpu.matmul %16, %17, %cst_14 {dimension_numbers = #tpu.dot_dimension_numbers<[1], [0], [0], [1], [0, 0, 1, 1], [], []>} : vector<256x128xbf16>, vector<128x128xbf16>, vector<256x128xf32> -> vector<256x128xf32>
    %c0_15 = arith.constant 0 : index
    %c0_16 = arith.constant 0 : index
    %19 = vector.load %arg7[%c0_15, %c0_16] : memref<128x128xbf16, #tpu.memory_space<vmem>>, vector<128x128xbf16>
    %cst_17 = arith.constant dense<0.000000e+00> : vector<256x128xf32>
    %20 = tpu.matmul %0, %19, %cst_17 {dimension_numbers = #tpu.dot_dimension_numbers<[1], [0], [0], [1], [0, 0, 1, 1], [], []>} : vector<256x128xbf16>, vector<128x128xbf16>, vector<256x128xf32> -> vector<256x128xf32>
    %21 = arith.addf %18, %20 : vector<256x128xf32>
    %c0_18 = arith.constant 0 : index
    %c0_19 = arith.constant 0 : index
    %22 = vector.load %arg8[%c0_18, %c0_19] : memref<1x128xf32, #tpu.memory_space<vmem>>, vector<1x128xf32>
    %23 = vector.broadcast %22 : vector<1x128xf32> to vector<256x128xf32>
    %24 = arith.addf %21, %23 : vector<256x128xf32>
    %cst_20 = arith.constant 0.000000e+00 : f32
    %25 = vector.broadcast %cst_20 : f32 to vector<256x128xf32>
    %26 = arith.maximumf %24, %25 : vector<256x128xf32>
    %27 = arith.truncf %26 : vector<256x128xf32> to vector<256x128xbf16>
    %c0_21 = arith.constant 0 : index
    %c0_22 = arith.constant 0 : index
    %28 = vector.load %arg9[%c0_21, %c0_22] : memref<256x128xbf16, #tpu.memory_space<vmem>>, vector<256x128xbf16>
    tpu.vector_store %arg9[%c0_21, %c0_22], %27 {strides = array<i32>} : memref<256x128xbf16, #tpu.memory_space<vmem>>, vector<256x128xbf16>,
    return
  }
  func.func @transform_0(%arg0: i32) -> (i32, i32) {
    %c0_i32 = arith.constant 0 : i32
    %c0_i32_0 = arith.constant 0 : i32
    return %arg0, %c0_i32 : i32, i32
  }
  func.func @transform_1(%arg0: i32) -> (i32, i32) {
    %c0_i32 = arith.constant 0 : i32
    %c0_i32_0 = arith.constant 0 : i32
    %c0_i32_1 = arith.constant 0 : i32
    return %c0_i32, %c0_i32_0 : i32, i32
  }
  func.func @transform_2(%arg0: i32) -> (i32, i32) {
    %c0_i32 = arith.constant 0 : i32
    %c0_i32_0 = arith.constant 0 : i32
    %c0_i32_1 = arith.constant 0 : i32
    return %c0_i32, %c0_i32_0 : i32, i32
  }
  func.func @transform_3(%arg0: i32) -> (i32, i32) {
    %c0_i32 = arith.constant 0 : i32
    %c0_i32_0 = arith.constant 0 : i32
    %c0_i32_1 = arith.constant 0 : i32
    return %c0_i32, %c0_i32_0 : i32, i32
  }
  func.func @transform_4(%arg0: i32) -> (i32, i32) {
    %c0_i32 = arith.constant 0 : i32
    %c0_i32_0 = arith.constant 0 : i32
    %c0_i32_1 = arith.constant 0 : i32
    return %c0_i32, %c0_i32_0 : i32, i32
  }
  func.func @transform_5(%arg0: i32) -> (i32, i32) {
    %c0_i32 = arith.constant 0 : i32
    %c0_i32_0 = arith.constant 0 : i32
    %c0_i32_1 = arith.constant 0 : i32
    return %c0_i32, %c0_i32_0 : i32, i32
  }
  func.func @transform_6(%arg0: i32) -> (i32, i32) {
    %c0_i32 = arith.constant 0 : i32
    %c0_i32_0 = arith.constant 0 : i32
    %c0_i32_1 = arith.constant 0 : i32
    return %c0_i32, %c0_i32_0 : i32, i32
  }
  func.func @transform_7(%arg0: i32) -> (i32, i32) {
    %c0_i32 = arith.constant 0 : i32
    %c0_i32_0 = arith.constant 0 : i32
    %c0_i32_1 = arith.constant 0 : i32
    return %c0_i32, %c0_i32_0 : i32, i32
  }
  func.func @transform_8(%arg0: i32) -> (i32, i32) {
    %c0_i32 = arith.constant 0 : i32
    %c0_i32_0 = arith.constant 0 : i32
    return %arg0, %c0_i32 : i32, i32
  }
}

module attributes {stable_mosaic.version = 11 : i64} {
  func.func @_bottleneck_proj_kernel(%arg0: i32, %arg1: memref<256x128xbf16, #tpu.memory_space<vmem>>, %arg2: memref<128x128xbf16, #tpu.memory_space<vmem>>, %arg3: memref<1x128xf32, #tpu.memory_space<vmem>>, %arg4: memref<128x128xbf16, #tpu.memory_space<vmem>>, %arg5: memref<1x128xf32, #tpu.memory_space<vmem>>, %arg6: memref<128x128xbf16, #tpu.memory_space<vmem>>, %arg7: memref<128x128xbf16, #tpu.memory_space<vmem>>, %arg8: memref<1x128xf32, #tpu.memory_space<vmem>>, %arg9: memref<256x128xbf16, #tpu.memory_space<vmem>>) attributes {dimension_semantics = [#tpu.dimension_semantics<parallel>], iteration_bounds = array<i64: 2>, scalar_prefetch = 0 : i64, scratch_operands = 0 : i64, tpu.core_type = #tpu.core_type<tc>, window_params = [{transform_indices = @transform_0, window_bounds = array<i64: 256, 128>}, {pipeline_mode = #tpu.pipeline_mode<synchronous>, transform_indices = @transform_1, window_bounds = array<i64: 128, 128>}, {pipeline_mode = #tpu.pipeline_mode<synchronous>, transform_indices = @transform_2, window_bounds = array<i64: 1, 128>}, {pipeline_mode = #tpu.pipeline_mode<synchronous>, transform_indices = @transform_3, window_bounds = array<i64: 128, 128>}, {pipeline_mode = #tpu.pipeline_mode<synchronous>, transform_indices = @transform_4, window_bounds = array<i64: 1, 128>}, {pipeline_mode = #tpu.pipeline_mode<synchronous>, transform_indices = @transform_5, window_bounds = array<i64: 128, 128>}, {pipeline_mode = #tpu.pipeline_mode<synchronous>, transform_indices = @transform_6, window_bounds = array<i64: 128, 128>}, {pipeline_mode = #tpu.pipeline_mode<synchronous>, transform_indices = @transform_7, window_bounds = array<i64: 1, 128>}, {transform_indices = @transform_8, window_bounds = array<i64: 256, 128>}]} {
    %c0 = arith.constant 0 : index
    %c0_0 = arith.constant 0 : index
    %0 = vector.load %arg1[%c0, %c0_0] : memref<256x128xbf16, #tpu.memory_space<vmem>>, vector<256x128xbf16>
    %c0_1 = arith.constant 0 : index
    %c0_2 = arith.constant 0 : index
    %1 = vector.load %arg2[%c0_1, %c0_2] : memref<128x128xbf16, #tpu.memory_space<vmem>>, vector<128x128xbf16>
    %cst = arith.constant dense<0.000000e+00> : vector<256x128xf32>
    %2 = tpu.matmul %0, %1, %cst {dimension_numbers = #tpu.dot_dimension_numbers<[1], [0], [0], [1], [0, 0, 1, 1], [], []>} : vector<256x128xbf16>, vector<128x128xbf16>, vector<256x128xf32> -> vector<256x128xf32>
    %c0_3 = arith.constant 0 : index
    %c0_4 = arith.constant 0 : index
    %3 = vector.load %arg3[%c0_3, %c0_4] : memref<1x128xf32, #tpu.memory_space<vmem>>, vector<1x128xf32>
    %4 = vector.broadcast %3 : vector<1x128xf32> to vector<256x128xf32>
    %5 = arith.addf %2, %4 : vector<256x128xf32>
    %cst_5 = arith.constant 0.000000e+00 : f32
    %6 = vector.broadcast %cst_5 : f32 to vector<256x128xf32>
    %7 = arith.maximumf %5, %6 : vector<256x128xf32>
    %8 = arith.truncf %7 : vector<256x128xf32> to vector<256x128xbf16>
    %c0_6 = arith.constant 0 : index
    %c0_7 = arith.constant 0 : index
    %9 = vector.load %arg4[%c0_6, %c0_7] : memref<128x128xbf16, #tpu.memory_space<vmem>>, vector<128x128xbf16>
    %cst_8 = arith.constant dense<0.000000e+00> : vector<256x128xf32>
    %10 = tpu.matmul %8, %9, %cst_8 {dimension_numbers = #tpu.dot_dimension_numbers<[1], [0], [0], [1], [0, 0, 1, 1], [], []>} : vector<256x128xbf16>, vector<128x128xbf16>, vector<256x128xf32> -> vector<256x128xf32>
    %c0_9 = arith.constant 0 : index
    %c0_10 = arith.constant 0 : index
    %11 = vector.load %arg5[%c0_9, %c0_10] : memref<1x128xf32, #tpu.memory_space<vmem>>, vector<1x128xf32>
    %12 = vector.broadcast %11 : vector<1x128xf32> to vector<256x128xf32>
    %13 = arith.addf %10, %12 : vector<256x128xf32>
    %cst_11 = arith.constant 0.000000e+00 : f32
    %14 = vector.broadcast %cst_11 : f32 to vector<256x128xf32>
    %15 = arith.maximumf %13, %14 : vector<256x128xf32>
    %16 = arith.truncf %15 : vector<256x128xf32> to vector<256x128xbf16>
    %c0_12 = arith.constant 0 : index
    %c0_13 = arith.constant 0 : index
    %17 = vector.load %arg6[%c0_12, %c0_13] : memref<128x128xbf16, #tpu.memory_space<vmem>>, vector<128x128xbf16>
    %cst_14 = arith.constant dense<0.000000e+00> : vector<256x128xf32>
    %18 = tpu.matmul %16, %17, %cst_14 {dimension_numbers = #tpu.dot_dimension_numbers<[1], [0], [0], [1], [0, 0, 1, 1], [], []>} : vector<256x128xbf16>, vector<128x128xbf16>, vector<256x128xf32> -> vector<256x128xf32>
    %c0_15 = arith.constant 0 : index
    %c0_16 = arith.constant 0 : index
    %19 = vector.load %arg7[%c0_15, %c0_16] : memref<128x128xbf16, #tpu.memory_space<vmem>>, vector<128x128xbf16>
    %cst_17 = arith.constant dense<0.000000e+00> : vector<256x128xf32>
    %20 = tpu.matmul %0, %19, %cst_17 {dimension_numbers = #tpu.dot_dimension_numbers<[1], [0], [0], [1], [0, 0, 1, 1], [], []>} : vector<256x128xbf16>, vector<128x128xbf16>, vector<256x128xf32> -> vector<256x128xf32>
    %21 = arith.addf %18, %20 : vector<256x128xf32>
    %c0_18 = arith.constant 0 : index
    %c0_19 = arith.constant 0 : index
    %22 = vector.load %arg8[%c0_18, %c0_19] : memref<1x128xf32, #tpu.memory_space<vmem>>, vector<1x128xf32>
    %23 = vector.broadcast %22 : vector<1x128xf32> to vector<256x128xf32>
    %24 = arith.addf %21, %23 : vector<256x128xf32>
    %cst_20 = arith.constant 0.000000e+00 : f32
    %25 = vector.broadcast %cst_20 : f32 to vector<256x128xf32>
    %26 = arith.maximumf %24, %25 : vector<256x128xf32>
    %27 = arith.truncf %26 : vector<256x128xf32> to vector<256x128xbf16>
    %c0_21 = arith.constant 0 : index
    %c0_22 = arith.constant 0 : index
    %28 = vector.load %arg9[%c0_21, %c0_22] : memref<256x128xbf16, #tpu.memory_space<vmem>>, vector<256x128xbf16>
    tpu.vector_store %arg9[%c0_21, %c0_22], %27 {strides = array<i32>} : memref<256x128xbf16, #tpu.memory_space<vmem>>, vector<256x128xbf16>,
    return
  }
  func.func @transform_0(%arg0: i32) -> (i32, i32) {
    %c0_i32 = arith.constant 0 : i32
    %c0_i32_0 = arith.constant 0 : i32
    return %arg0, %c0_i32 : i32, i32
  }
  func.func @transform_1(%arg0: i32) -> (i32, i32) {
    %c0_i32 = arith.constant 0 : i32
    %c0_i32_0 = arith.constant 0 : i32
    %c0_i32_1 = arith.constant 0 : i32
    return %c0_i32, %c0_i32_0 : i32, i32
  }
  func.func @transform_2(%arg0: i32) -> (i32, i32) {
    %c0_i32 = arith.constant 0 : i32
    %c0_i32_0 = arith.constant 0 : i32
    %c0_i32_1 = arith.constant 0 : i32
    return %c0_i32, %c0_i32_0 : i32, i32
  }
  func.func @transform_3(%arg0: i32) -> (i32, i32) {
    %c0_i32 = arith.constant 0 : i32
    %c0_i32_0 = arith.constant 0 : i32
    %c0_i32_1 = arith.constant 0 : i32
    return %c0_i32, %c0_i32_0 : i32, i32
  }
  func.func @transform_4(%arg0: i32) -> (i32, i32) {
    %c0_i32 = arith.constant 0 : i32
    %c0_i32_0 = arith.constant 0 : i32
    %c0_i32_1 = arith.constant 0 : i32
    return %c0_i32, %c0_i32_0 : i32, i32
  }
  func.func @transform_5(%arg0: i32) -> (i32, i32) {
    %c0_i32 = arith.constant 0 : i32
    %c0_i32_0 = arith.constant 0 : i32
    %c0_i32_1 = arith.constant 0 : i32
    return %c0_i32, %c0_i32_0 : i32, i32
  }
  func.func @transform_6(%arg0: i32) -> (i32, i32) {
    %c0_i32 = arith.constant 0 : i32
    %c0_i32_0 = arith.constant 0 : i32
    %c0_i32_1 = arith.constant 0 : i32
    return %c0_i32, %c0_i32_0 : i32, i32
  }
  func.func @transform_7(%arg0: i32) -> (i32, i32) {
    %c0_i32 = arith.constant 0 : i32
    %c0_i32_0 = arith.constant 0 : i32
    %c0_i32_1 = arith.constant 0 : i32
    return %c0_i32, %c0_i32_0 : i32, i32
  }
  func.func @transform_8(%arg0: i32) -> (i32, i32) {
    %c0_i32 = arith.constant 0 : i32
    %c0_i32_0 = arith.constant 0 : i32
    return %arg0, %c0_i32 : i32, i32
  }
}

</mosaic_0001>

<llo_original>
// kernel: bottleneck_forward.1
$region0: #{bottleneck_forward.1}
  #allocation0 [shape = 'u32[]', space=smem, size = 0x4, offset = 0x4, fixed_abs, tag = 'smem constant byte address 0x4 - core index']
  #allocation1 [shape = 'u32[144,128]{1,0:T(1,128)}', space=vmem, size = 0x12000, scoped, tag = 'internal scratch']
  %s0 = inlined_call_operand.vmem [shape: bf16[512,128], index: 0, kind: input, shape index: {}]
  %s1 = inlined_call_operand.vmem [shape: bf16[128,128], index: 1, kind: input, shape index: {}]
  %s2 = inlined_call_operand.vmem [shape: f32[1,128], index: 2, kind: input, shape index: {}]
  %s3 = inlined_call_operand.vmem [shape: bf16[128,128], index: 3, kind: input, shape index: {}]
  %s4 = inlined_call_operand.vmem [shape: f32[1,128], index: 4, kind: input, shape index: {}]
  %s5 = inlined_call_operand.vmem [shape: bf16[128,128], index: 5, kind: input, shape index: {}]
  %s6 = inlined_call_operand.vmem [shape: bf16[128,128], index: 6, kind: input, shape index: {}]
  %s7 = inlined_call_operand.vmem [shape: f32[1,128], index: 7, kind: input, shape index: {}]
  %s8 = inlined_call_operand.vmem [shape: bf16[512,128], index: 8, kind: output, shape index: {}]
  %s9 = sld [smem:[#allocation0]]
  $region65: #{bottleneck_forward.1} parent=0
    _
  %s11 = ssub.s32 1, %s9
  %s12 = scalar_select 0, %s11, %s9
  loop: start=0, step=1, limit=4
  $region2: #{bottleneck_forward.1} parent=0 // loop_pre_header
    _
  $region3: #{bottleneck_forward.1} parent=0 // loop_header
    %s14 = sphi 0, %s18
    %p15 = scmp.ge.s32.totalorder %s14, 4
    %s24 = sphi 0, %s26
    %s27 = sphi 0, %s24
    %s28 = sphi 0, %s27
    %s44 = sphi 0, %s28
    %s48 = sphi 0, %s48
    %s50 = sphi 0, %s48
    %s51 = sphi 0, %s50
    %s65 = sphi 0, %s51
    %s69 = sphi 0, %s69
    %s71 = sphi 0, %s69
    %s72 = sphi 0, %s71
    %s86 = sphi 0, %s72
    %s90 = sphi 0, %s90
    %s92 = sphi 0, %s90
    %s93 = sphi 0, %s92
    %s107 = sphi 0, %s93
    %s111 = sphi 0, %s111
    %s113 = sphi 0, %s111
    %s114 = sphi 0, %s113
    %s128 = sphi 0, %s114
    %s132 = sphi 0, %s132
    %s134 = sphi 0, %s132
    %s135 = sphi 0, %s134
    %s149 = sphi 0, %s135
    %s153 = sphi 0, %s153
    %s155 = sphi 0, %s153
    %s156 = sphi 0, %s155
    %s170 = sphi 0, %s156
    %s174 = sphi 0, %s174
    %s176 = sphi 0, %s174
    %s177 = sphi 0, %s176
    %s191 = sphi 0, %s177
    %s197 = sphi 0, %s199
    %s200 = sphi 0, %s197
    %s201 = sphi 0, %s200
    %s217 = sphi 0, %s201
  $region4: #{bottleneck_forward.1} parent=0 // loop_header_branch
    %17 = sbr.rel (%p15) target = $region8
  $region5: #{bottleneck_forward.1} parent=0 // loop_body
    %s19 = ssub.s32 %s14, 1
    %s20 = ssub.s32 %s14, 2
    %s21 = sadd.s32 %s14, 1
    %s22 = ssub.s32 %s14, %s21
    %p23 = scmp.eq.s32.totalorder %s22, 0
    %s25 = sadd.s32 %s24, 1
    %s26 = scalar_select %p23, %s24, %s25
    %p29 = pneg %p23
    %p30 = scmp.eq.s32.totalorder %s14, 1
    %p31 = por %p29, %p30
    %p32 = scmp.ne.s32.totalorder %s24, %s27
    %p33 = scmp.eq.s32.totalorder %s14, 0
    %p34 = por %p32, %p33
    %p35 = scmp.ne.s32.totalorder %s24, %s27
    %p36 = scmp.eq.s32.totalorder %s19, 1
    %p37 = por %p35, %p36
    %p38 = scmp.ne.s32.totalorder %s27, %s28
    %p39 = scmp.eq.s32.totalorder %s19, 0
    %p40 = por %p38, %p39
    %p41 = scmp.ne.s32.totalorder %s27, %s28
    %p42 = scmp.eq.s32.totalorder %s20, 1
    %p43 = por %p41, %p42
    %p45 = scmp.ne.s32.totalorder %s28, %s44
    %p46 = scmp.eq.s32.totalorder %s20, 0
    %p47 = por %p45, %p46
    %s49 = sadd.s32 %s48, 1
    %p52 = scmp.eq.s32.totalorder %s14, 1
    %p53 = scmp.ne.s32.totalorder %s48, %s50
    %p54 = scmp.eq.s32.totalorder %s14, 0
    %p55 = por %p53, %p54
    %p56 = scmp.ne.s32.totalorder %s48, %s50
    %p57 = scmp.eq.s32.totalorder %s19, 1
    %p58 = por %p56, %p57
    %p59 = scmp.ne.s32.totalorder %s50, %s51
    %p60 = scmp.eq.s32.totalorder %s19, 0
    %p61 = por %p59, %p60
    %p62 = scmp.ne.s32.totalorder %s50, %s51
    %p63 = scmp.eq.s32.totalorder %s20, 1
    %p64 = por %p62, %p63
    %p66 = scmp.ne.s32.totalorder %s51, %s65
    %p67 = scmp.eq.s32.totalorder %s20, 0
    %p68 = por %p66, %p67
    %s70 = sadd.s32 %s69, 1
    %p73 = scmp.eq.s32.totalorder %s14, 1
    %p74 = scmp.ne.s32.totalorder %s69, %s71
    %p75 = scmp.eq.s32.totalorder %s14, 0
    %p76 = por %p74, %p75
    %p77 = scmp.ne.s32.totalorder %s69, %s71
    %p78 = scmp.eq.s32.totalorder %s19, 1
    %p79 = por %p77, %p78
    %p80 = scmp.ne.s32.totalorder %s71, %s72
    %p81 = scmp.eq.s32.totalorder %s19, 0
    %p82 = por %p80, %p81
    %p83 = scmp.ne.s32.totalorder %s71, %s72
    %p84 = scmp.eq.s32.totalorder %s20, 1
    %p85 = por %p83, %p84
    %p87 = scmp.ne.s32.totalorder %s72, %s86
    %p88 = scmp.eq.s32.totalorder %s20, 0
    %p89 = por %p87, %p88
    %s91 = sadd.s32 %s90, 1
    %p94 = scmp.eq.s32.totalorder %s14, 1
    %p95 = scmp.ne.s32.totalorder %s90, %s92
    %p96 = scmp.eq.s32.totalorder %s14, 0
    %p97 = por %p95, %p96
    %p98 = scmp.ne.s32.totalorder %s90, %s92
    %p99 = scmp.eq.s32.totalorder %s19, 1
    %p100 = por %p98, %p99
    %p101 = scmp.ne.s32.totalorder %s92, %s93
    %p102 = scmp.eq.s32.totalorder %s19, 0
    %p103 = por %p101, %p102
    %p104 = scmp.ne.s32.totalorder %s92, %s93
    %p105 = scmp.eq.s32.totalorder %s20, 1
    %p106 = por %p104, %p105
    %p108 = scmp.ne.s32.totalorder %s93, %s107
    %p109 = scmp.eq.s32.totalorder %s20, 0
    %p110 = por %p108, %p109
    %s112 = sadd.s32 %s111, 1
    %p115 = scmp.eq.s32.totalorder %s14, 1
    %p116 = scmp.ne.s32.totalorder %s111, %s113
    %p117 = scmp.eq.s32.totalorder %s14, 0
    %p118 = por %p116, %p117
    %p119 = scmp.ne.s32.totalorder %s111, %s113
    %p120 = scmp.eq.s32.totalorder %s19, 1
    %p121 = por %p119, %p120
    %p122 = scmp.ne.s32.totalorder %s113, %s114
    %p123 = scmp.eq.s32.totalorder %s19, 0
    %p124 = por %p122, %p123
    %p125 = scmp.ne.s32.totalorder %s113, %s114
    %p126 = scmp.eq.s32.totalorder %s20, 1
    %p127 = por %p125, %p126
    %p129 = scmp.ne.s32.totalorder %s114, %s128
    %p130 = scmp.eq.s32.totalorder %s20, 0
    %p131 = por %p129, %p130
    %s133 = sadd.s32 %s132, 1
    %p136 = scmp.eq.s32.totalorder %s14, 1
    %p137 = scmp.ne.s32.totalorder %s132, %s134
    %p138 = scmp.eq.s32.totalorder %s14, 0
    %p139 = por %p137, %p138
    %p140 = scmp.ne.s32.totalorder %s132, %s134
    %p141 = scmp.eq.s32.totalorder %s19, 1
    %p142 = por %p140, %p141
    %p143 = scmp.ne.s32.totalorder %s134, %s135
    %p144 = scmp.eq.s32.totalorder %s19, 0
    %p145 = por %p143, %p144
    %p146 = scmp.ne.s32.totalorder %s134, %s135
    %p147 = scmp.eq.s32.totalorder %s20, 1
    %p148 = por %p146, %p147
    %p150 = scmp.ne.s32.totalorder %s135, %s149
    %p151 = scmp.eq.s32.totalorder %s20, 0
    %p152 = por %p150, %p151
    %s154 = sadd.s32 %s153, 1
    %p157 = scmp.eq.s32.totalorder %s14, 1
    %p158 = scmp.ne.s32.totalorder %s153, %s155
    %p159 = scmp.eq.s32.totalorder %s14, 0
    %p160 = por %p158, %p159
    %p161 = scmp.ne.s32.totalorder %s153, %s155
    %p162 = scmp.eq.s32.totalorder %s19, 1
    %p163 = por %p161, %p162
    %p164 = scmp.ne.s32.totalorder %s155, %s156
    %p165 = scmp.eq.s32.totalorder %s19, 0
    %p166 = por %p164, %p165
    %p167 = scmp.ne.s32.totalorder %s155, %s156
    %p168 = scmp.eq.s32.totalorder %s20, 1
    %p169 = por %p167, %p168
    %p171 = scmp.ne.s32.totalorder %s156, %s170
    %p172 = scmp.eq.s32.totalorder %s20, 0
    %p173 = por %p171, %p172
    %s175 = sadd.s32 %s174, 1
    %p178 = scmp.eq.s32.totalorder %s14, 1
    %p179 = scmp.ne.s32.totalorder %s174, %s176
    %p180 = scmp.eq.s32.totalorder %s14, 0
    %p181 = por %p179, %p180
    %p182 = scmp.ne.s32.totalorder %s174, %s176
    %p183 = scmp.eq.s32.totalorder %s19, 1
    %p184 = por %p182, %p183
    %p185 = scmp.ne.s32.totalorder %s176, %s177
    %p186 = scmp.eq.s32.totalorder %s19, 0
    %p187 = por %p185, %p186
    %p188 = scmp.ne.s32.totalorder %s176, %s177
    %p189 = scmp.eq.s32.totalorder %s20, 1
    %p190 = por %p188, %p189
    %p192 = scmp.ne.s32.totalorder %s177, %s191
    %p193 = scmp.eq.s32.totalorder %s20, 0
    %p194 = por %p192, %p193
    %s195 = ssub.s32 %s14, %s21
    %p196 = scmp.eq.s32.totalorder %s195, 0
    %s198 = sadd.s32 %s197, 1
    %s199 = scalar_select %p196, %s197, %s198
    %p202 = pneg %p196
    %p203 = scmp.eq.s32.totalorder %s14, 1
    %p204 = por %p202, %p203
    %p205 = scmp.ne.s32.totalorder %s197, %s200
    %p206 = scmp.eq.s32.totalorder %s14, 0
    %p207 = por %p205, %p206
    %p208 = scmp.ne.s32.totalorder %s197, %s200
    %p209 = scmp.eq.s32.totalorder %s19, 1
    %p210 = por %p208, %p209
    %p211 = scmp.ne.s32.totalorder %s200, %s201
    %p212 = scmp.eq.s32.totalorder %s19, 0
    %p213 = por %p211, %p212
    %p214 = scmp.ne.s32.totalorder %s200, %s201
    %p215 = scmp.eq.s32.totalorder %s20, 1
    %p216 = por %p214, %p215
    %p218 = scmp.ne.s32.totalorder %s201, %s217
    %p219 = scmp.eq.s32.totalorder %s20, 0
    %p220 = por %p218, %p219
    %p221 = scmp.le.s32.totalorder 1, %s14
    %p222 = scmp.lt.s32.totalorder %s14, 3
    %p223 = pnand %p221, %p222
    %p224 = pneg %p223
    // Predicated region
    $region9: #{bottleneck_forward.1} parent=5 // pred_check
      _
    $region10: #{bottleneck_forward.1} parent=5 // pred_check_branch
      %226 = sbr.rel (%p223) target = $region12
    $region11: #{bottleneck_forward.1} parent=5 // pred_region
      %s227 = ssub.s32 %s14, 1
      // Predicated region
      $region13: #{bottleneck_forward.1} parent=11 // pred_check
        %p228 = pneg %p61
      $region14: #{bottleneck_forward.1} parent=11 // pred_check_branch
        %230 = sbr.rel (%p228) target = $region16
      $region15: #{bottleneck_forward.1} parent=11 // pred_region
        _
      $region16: #{bottleneck_forward.1} parent=11 // pred_fallthru
        _
      // Predicated region
      $region17: #{bottleneck_forward.1} parent=11 // pred_check
        %p231 = pneg %p82
      $region18: #{bottleneck_forward.1} parent=11 // pred_check_branch
        %233 = sbr.rel (%p231) target = $region20
      $region19: #{bottleneck_forward.1} parent=11 // pred_region
        _
      $region20: #{bottleneck_forward.1} parent=11 // pred_fallthru
        _
      // Predicated region
      $region21: #{bottleneck_forward.1} parent=11 // pred_check
        %p234 = pneg %p103
      $region22: #{bottleneck_forward.1} parent=11 // pred_check_branch
        %236 = sbr.rel (%p234) target = $region24
      $region23: #{bottleneck_forward.1} parent=11 // pred_region
        _
      $region24: #{bottleneck_forward.1} parent=11 // pred_fallthru
        _
      // Predicated region
      $region25: #{bottleneck_forward.1} parent=11 // pred_check
        %p237 = pneg %p124
      $region26: #{bottleneck_forward.1} parent=11 // pred_check_branch
        %239 = sbr.rel (%p237) target = $region28
      $region27: #{bottleneck_forward.1} parent=11 // pred_region
        _
      $region28: #{bottleneck_forward.1} parent=11 // pred_fallthru
        _
      // Predicated region
      $region29: #{bottleneck_forward.1} parent=11 // pred_check
        %p240 = pneg %p145
      $region30: #{bottleneck_forward.1} parent=11 // pred_check_branch
        %242 = sbr.rel (%p240) target = $region32
      $region31: #{bottleneck_forward.1} parent=11 // pred_region
        _
      $region32: #{bottleneck_forward.1} parent=11 // pred_fallthru
        _
      // Predicated region
      $region33: #{bottleneck_forward.1} parent=11 // pred_check
        %p243 = pneg %p166
      $region34: #{bottleneck_forward.1} parent=11 // pred_check_branch
        %245 = sbr.rel (%p243) target = $region36
      $region35: #{bottleneck_forward.1} parent=11 // pred_region
        _
      $region36: #{bottleneck_forward.1} parent=11 // pred_fallthru
        _
      // Predicated region
      $region37: #{bottleneck_forward.1} parent=11 // pred_check
        %p246 = pneg %p187
      $region38: #{bottleneck_forward.1} parent=11 // pred_check_branch
        %248 = sbr.rel (%p246) target = $region40
      $region39: #{bottleneck_forward.1} parent=11 // pred_region
        _
      $region40: #{bottleneck_forward.1} parent=11 // pred_fallthru
        _
    $region12: #{bottleneck_forward.1} parent=5 // pred_fallthru
      _
    %p249 = scmp.lt.s32.totalorder %s14, 2
    // Predicated region
    $region41: #{bottleneck_forward.1} parent=5 // pred_check
      %p250 = pneg %p249
    $region42: #{bottleneck_forward.1} parent=5 // pred_check_branch
      %252 = sbr.rel (%p250) target = $region44
    $region43: #{bottleneck_forward.1} parent=5 // pred_region
      // Predicated region
      $region45: #{bottleneck_forward.1} parent=43 // pred_check
        %p253 = pneg %p34
      $region46: #{bottleneck_forward.1} parent=43 // pred_check_branch
        %255 = sbr.rel (%p253) target = $region48
      $region47: #{bottleneck_forward.1} parent=43 // pred_region
        %s256 = smul.u32 32, %s14
        %p257 = scmp.lt.s32.totalorder %s256, 63
        %s258 = scalar_select %p257, %s256, 63
        %s259 = smul.addr %s258, 4
        %s260 = scalar_lea.vmem %s0, %s259
        %s261 = smul.u32 32, %s14
      $region48: #{bottleneck_forward.1} parent=43 // pred_fallthru
        _
    $region44: #{bottleneck_forward.1} parent=5 // pred_fallthru
      _
    %p262 = scmp.le.s32.totalorder 1, %s14
    %p263 = scmp.lt.s32.totalorder %s14, 3
    %p264 = pnand %p262, %p263
    %p265 = pneg %p264
    // Predicated region
    $region49: #{bottleneck_forward.1} parent=5 // pred_check
      _
    $region50: #{bottleneck_forward.1} parent=5 // pred_check_branch
      %267 = sbr.rel (%p264) target = $region52
    $region51: #{bottleneck_forward.1} parent=5 // pred_region
      %s268 = ssub.s32 %s14, 1
      %s269 = smul.u32 32, %s19
      %p270 = scmp.lt.s32.totalorder %s269, 63
      %s271 = scalar_select %p270, %s269, 63
      %s272 = smul.addr %s271, 4
      %s273 = scalar_lea.vmem %s0, %s272
      %p274 = pneg %p40
      %p275 = pneg %p37
      %p276 = pneg %p61
      %p277 = pneg %p58
      %p278 = pneg %p82
      %p279 = pneg %p79
      %p280 = pneg %p103
      %p281 = pneg %p100
      %p282 = pneg %p124
      %p283 = pneg %p121
      %p284 = pneg %p145
      %p285 = pneg %p142
      %p286 = pneg %p166
      %p287 = pneg %p163
      %p288 = pneg %p187
      %p289 = pneg %p184
      %p290 = pneg %p213
      %p291 = pneg %p210
      %s292 = smul.u32 32, %s19
      %p293 = scmp.lt.s32.totalorder %s292, 63
      %s294 = scalar_select %p293, %s292, 63
      %s295 = smul.addr %s294, 4
      %s296 = scalar_lea.vmem %s8, %s295
      %s297 = smul.u32 32, %s19
      %p298 = scmp.lt.s32.totalorder %s297, 63
      %s299 = scalar_select %p298, %s297, 63
      %s300 = smul.addr %s299, 4
      %s301 = scalar_lea.vmem %s0, %s300
      %s302 = smul.u32 32, %s19
      %s303 = smul.u32 32, %s19
      %p304 = scmp.lt.s32.totalorder %s303, 63
      %s305 = scalar_select %p304, %s303, 63
      %s306 = smul.addr %s305, 4
      %s307 = scalar_lea.vmem %s8, %s306
      %s308 = smul.u32 32, %s19
      %v310 = vld [vmem:[%s301] sm:$0xf]
      %v311 = vld [vmem:[%s301 + $0x4] sm:$0xf]
      %v312 = vld [vmem:[%s301 + $0x8] sm:$0xf]
      %v313 = vld [vmem:[%s301 + $0xc] sm:$0xf]
      %v314 = vld [vmem:[%s301 + $0x10] sm:$0xf]
      %v315 = vld [vmem:[%s301 + $0x14] sm:$0xf]
      %v316 = vld [vmem:[%s301 + $0x18] sm:$0xf]
      %v317 = vld [vmem:[%s301 + $0x1c] sm:$0xf]
      %v318 = vld [vmem:[%s301 + $0x20] sm:$0xf]
      %v319 = vld [vmem:[%s301 + $0x24] sm:$0xf]
      %v320 = vld [vmem:[%s301 + $0x28] sm:$0xf]
      %v321 = vld [vmem:[%s301 + $0x2c] sm:$0xf]
      %v322 = vld [vmem:[%s301 + $0x30] sm:$0xf]
      %v323 = vld [vmem:[%s301 + $0x34] sm:$0xf]
      %v324 = vld [vmem:[%s301 + $0x38] sm:$0xf]
      %v325 = vld [vmem:[%s301 + $0x3c] sm:$0xf]
      %v326 = vld [vmem:[%s301 + $0x40] sm:$0xf]
      %v327 = vld [vmem:[%s301 + $0x44] sm:$0xf]
      %v328 = vld [vmem:[%s301 + $0x48] sm:$0xf]
      %v329 = vld [vmem:[%s301 + $0x4c] sm:$0xf]
      %v330 = vld [vmem:[%s301 + $0x50] sm:$0xf]
      %v331 = vld [vmem:[%s301 + $0x54] sm:$0xf]
      %v332 = vld [vmem:[%s301 + $0x58] sm:$0xf]
      %v333 = vld [vmem:[%s301 + $0x5c] sm:$0xf]
      %v334 = vld [vmem:[%s301 + $0x60] sm:$0xf]
      %v335 = vld [vmem:[%s301 + $0x64] sm:$0xf]
      %v336 = vld [vmem:[%s301 + $0x68] sm:$0xf]
      %v337 = vld [vmem:[%s301 + $0x6c] sm:$0xf]
      %v338 = vld [vmem:[%s301 + $0x70] sm:$0xf]
      %v339 = vld [vmem:[%s301 + $0x74] sm:$0xf]
      %v340 = vld [vmem:[%s301 + $0x78] sm:$0xf]
      %v341 = vld [vmem:[%s301 + $0x7c] sm:$0xf]
      %v342 = vld [vmem:[%s1] sm:$0xf]
      %v343 = vld [vmem:[%s1 + $0x4] sm:$0xf]
      %v344 = vld [vmem:[%s1 + $0x8] sm:$0xf]
      %v345 = vld [vmem:[%s1 + $0xc] sm:$0xf]
      %v346 = vld [vmem:[%s1 + $0x10] sm:$0xf]
      %v347 = vld [vmem:[%s1 + $0x14] sm:$0xf]
      %v348 = vld [vmem:[%s1 + $0x18] sm:$0xf]
      %v349 = vld [vmem:[%s1 + $0x1c] sm:$0xf]
      %v350 = vld [vmem:[%s1 + $0x20] sm:$0xf]
      %v351 = vld [vmem:[%s1 + $0x24] sm:$0xf]
      %v352 = vld [vmem:[%s1 + $0x28] sm:$0xf]
      %v353 = vld [vmem:[%s1 + $0x2c] sm:$0xf]
      %v354 = vld [vmem:[%s1 + $0x30] sm:$0xf]
      %v355 = vld [vmem:[%s1 + $0x34] sm:$0xf]
      %v356 = vld [vmem:[%s1 + $0x38] sm:$0xf]
      %v357 = vld [vmem:[%s1 + $0x3c] sm:$0xf]
      %v358 = vld [vmem:[%s2] sm:$0x1]
      %v360 = vlaneseq
      %v361 = vshrl.u32 %v360, 7
      %v362 = vsub.s32 0, %v361
      %v363 = vrot.slane %v358, %v362
      %v397 = vunpack.c.l.b16 %v310
      %v398 = vunpack.c.l.b16 %v311
      %v399 = vunpack.c.l.b16 %v312
      %v400 = vunpack.c.l.b16 %v313
      %v401 = vunpack.c.l.b16 %v314
      %v402 = vunpack.c.l.b16 %v315
      %v403 = vunpack.c.l.b16 %v316
      %v404 = vunpack.c.l.b16 %v317
      %v405 = vunpack.c.l.b16 %v318
      %v406 = vunpack.c.l.b16 %v319
      %v407 = vunpack.c.l.b16 %v320
      %v408 = vunpack.c.l.b16 %v321
      %v409 = vunpack.c.l.b16 %v322
      %v410 = vunpack.c.l.b16 %v323
      %v411 = vunpack.c.l.b16 %v324
      %v412 = vunpack.c.l.b16 %v325
      %v413 = vunpack.c.l.b16 %v326
      %v414 = vunpack.c.l.b16 %v327
      %v415 = vunpack.c.l.b16 %v328
      %v416 = vunpack.c.l.b16 %v329
      %v417 = vunpack.c.l.b16 %v330
      %v418 = vunpack.c.l.b16 %v331
      %v419 = vunpack.c.l.b16 %v332
      %v420 = vunpack.c.l.b16 %v333
      %v421 = vunpack.c.l.b16 %v334
      %v422 = vunpack.c.l.b16 %v335
      %v423 = vunpack.c.l.b16 %v336
      %v424 = vunpack.c.l.b16 %v337
      %v425 = vunpack.c.l.b16 %v338
      %v426 = vunpack.c.l.b16 %v339
      %v427 = vunpack.c.l.b16 %v340
      %v428 = vunpack.c.l.b16 %v341
      %v429 = vpack.c.b16 %v398, %v397
      %v430 = vpack.c.b16 %v400, %v399
      %v431 = vpack.c.b16 %v402, %v401
      %v432 = vpack.c.b16 %v404, %v403
      %v433 = vpack.c.b16 %v406, %v405
      %v434 = vpack.c.b16 %v408, %v407
      %v435 = vpack.c.b16 %v410, %v409
      %v436 = vpack.c.b16 %v412, %v411
      %v437 = vpack.c.b16 %v414, %v413
      %v438 = vpack.c.b16 %v416, %v415
      %v439 = vpack.c.b16 %v418, %v417
      %v440 = vpack.c.b16 %v420, %v419
      %v441 = vpack.c.b16 %v422, %v421
      %v442 = vpack.c.b16 %v424, %v423
      %v443 = vpack.c.b16 %v426, %v425
      %v444 = vpack.c.b16 %v428, %v427
      %v477 = vunpack.c.l.b16 %v342
      %v478 = vunpack.c.l.b16 %v343
      %v479 = vunpack.c.l.b16 %v344
      %v480 = vunpack.c.l.b16 %v345
      %v481 = vunpack.c.l.b16 %v346
      %v482 = vunpack.c.l.b16 %v347
      %v483 = vunpack.c.l.b16 %v348
      %v484 = vunpack.c.l.b16 %v349
      %v485 = vunpack.c.l.b16 %v350
      %v486 = vunpack.c.l.b16 %v351
      %v487 = vunpack.c.l.b16 %v352
      %v488 = vunpack.c.l.b16 %v353
      %v489 = vunpack.c.l.b16 %v354
      %v490 = vunpack.c.l.b16 %v355
      %v491 = vunpack.c.l.b16 %v356
      %v492 = vunpack.c.l.b16 %v357
      %v493 = vpack.c.b16 %v478, %v477
      %v494 = vpack.c.b16 %v480, %v479
      %v495 = vpack.c.b16 %v482, %v481
      %v496 = vpack.c.b16 %v484, %v483
      %v497 = vpack.c.b16 %v486, %v485
      %v498 = vpack.c.b16 %v488, %v487
      %v499 = vpack.c.b16 %v490, %v489
      %v500 = vpack.c.b16 %v492, %v491
      %509 = vmatprep.subr.bf16.mxu0 0
      %510 = vmatpush1.bf16.msra.mxu0 %v493
      %511 = vmatprep.subr.bf16.mxu0 0
      %512 = vmatpush1.bf16.msra.mxu0 %v494
      %513 = vmatprep.subr.bf16.mxu0 0
      %514 = vmatpush1.bf16.msra.mxu0 %v495
      %515 = vmatprep.subr.bf16.mxu0 0
      %516 = vmatpush1.bf16.msra.mxu0 %v496
      %517 = vmatprep.subr.bf16.mxu0 0
      %518 = vmatpush1.bf16.msra.mxu0 %v497
      %519 = vmatprep.subr.bf16.mxu0 0
      %520 = vmatpush1.bf16.msra.mxu0 %v498
      %521 = vmatprep.subr.bf16.mxu0 0
      %522 = vmatpush1.bf16.msra.mxu0 %v499
      %523 = vmatprep.subr.bf16.mxu0 0
      %524 = vmatpush1.bf16.msra.mxu0 %v500
      %525 = vmatprep.subr.bf16.mxu0 0
      %526 = vmatpush1.bf16.msra.mxu0 0
      %527 = vmatprep.subr.bf16.mxu0 0
      %528 = vmatpush1.bf16.msra.mxu0 0
      %529 = vmatprep.subr.bf16.mxu0 0
      %530 = vmatpush1.bf16.msra.mxu0 0
      %531 = vmatprep.subr.bf16.mxu0 0
      %532 = vmatpush1.bf16.msra.mxu0 0
      %533 = vmatprep.subr.bf16.mxu0 0
      %534 = vmatpush1.bf16.msra.mxu0 0
      %535 = vmatprep.subr.bf16.mxu0 0
      %536 = vmatpush1.bf16.msra.mxu0 0
      %537 = vmatprep.subr.bf16.mxu0 0
      %538 = vmatpush1.bf16.msra.mxu0 0
      %539 = vmatprep.subr.bf16.mxu0 0
      %540 = vmatpush1.bf16.msra.mxu0 0
      %541 = vmatprep.mubr.bf16.mxu0 0
      %542 = vmatmul.mubr.bf16.gmra.mrb[0].mxu0 %v429
      %v543 = vpop.f32.mrb[0].mxu0
      %v544 = vadd.f32 %v363, %v543
      %v545 = vpop.f32.mrb[0].mxu0
      %v546 = vpop.f32.mrb[0].mxu0
      %v547 = vadd.f32 %v363, %v546
      %v548 = vpop.f32.mrb[0].mxu0
      %549 = vmatprep.mubr.bf16.mxu0 0
      %550 = vmatmul.mubr.bf16.gmra.mrb[0].mxu0 %v430
      %v551 = vpop.f32.mrb[0].mxu0
      %v552 = vadd.f32 %v363, %v551
      %v553 = vpop.f32.mrb[0].mxu0
      %v554 = vpop.f32.mrb[0].mxu0
      %v555 = vadd.f32 %v363, %v554
      %v556 = vpop.f32.mrb[0].mxu0
      %557 = vmatprep.mubr.bf16.mxu0 0
      %558 = vmatmul.mubr.bf16.gmra.mrb[0].mxu0 %v431
      %v559 = vpop.f32.mrb[0].mxu0
      %v560 = vadd.f32 %v363, %v559
      %v561 = vpop.f32.mrb[0].mxu0
      %v562 = vpop.f32.mrb[0].mxu0
      %v563 = vadd.f32 %v363, %v562
      %v564 = vpop.f32.mrb[0].mxu0
      %565 = vmatprep.mubr.bf16.mxu0 0
      %566 = vmatmul.mubr.bf16.gmra.mrb[0].mxu0 %v432
      %v567 = vpop.f32.mrb[0].mxu0
      %v568 = vadd.f32 %v363, %v567
      %v569 = vpop.f32.mrb[0].mxu0
      %v570 = vpop.f32.mrb[0].mxu0
      %v571 = vadd.f32 %v363, %v570
      %v572 = vpop.f32.mrb[0].mxu0
      %573 = vmatprep.mubr.bf16.mxu0 0
      %574 = vmatmul.mubr.bf16.gmra.mrb[0].mxu0 %v433
      %v575 = vpop.f32.mrb[0].mxu0
      %v576 = vadd.f32 %v363, %v575
      %v577 = vpop.f32.mrb[0].mxu0
      %v578 = vpop.f32.mrb[0].mxu0
      %v579 = vadd.f32 %v363, %v578
      %v580 = vpop.f32.mrb[0].mxu0
      %581 = vmatprep.mubr.bf16.mxu0 0
      %582 = vmatmul.mubr.bf16.gmra.mrb[0].mxu0 %v434
      %v583 = vpop.f32.mrb[0].mxu0
      %v584 = vadd.f32 %v363, %v583
      %v585 = vpop.f32.mrb[0].mxu0
      %v586 = vpop.f32.mrb[0].mxu0
      %v587 = vadd.f32 %v363, %v586
      %v588 = vpop.f32.mrb[0].mxu0
      %589 = vmatprep.mubr.bf16.mxu0 0
      %590 = vmatmul.mubr.bf16.gmra.mrb[0].mxu0 %v435
      %v591 = vpop.f32.mrb[0].mxu0
      %v592 = vadd.f32 %v363, %v591
      %v593 = vpop.f32.mrb[0].mxu0
      %v594 = vpop.f32.mrb[0].mxu0
      %v595 = vadd.f32 %v363, %v594
      %v596 = vpop.f32.mrb[0].mxu0
      %597 = vmatprep.mubr.bf16.mxu0 0
      %598 = vmatmul.mubr.bf16.gmra.mrb[0].mxu0 %v436
      %v599 = vpop.f32.mrb[0].mxu0
      %v600 = vadd.f32 %v363, %v599
      %v601 = vpop.f32.mrb[0].mxu0
      %v602 = vpop.f32.mrb[0].mxu0
      %v603 = vadd.f32 %v363, %v602
      %v604 = vpop.f32.mrb[0].mxu0
      %605 = vmatprep.mubr.bf16.mxu0 0
      %606 = vmatmul.mubr.bf16.gmra.mrb[0].mxu0 %v437
      %v607 = vpop.f32.mrb[0].mxu0
      %v608 = vadd.f32 %v363, %v607
      %v609 = vpop.f32.mrb[0].mxu0
      %v610 = vpop.f32.mrb[0].mxu0
      %v611 = vadd.f32 %v363, %v610
      %v612 = vpop.f32.mrb[0].mxu0
      %613 = vmatprep.mubr.bf16.mxu0 0
      %614 = vmatmul.mubr.bf16.gmra.mrb[0].mxu0 %v438
      %v615 = vpop.f32.mrb[0].mxu0
      %v616 = vadd.f32 %v363, %v615
      %v617 = vpop.f32.mrb[0].mxu0
      %v618 = vpop.f32.mrb[0].mxu0
      %v619 = vadd.f32 %v363, %v618
      %v620 = vpop.f32.mrb[0].mxu0
      %621 = vmatprep.mubr.bf16.mxu0 0
      %622 = vmatmul.mubr.bf16.gmra.mrb[0].mxu0 %v439
      %v623 = vpop.f32.mrb[0].mxu0
      %v624 = vadd.f32 %v363, %v623
      %v625 = vpop.f32.mrb[0].mxu0
      %v626 = vpop.f32.mrb[0].mxu0
      %v627 = vadd.f32 %v363, %v626
      %v628 = vpop.f32.mrb[0].mxu0
      %629 = vmatprep.mubr.bf16.mxu0 0
      %630 = vmatmul.mubr.bf16.gmra.mrb[0].mxu0 %v440
      %v631 = vpop.f32.mrb[0].mxu0
      %v632 = vadd.f32 %v363, %v631
      %v633 = vpop.f32.mrb[0].mxu0
      %v634 = vpop.f32.mrb[0].mxu0
      %v635 = vadd.f32 %v363, %v634
      %v636 = vpop.f32.mrb[0].mxu0
      %637 = vmatprep.mubr.bf16.mxu0 0
      %638 = vmatmul.mubr.bf16.gmra.mrb[0].mxu0 %v441
      %v639 = vpop.f32.mrb[0].mxu0
      %v640 = vadd.f32 %v363, %v639
      %v641 = vpop.f32.mrb[0].mxu0
      %v642 = vpop.f32.mrb[0].mxu0
      %v643 = vadd.f32 %v363, %v642
      %v644 = vpop.f32.mrb[0].mxu0
      %645 = vmatprep.mubr.bf16.mxu0 0
      %646 = vmatmul.mubr.bf16.gmra.mrb[0].mxu0 %v442
      %v647 = vpop.f32.mrb[0].mxu0
      %v648 = vadd.f32 %v363, %v647
      %v649 = vpop.f32.mrb[0].mxu0
      %v650 = vpop.f32.mrb[0].mxu0
      %v651 = vadd.f32 %v363, %v650
      %v652 = vpop.f32.mrb[0].mxu0
      %653 = vmatprep.mubr.bf16.mxu0 0
      %654 = vmatmul.mubr.bf16.gmra.mrb[0].mxu0 %v443
      %v655 = vpop.f32.mrb[0].mxu0
      %v656 = vadd.f32 %v363, %v655
      %v657 = vpop.f32.mrb[0].mxu0
      %v658 = vpop.f32.mrb[0].mxu0
      %v659 = vadd.f32 %v363, %v658
      %v660 = vpop.f32.mrb[0].mxu0
      %661 = vmatprep.mubr.bf16.mxu0 0
      %662 = vmatmul.mubr.bf16.gmra.mrb[0].mxu0 %v444
      %v663 = vpop.f32.mrb[0].mxu0
      %v664 = vadd.f32 %v363, %v663
      %v665 = vpop.f32.mrb[0].mxu0
      %v666 = vpop.f32.mrb[0].mxu0
      %v667 = vadd.f32 %v363, %v666
      %v668 = vpop.f32.mrb[0].mxu0
      %669 = vdwg.mxu0
      %v670 = vmax.f32 %v544, 0.0
      %v671 = vmax.f32 %v547, 0.0
      %v672 = vmax.f32 %v552, 0.0
      %v673 = vmax.f32 %v555, 0.0
      %v674 = vmax.f32 %v560, 0.0
      %v675 = vmax.f32 %v563, 0.0
      %v676 = vmax.f32 %v568, 0.0
      %v677 = vmax.f32 %v571, 0.0
      %v678 = vmax.f32 %v576, 0.0
      %v679 = vmax.f32 %v579, 0.0
      %v680 = vmax.f32 %v584, 0.0
      %v681 = vmax.f32 %v587, 0.0
      %v682 = vmax.f32 %v592, 0.0
      %v683 = vmax.f32 %v595, 0.0
      %v684 = vmax.f32 %v600, 0.0
      %v685 = vmax.f32 %v603, 0.0
      %v686 = vmax.f32 %v608, 0.0
      %v687 = vmax.f32 %v611, 0.0
      %v688 = vmax.f32 %v616, 0.0
      %v689 = vmax.f32 %v619, 0.0
      %v690 = vmax.f32 %v624, 0.0
      %v691 = vmax.f32 %v627, 0.0
      %v692 = vmax.f32 %v632, 0.0
      %v693 = vmax.f32 %v635, 0.0
      %v694 = vmax.f32 %v640, 0.0
      %v695 = vmax.f32 %v643, 0.0
      %v696 = vmax.f32 %v648, 0.0
      %v697 = vmax.f32 %v651, 0.0
      %v698 = vmax.f32 %v656, 0.0
      %v699 = vmax.f32 %v659, 0.0
      %v700 = vmax.f32 %v664, 0.0
      %v701 = vmax.f32 %v667, 0.0
      %v702 = vpack.c.bf16 %v671, %v670
      %v703 = vpack.c.bf16 %v673, %v672
      %v704 = vpack.c.bf16 %v675, %v674
      %v705 = vpack.c.bf16 %v677, %v676
      %v706 = vpack.c.bf16 %v679, %v678
      %v707 = vpack.c.bf16 %v681, %v680
      %v708 = vpack.c.bf16 %v683, %v682
      %v709 = vpack.c.bf16 %v685, %v684
      %v710 = vpack.c.bf16 %v687, %v686
      %v711 = vpack.c.bf16 %v689, %v688
      %v712 = vpack.c.bf16 %v691, %v690
      %v713 = vpack.c.bf16 %v693, %v692
      %v714 = vpack.c.bf16 %v695, %v694
      %v715 = vpack.c.bf16 %v697, %v696
      %v716 = vpack.c.bf16 %v699, %v698
      %v717 = vpack.c.bf16 %v701, %v700
      %v718 = vld [vmem:[%s3] sm:$0xf]
      %v719 = vld [vmem:[%s3 + $0x4] sm:$0xf]
      %v720 = vld [vmem:[%s3 + $0x8] sm:$0xf]
      %v721 = vld [vmem:[%s3 + $0xc] sm:$0xf]
      %v722 = vld [vmem:[%s3 + $0x10] sm:$0xf]
      %v723 = vld [vmem:[%s3 + $0x14] sm:$0xf]
      %v724 = vld [vmem:[%s3 + $0x18] sm:$0xf]
      %v725 = vld [vmem:[%s3 + $0x1c] sm:$0xf]
      %v726 = vld [vmem:[%s3 + $0x20] sm:$0xf]
      %v727 = vld [vmem:[%s3 + $0x24] sm:$0xf]
      %v728 = vld [vmem:[%s3 + $0x28] sm:$0xf]
      %v729 = vld [vmem:[%s3 + $0x2c] sm:$0xf]
      %v730 = vld [vmem:[%s3 + $0x30] sm:$0xf]
      %v731 = vld [vmem:[%s3 + $0x34] sm:$0xf]
      %v732 = vld [vmem:[%s3 + $0x38] sm:$0xf]
      %v733 = vld [vmem:[%s3 + $0x3c] sm:$0xf]
      %v734 = vld [vmem:[%s4] sm:$0x1]
      %v736 = vlaneseq
      %v737 = vshrl.u32 %v736, 7
      %v738 = vsub.s32 0, %v737
      %v739 = vrot.slane %v734, %v738
      %v757 = vunpack.c.l.b16 %v718
      %v758 = vunpack.c.l.b16 %v719
      %v759 = vunpack.c.l.b16 %v720
      %v760 = vunpack.c.l.b16 %v721
      %v761 = vunpack.c.l.b16 %v722
      %v762 = vunpack.c.l.b16 %v723
      %v763 = vunpack.c.l.b16 %v724
      %v764 = vunpack.c.l.b16 %v725
      %v765 = vunpack.c.l.b16 %v726
      %v766 = vunpack.c.l.b16 %v727
      %v767 = vunpack.c.l.b16 %v728
      %v768 = vunpack.c.l.b16 %v729
      %v769 = vunpack.c.l.b16 %v730
      %v770 = vunpack.c.l.b16 %v731
      %v771 = vunpack.c.l.b16 %v732
      %v772 = vunpack.c.l.b16 %v733
      %v773 = vpack.c.b16 %v758, %v757
      %v774 = vpack.c.b16 %v760, %v759
      %v775 = vpack.c.b16 %v762, %v761
      %v776 = vpack.c.b16 %v764, %v763
      %v777 = vpack.c.b16 %v766, %v765
      %v778 = vpack.c.b16 %v768, %v767
      %v779 = vpack.c.b16 %v770, %v769
      %v780 = vpack.c.b16 %v772, %v771
      %789 = vmatprep.subr.bf16.mxu0 0
      %790 = vmatpush1.bf16.msra.mxu0 %v773
      %791 = vmatprep.subr.bf16.mxu0 0
      %792 = vmatpush1.bf16.msra.mxu0 %v774
      %793 = vmatprep.subr.bf16.mxu0 0
      %794 = vmatpush1.bf16.msra.mxu0 %v775
      %795 = vmatprep.subr.bf16.mxu0 0
      %796 = vmatpush1.bf16.msra.mxu0 %v776
      %797 = vmatprep.subr.bf16.mxu0 0
      %798 = vmatpush1.bf16.msra.mxu0 %v777
      %799 = vmatprep.subr.bf16.mxu0 0
      %800 = vmatpush1.bf16.msra.mxu0 %v778
      %801 = vmatprep.subr.bf16.mxu0 0
      %802 = vmatpush1.bf16.msra.mxu0 %v779
      %803 = vmatprep.subr.bf16.mxu0 0
      %804 = vmatpush1.bf16.msra.mxu0 %v780
      %805 = vmatprep.subr.bf16.mxu0 0
      %806 = vmatpush1.bf16.msra.mxu0 0
      %807 = vmatprep.subr.bf16.mxu0 0
      %808 = vmatpush1.bf16.msra.mxu0 0
      %809 = vmatprep.subr.bf16.mxu0 0
      %810 = vmatpush1.bf16.msra.mxu0 0
      %811 = vmatprep.subr.bf16.mxu0 0
      %812 = vmatpush1.bf16.msra.mxu0 0
      %813 = vmatprep.subr.bf16.mxu0 0
      %814 = vmatpush1.bf16.msra.mxu0 0
      %815 = vmatprep.subr.bf16.mxu0 0
      %816 = vmatpush1.bf16.msra.mxu0 0
      %817 = vmatprep.subr.bf16.mxu0 0
      %818 = vmatpush1.bf16.msra.mxu0 0
      %819 = vmatprep.subr.bf16.mxu0 0
      %820 = vmatpush1.bf16.msra.mxu0 0
      %821 = vmatprep.mubr.bf16.mxu0 0
      %822 = vmatmul.mubr.bf16.gmra.mrb[0].mxu0 %v702
      %v823 = vpop.f32.mrb[0].mxu0
      %v824 = vadd.f32 %v739, %v823
      %v825 = vpop.f32.mrb[0].mxu0
      %v826 = vpop.f32.mrb[0].mxu0
      %v827 = vadd.f32 %v739, %v826
      %v828 = vpop.f32.mrb[0].mxu0
      %829 = vmatprep.mubr.bf16.mxu0 0
      %830 = vmatmul.mubr.bf16.gmra.mrb[0].mxu0 %v703
      %v831 = vpop.f32.mrb[0].mxu0
      %v832 = vadd.f32 %v739, %v831
      %v833 = vpop.f32.mrb[0].mxu0
      %v834 = vpop.f32.mrb[0].mxu0
      %v835 = vadd.f32 %v739, %v834
      %v836 = vpop.f32.mrb[0].mxu0
      %837 = vmatprep.mubr.bf16.mxu0 0
      %838 = vmatmul.mubr.bf16.gmra.mrb[0].mxu0 %v704
      %v839 = vpop.f32.mrb[0].mxu0
      %v840 = vadd.f32 %v739, %v839
      %v841 = vpop.f32.mrb[0].mxu0
      %v842 = vpop.f32.mrb[0].mxu0
      %v843 = vadd.f32 %v739, %v842
      %v844 = vpop.f32.mrb[0].mxu0
      %845 = vmatprep.mubr.bf16.mxu0 0
      %846 = vmatmul.mubr.bf16.gmra.mrb[0].mxu0 %v705
      %v847 = vpop.f32.mrb[0].mxu0
      %v848 = vadd.f32 %v739, %v847
      %v849 = vpop.f32.mrb[0].mxu0
      %v850 = vpop.f32.mrb[0].mxu0
      %v851 = vadd.f32 %v739, %v850
      %v852 = vpop.f32.mrb[0].mxu0
      %853 = vmatprep.mubr.bf16.mxu0 0
      %854 = vmatmul.mubr.bf16.gmra.mrb[0].mxu0 %v706
      %v855 = vpop.f32.mrb[0].mxu0
      %v856 = vadd.f32 %v739, %v855
      %v857 = vpop.f32.mrb[0].mxu0
      %v858 = vpop.f32.mrb[0].mxu0
      %v859 = vadd.f32 %v739, %v858
      %v860 = vpop.f32.mrb[0].mxu0
      %861 = vmatprep.mubr.bf16.mxu0 0
      %862 = vmatmul.mubr.bf16.gmra.mrb[0].mxu0 %v707
      %v863 = vpop.f32.mrb[0].mxu0
      %v864 = vadd.f32 %v739, %v863
      %v865 = vpop.f32.mrb[0].mxu0
      %v866 = vpop.f32.mrb[0].mxu0
      %v867 = vadd.f32 %v739, %v866
      %v868 = vpop.f32.mrb[0].mxu0
      %869 = vmatprep.mubr.bf16.mxu0 0
      %870 = vmatmul.mubr.bf16.gmra.mrb[0].mxu0 %v708
      %v871 = vpop.f32.mrb[0].mxu0
      %v872 = vadd.f32 %v739, %v871
      %v873 = vpop.f32.mrb[0].mxu0
      %v874 = vpop.f32.mrb[0].mxu0
      %v875 = vadd.f32 %v739, %v874
      %v876 = vpop.f32.mrb[0].mxu0
      %877 = vmatprep.mubr.bf16.mxu0 0
      %878 = vmatmul.mubr.bf16.gmra.mrb[0].mxu0 %v709
      %v879 = vpop.f32.mrb[0].mxu0
      %v880 = vadd.f32 %v739, %v879
      %v881 = vpop.f32.mrb[0].mxu0
      %v882 = vpop.f32.mrb[0].mxu0
      %v883 = vadd.f32 %v739, %v882
      %v884 = vpop.f32.mrb[0].mxu0
      %885 = vmatprep.mubr.bf16.mxu0 0
      %886 = vmatmul.mubr.bf16.gmra.mrb[0].mxu0 %v710
      %v887 = vpop.f32.mrb[0].mxu0
      %v888 = vadd.f32 %v739, %v887
      %v889 = vpop.f32.mrb[0].mxu0
      %v890 = vpop.f32.mrb[0].mxu0
      %v891 = vadd.f32 %v739, %v890
      %v892 = vpop.f32.mrb[0].mxu0
      %893 = vmatprep.mubr.bf16.mxu0 0
      %894 = vmatmul.mubr.bf16.gmra.mrb[0].mxu0 %v711
      %v895 = vpop.f32.mrb[0].mxu0
      %v896 = vadd.f32 %v739, %v895
      %v897 = vpop.f32.mrb[0].mxu0
      %v898 = vpop.f32.mrb[0].mxu0
      %v899 = vadd.f32 %v739, %v898
      %v900 = vpop.f32.mrb[0].mxu0
      %901 = vmatprep.mubr.bf16.mxu0 0
      %902 = vmatmul.mubr.bf16.gmra.mrb[0].mxu0 %v712
      %v903 = vpop.f32.mrb[0].mxu0
      %v904 = vadd.f32 %v739, %v903
      %v905 = vpop.f32.mrb[0].mxu0
      %v906 = vpop.f32.mrb[0].mxu0
      %v907 = vadd.f32 %v739, %v906
      %v908 = vpop.f32.mrb[0].mxu0
      %909 = vmatprep.mubr.bf16.mxu0 0
      %910 = vmatmul.mubr.bf16.gmra.mrb[0].mxu0 %v713
      %v911 = vpop.f32.mrb[0].mxu0
      %v912 = vadd.f32 %v739, %v911
      %v913 = vpop.f32.mrb[0].mxu0
      %v914 = vpop.f32.mrb[0].mxu0
      %v915 = vadd.f32 %v739, %v914
      %v916 = vpop.f32.mrb[0].mxu0
      %917 = vmatprep.mubr.bf16.mxu0 0
      %918 = vmatmul.mubr.bf16.gmra.mrb[0].mxu0 %v714
      %v919 = vpop.f32.mrb[0].mxu0
      %v920 = vadd.f32 %v739, %v919
      %v921 = vpop.f32.mrb[0].mxu0
      %v922 = vpop.f32.mrb[0].mxu0
      %v923 = vadd.f32 %v739, %v922
      %v924 = vpop.f32.mrb[0].mxu0
      %925 = vmatprep.mubr.bf16.mxu0 0
      %926 = vmatmul.mubr.bf16.gmra.mrb[0].mxu0 %v715
      %v927 = vpop.f32.mrb[0].mxu0
      %v928 = vadd.f32 %v739, %v927
      %v929 = vpop.f32.mrb[0].mxu0
      %v930 = vpop.f32.mrb[0].mxu0
      %v931 = vadd.f32 %v739, %v930
      %v932 = vpop.f32.mrb[0].mxu0
      %933 = vmatprep.mubr.bf16.mxu0 0
      %934 = vmatmul.mubr.bf16.gmra.mrb[0].mxu0 %v716
      %v935 = vpop.f32.mrb[0].mxu0
      %v936 = vadd.f32 %v739, %v935
      %v937 = vpop.f32.mrb[0].mxu0
      %v938 = vpop.f32.mrb[0].mxu0
      %v939 = vadd.f32 %v739, %v938
      %v940 = vpop.f32.mrb[0].mxu0
      %941 = vmatprep.mubr.bf16.mxu0 0
      %942 = vmatmul.mubr.bf16.gmra.mrb[0].mxu0 %v717
      %v943 = vpop.f32.mrb[0].mxu0
      %v944 = vadd.f32 %v739, %v943
      %v945 = vpop.f32.mrb[0].mxu0
      %v946 = vpop.f32.mrb[0].mxu0
      %v947 = vadd.f32 %v739, %v946
      %v948 = vpop.f32.mrb[0].mxu0
      %949 = vdwg.mxu0
      %v950 = vmax.f32 %v824, 0.0
      %v951 = vmax.f32 %v827, 0.0
      %v952 = vmax.f32 %v832, 0.0
      %v953 = vmax.f32 %v835, 0.0
      %v954 = vmax.f32 %v840, 0.0
      %v955 = vmax.f32 %v843, 0.0
      %v956 = vmax.f32 %v848, 0.0
      %v957 = vmax.f32 %v851, 0.0
      %v958 = vmax.f32 %v856, 0.0
      %v959 = vmax.f32 %v859, 0.0
      %v960 = vmax.f32 %v864, 0.0
      %v961 = vmax.f32 %v867, 0.0
      %v962 = vmax.f32 %v872, 0.0
      %v963 = vmax.f32 %v875, 0.0
      %v964 = vmax.f32 %v880, 0.0
      %v965 = vmax.f32 %v883, 0.0
      %v966 = vmax.f32 %v888, 0.0
      %v967 = vmax.f32 %v891, 0.0
      %v968 = vmax.f32 %v896, 0.0
      %v969 = vmax.f32 %v899, 0.0
      %v970 = vmax.f32 %v904, 0.0
      %v971 = vmax.f32 %v907, 0.0
      %v972 = vmax.f32 %v912, 0.0
      %v973 = vmax.f32 %v915, 0.0
      %v974 = vmax.f32 %v920, 0.0
      %v975 = vmax.f32 %v923, 0.0
      %v976 = vmax.f32 %v928, 0.0
      %v977 = vmax.f32 %v931, 0.0
      %v978 = vmax.f32 %v936, 0.0
      %v979 = vmax.f32 %v939, 0.0
      %v980 = vmax.f32 %v944, 0.0
      %v981 = vmax.f32 %v947, 0.0
      %v982 = vpack.c.bf16 %v951, %v950
      %v983 = vpack.c.bf16 %v953, %v952
      %v984 = vpack.c.bf16 %v955, %v954
      %v985 = vpack.c.bf16 %v957, %v956
      %v986 = vpack.c.bf16 %v959, %v958
      %v987 = vpack.c.bf16 %v961, %v960
      %v988 = vpack.c.bf16 %v963, %v962
      %v989 = vpack.c.bf16 %v965, %v964
      %v990 = vpack.c.bf16 %v967, %v966
      %v991 = vpack.c.bf16 %v969, %v968
      %v992 = vpack.c.bf16 %v971, %v970
      %v993 = vpack.c.bf16 %v973, %v972
      %v994 = vpack.c.bf16 %v975, %v974
      %v995 = vpack.c.bf16 %v977, %v976
      %v996 = vpack.c.bf16 %v979, %v978
      %v997 = vpack.c.bf16 %v981, %v980
      %v998 = vld [vmem:[%s5] sm:$0xf]
      %v999 = vld [vmem:[%s5 + $0x4] sm:$0xf]
      %v1000 = vld [vmem:[%s5 + $0x8] sm:$0xf]
      %v1001 = vld [vmem:[%s5 + $0xc] sm:$0xf]
      %v1002 = vld [vmem:[%s5 + $0x10] sm:$0xf]
      %v1003 = vld [vmem:[%s5 + $0x14] sm:$0xf]
      %v1004 = vld [vmem:[%s5 + $0x18] sm:$0xf]
      %v1005 = vld [vmem:[%s5 + $0x1c] sm:$0xf]
      %v1006 = vld [vmem:[%s5 + $0x20] sm:$0xf]
      %v1007 = vld [vmem:[%s5 + $0x24] sm:$0xf]
      %v1008 = vld [vmem:[%s5 + $0x28] sm:$0xf]
      %v1009 = vld [vmem:[%s5 + $0x2c] sm:$0xf]
      %v1010 = vld [vmem:[%s5 + $0x30] sm:$0xf]
      %v1011 = vld [vmem:[%s5 + $0x34] sm:$0xf]
      %v1012 = vld [vmem:[%s5 + $0x38] sm:$0xf]
      %v1013 = vld [vmem:[%s5 + $0x3c] sm:$0xf]
      %v1014 = vld [vmem:[%s6] sm:$0xf]
      %v1015 = vld [vmem:[%s6 + $0x4] sm:$0xf]
      %v1016 = vld [vmem:[%s6 + $0x8] sm:$0xf]
      %v1017 = vld [vmem:[%s6 + $0xc] sm:$0xf]
      %v1018 = vld [vmem:[%s6 + $0x10] sm:$0xf]
      %v1019 = vld [vmem:[%s6 + $0x14] sm:$0xf]
      %v1020 = vld [vmem:[%s6 + $0x18] sm:$0xf]
      %v1021 = vld [vmem:[%s6 + $0x1c] sm:$0xf]
      %v1022 = vld [vmem:[%s6 + $0x20] sm:$0xf]
      %v1023 = vld [vmem:[%s6 + $0x24] sm:$0xf]
      %v1024 = vld [vmem:[%s6 + $0x28] sm:$0xf]
      %v1025 = vld [vmem:[%s6 + $0x2c] sm:$0xf]
      %v1026 = vld [vmem:[%s6 + $0x30] sm:$0xf]
      %v1027 = vld [vmem:[%s6 + $0x34] sm:$0xf]
      %v1028 = vld [vmem:[%s6 + $0x38] sm:$0xf]
      %v1029 = vld [vmem:[%s6 + $0x3c] sm:$0xf]
      %v1046 = vunpack.c.l.b16 %v1014
      %v1047 = vunpack.c.l.b16 %v1015
      %v1048 = vunpack.c.l.b16 %v1016
      %v1049 = vunpack.c.l.b16 %v1017
      %v1050 = vunpack.c.l.b16 %v1018
      %v1051 = vunpack.c.l.b16 %v1019
      %v1052 = vunpack.c.l.b16 %v1020
      %v1053 = vunpack.c.l.b16 %v1021
      %v1054 = vunpack.c.l.b16 %v1022
      %v1055 = vunpack.c.l.b16 %v1023
      %v1056 = vunpack.c.l.b16 %v1024
      %v1057 = vunpack.c.l.b16 %v1025
      %v1058 = vunpack.c.l.b16 %v1026
      %v1059 = vunpack.c.l.b16 %v1027
      %v1060 = vunpack.c.l.b16 %v1028
      %v1061 = vunpack.c.l.b16 %v1029
      %v1062 = vpack.c.b16 %v1047, %v1046
      %v1063 = vpack.c.b16 %v1049, %v1048
      %v1064 = vpack.c.b16 %v1051, %v1050
      %v1065 = vpack.c.b16 %v1053, %v1052
      %v1066 = vpack.c.b16 %v1055, %v1054
      %v1067 = vpack.c.b16 %v1057, %v1056
      %v1068 = vpack.c.b16 %v1059, %v1058
      %v1069 = vpack.c.b16 %v1061, %v1060
      %1078 = vmatprep.subr.bf16.mxu0 0
      %1079 = vmatpush1.bf16.msra.mxu0 %v1062
      %1080 = vmatprep.subr.bf16.mxu0 0
      %1081 = vmatpush1.bf16.msra.mxu0 %v1063
      %1082 = vmatprep.subr.bf16.mxu0 0
      %1083 = vmatpush1.bf16.msra.mxu0 %v1064
      %1084 = vmatprep.subr.bf16.mxu0 0
      %1085 = vmatpush1.bf16.msra.mxu0 %v1065
      %1086 = vmatprep.subr.bf16.mxu0 0
      %1087 = vmatpush1.bf16.msra.mxu0 %v1066
      %1088 = vmatprep.subr.bf16.mxu0 0
      %1089 = vmatpush1.bf16.msra.mxu0 %v1067
      %1090 = vmatprep.subr.bf16.mxu0 0
      %1091 = vmatpush1.bf16.msra.mxu0 %v1068
      %1092 = vmatprep.subr.bf16.mxu0 0
      %1093 = vmatpush1.bf16.msra.mxu0 %v1069
      %1094 = vmatprep.subr.bf16.mxu0 0
      %1095 = vmatpush1.bf16.msra.mxu0 0
      %1096 = vmatprep.subr.bf16.mxu0 0
      %1097 = vmatpush1.bf16.msra.mxu0 0
      %1098 = vmatprep.subr.bf16.mxu0 0
      %1099 = vmatpush1.bf16.msra.mxu0 0
      %1100 = vmatprep.subr.bf16.mxu0 0
      %1101 = vmatpush1.bf16.msra.mxu0 0
      %1102 = vmatprep.subr.bf16.mxu0 0
      %1103 = vmatpush1.bf16.msra.mxu0 0
      %1104 = vmatprep.subr.bf16.mxu0 0
      %1105 = vmatpush1.bf16.msra.mxu0 0
      %1106 = vmatprep.subr.bf16.mxu0 0
      %1107 = vmatpush1.bf16.msra.mxu0 0
      %1108 = vmatprep.subr.bf16.mxu0 0
      %1109 = vmatpush1.bf16.msra.mxu0 0
      %1110 = vmatprep.mubr.bf16.mxu0 0
      %1111 = vmatmul.mubr.bf16.gmra.mrb[0].mxu0 %v429
      %v1112 = vpop.f32.mrb[0].mxu0
      %v1113 = vadd.f32 0.0, %v1112
      %v1114 = vpop.f32.mrb[0].mxu0
      %v1115 = vpop.f32.mrb[0].mxu0
      %v1116 = vadd.f32 0.0, %v1115
      %v1117 = vpop.f32.mrb[0].mxu0
      %1118 = vmatprep.mubr.bf16.mxu0 0
      %1119 = vmatmul.mubr.bf16.gmra.mrb[0].mxu0 %v430
      %v1120 = vpop.f32.mrb[0].mxu0
      %v1121 = vadd.f32 0.0, %v1120
      %v1122 = vpop.f32.mrb[0].mxu0
      %v1123 = vpop.f32.mrb[0].mxu0
      %v1124 = vadd.f32 0.0, %v1123
      %v1125 = vpop.f32.mrb[0].mxu0
      %1126 = vmatprep.mubr.bf16.mxu0 0
      %1127 = vmatmul.mubr.bf16.gmra.mrb[0].mxu0 %v431
      %v1128 = vpop.f32.mrb[0].mxu0
      %v1129 = vadd.f32 0.0, %v1128
      %v1130 = vpop.f32.mrb[0].mxu0
      %v1131 = vpop.f32.mrb[0].mxu0
      %v1132 = vadd.f32 0.0, %v1131
      %v1133 = vpop.f32.mrb[0].mxu0
      %1134 = vmatprep.mubr.bf16.mxu0 0
      %1135 = vmatmul.mubr.bf16.gmra.mrb[0].mxu0 %v432
      %v1136 = vpop.f32.mrb[0].mxu0
      %v1137 = vadd.f32 0.0, %v1136
      %v1138 = vpop.f32.mrb[0].mxu0
      %v1139 = vpop.f32.mrb[0].mxu0
      %v1140 = vadd.f32 0.0, %v1139
      %v1141 = vpop.f32.mrb[0].mxu0
      %1142 = vmatprep.mubr.bf16.mxu0 0
      %1143 = vmatmul.mubr.bf16.gmra.mrb[0].mxu0 %v433
      %v1144 = vpop.f32.mrb[0].mxu0
      %v1145 = vadd.f32 0.0, %v1144
      %v1146 = vpop.f32.mrb[0].mxu0
      %v1147 = vpop.f32.mrb[0].mxu0
      %v1148 = vadd.f32 0.0, %v1147
      %v1149 = vpop.f32.mrb[0].mxu0
      %1150 = vmatprep.mubr.bf16.mxu0 0
      %1151 = vmatmul.mubr.bf16.gmra.mrb[0].mxu0 %v434
      %v1152 = vpop.f32.mrb[0].mxu0
      %v1153 = vadd.f32 0.0, %v1152
      %v1154 = vpop.f32.mrb[0].mxu0
      %v1155 = vpop.f32.mrb[0].mxu0
      %v1156 = vadd.f32 0.0, %v1155
      %v1157 = vpop.f32.mrb[0].mxu0
      %1158 = vmatprep.mubr.bf16.mxu0 0
      %1159 = vmatmul.mubr.bf16.gmra.mrb[0].mxu0 %v435
      %v1160 = vpop.f32.mrb[0].mxu0
      %v1161 = vadd.f32 0.0, %v1160
      %v1162 = vpop.f32.mrb[0].mxu0
      %v1163 = vpop.f32.mrb[0].mxu0
      %v1164 = vadd.f32 0.0, %v1163
      %v1165 = vpop.f32.mrb[0].mxu0
      %1166 = vmatprep.mubr.bf16.mxu0 0
      %1167 = vmatmul.mubr.bf16.gmra.mrb[0].mxu0 %v436
      %v1168 = vpop.f32.mrb[0].mxu0
      %v1169 = vadd.f32 0.0, %v1168
      %v1170 = vpop.f32.mrb[0].mxu0
      %v1171 = vpop.f32.mrb[0].mxu0
      %v1172 = vadd.f32 0.0, %v1171
      %v1173 = vpop.f32.mrb[0].mxu0
      %1174 = vmatprep.mubr.bf16.mxu0 0
      %1175 = vmatmul.mubr.bf16.gmra.mrb[0].mxu0 %v437
      %v1176 = vpop.f32.mrb[0].mxu0
      %v1177 = vadd.f32 0.0, %v1176
      %v1178 = vpop.f32.mrb[0].mxu0
      %v1179 = vpop.f32.mrb[0].mxu0
      %v1180 = vadd.f32 0.0, %v1179
      %v1181 = vpop.f32.mrb[0].mxu0
      %1182 = vmatprep.mubr.bf16.mxu0 0
      %1183 = vmatmul.mubr.bf16.gmra.mrb[0].mxu0 %v438
      %v1184 = vpop.f32.mrb[0].mxu0
      %v1185 = vadd.f32 0.0, %v1184
      %v1186 = vpop.f32.mrb[0].mxu0
      %v1187 = vpop.f32.mrb[0].mxu0
      %v1188 = vadd.f32 0.0, %v1187
      %v1189 = vpop.f32.mrb[0].mxu0
      %1190 = vmatprep.mubr.bf16.mxu0 0
      %1191 = vmatmul.mubr.bf16.gmra.mrb[0].mxu0 %v439
      %v1192 = vpop.f32.mrb[0].mxu0
      %v1193 = vadd.f32 0.0, %v1192
      %v1194 = vpop.f32.mrb[0].mxu0
      %v1195 = vpop.f32.mrb[0].mxu0
      %v1196 = vadd.f32 0.0, %v1195
      %v1197 = vpop.f32.mrb[0].mxu0
      %1198 = vmatprep.mubr.bf16.mxu0 0
      %1199 = vmatmul.mubr.bf16.gmra.mrb[0].mxu0 %v440
      %v1200 = vpop.f32.mrb[0].mxu0
      %v1201 = vadd.f32 0.0, %v1200
      %v1202 = vpop.f32.mrb[0].mxu0
      %v1203 = vpop.f32.mrb[0].mxu0
      %v1204 = vadd.f32 0.0, %v1203
      %v1205 = vpop.f32.mrb[0].mxu0
      %1206 = vmatprep.mubr.bf16.mxu0 0
      %1207 = vmatmul.mubr.bf16.gmra.mrb[0].mxu0 %v441
      %v1208 = vpop.f32.mrb[0].mxu0
      %v1209 = vadd.f32 0.0, %v1208
      %v1210 = vpop.f32.mrb[0].mxu0
      %v1211 = vpop.f32.mrb[0].mxu0
      %v1212 = vadd.f32 0.0, %v1211
      %v1213 = vpop.f32.mrb[0].mxu0
      %1214 = vmatprep.mubr.bf16.mxu0 0
      %1215 = vmatmul.mubr.bf16.gmra.mrb[0].mxu0 %v442
      %v1216 = vpop.f32.mrb[0].mxu0
      %v1217 = vadd.f32 0.0, %v1216
      %v1218 = vpop.f32.mrb[0].mxu0
      %v1219 = vpop.f32.mrb[0].mxu0
      %v1220 = vadd.f32 0.0, %v1219
      %v1221 = vpop.f32.mrb[0].mxu0
      %1222 = vmatprep.mubr.bf16.mxu0 0
      %1223 = vmatmul.mubr.bf16.gmra.mrb[0].mxu0 %v443
      %v1224 = vpop.f32.mrb[0].mxu0
      %v1225 = vadd.f32 0.0, %v1224
      %v1226 = vpop.f32.mrb[0].mxu0
      %v1227 = vpop.f32.mrb[0].mxu0
      %v1228 = vadd.f32 0.0, %v1227
      %v1229 = vpop.f32.mrb[0].mxu0
      %1230 = vmatprep.mubr.bf16.mxu0 0
      %1231 = vmatmul.mubr.bf16.gmra.mrb[0].mxu0 %v444
      %v1232 = vpop.f32.mrb[0].mxu0
      %v1233 = vadd.f32 0.0, %v1232
      %v1234 = vpop.f32.mrb[0].mxu0
      %v1235 = vpop.f32.mrb[0].mxu0
      %v1236 = vadd.f32 0.0, %v1235
      %v1237 = vpop.f32.mrb[0].mxu0
      %1238 = vdwg.mxu0
      %v1255 = vunpack.c.l.b16 %v998
      %v1256 = vunpack.c.l.b16 %v999
      %v1257 = vunpack.c.l.b16 %v1000
      %v1258 = vunpack.c.l.b16 %v1001
      %v1259 = vunpack.c.l.b16 %v1002
      %v1260 = vunpack.c.l.b16 %v1003
      %v1261 = vunpack.c.l.b16 %v1004
      %v1262 = vunpack.c.l.b16 %v1005
      %v1263 = vunpack.c.l.b16 %v1006
      %v1264 = vunpack.c.l.b16 %v1007
      %v1265 = vunpack.c.l.b16 %v1008
      %v1266 = vunpack.c.l.b16 %v1009
      %v1267 = vunpack.c.l.b16 %v1010
      %v1268 = vunpack.c.l.b16 %v1011
      %v1269 = vunpack.c.l.b16 %v1012
      %v1270 = vunpack.c.l.b16 %v1013
      %v1271 = vpack.c.b16 %v1256, %v1255
      %v1272 = vpack.c.b16 %v1258, %v1257
      %v1273 = vpack.c.b16 %v1260, %v1259
      %v1274 = vpack.c.b16 %v1262, %v1261
      %v1275 = vpack.c.b16 %v1264, %v1263
      %v1276 = vpack.c.b16 %v1266, %v1265
      %v1277 = vpack.c.b16 %v1268, %v1267
      %v1278 = vpack.c.b16 %v1270, %v1269
      %1287 = vmatprep.subr.bf16.mxu0 0
      %1288 = vmatpush1.bf16.msra.mxu0 %v1271
      %1289 = vmatprep.subr.bf16.mxu0 0
      %1290 = vmatpush1.bf16.msra.mxu0 %v1272
      %1291 = vmatprep.subr.bf16.mxu0 0
      %1292 = vmatpush1.bf16.msra.mxu0 %v1273
      %1293 = vmatprep.subr.bf16.mxu0 0
      %1294 = vmatpush1.bf16.msra.mxu0 %v1274
      %1295 = vmatprep.subr.bf16.mxu0 0
      %1296 = vmatpush1.bf16.msra.mxu0 %v1275
      %1297 = vmatprep.subr.bf16.mxu0 0
      %1298 = vmatpush1.bf16.msra.mxu0 %v1276
      %1299 = vmatprep.subr.bf16.mxu0 0
      %1300 = vmatpush1.bf16.msra.mxu0 %v1277
      %1301 = vmatprep.subr.bf16.mxu0 0
      %1302 = vmatpush1.bf16.msra.mxu0 %v1278
      %1303 = vmatprep.subr.bf16.mxu0 0
      %1304 = vmatpush1.bf16.msra.mxu0 0
      %1305 = vmatprep.subr.bf16.mxu0 0
      %1306 = vmatpush1.bf16.msra.mxu0 0
      %1307 = vmatprep.subr.bf16.mxu0 0
      %1308 = vmatpush1.bf16.msra.mxu0 0
      %1309 = vmatprep.subr.bf16.mxu0 0
      %1310 = vmatpush1.bf16.msra.mxu0 0
      %1311 = vmatprep.subr.bf16.mxu0 0
      %1312 = vmatpush1.bf16.msra.mxu0 0
      %1313 = vmatprep.subr.bf16.mxu0 0
      %1314 = vmatpush1.bf16.msra.mxu0 0
      %1315 = vmatprep.subr.bf16.mxu0 0
      %1316 = vmatpush1.bf16.msra.mxu0 0
      %1317 = vmatprep.subr.bf16.mxu0 0
      %1318 = vmatpush1.bf16.msra.mxu0 0
      %1319 = vmatprep.mubr.bf16.mxu0 0
      %1320 = vmatmul.mubr.bf16.gmra.mrb[0].mxu0 %v982
      %v1321 = vpop.f32.mrb[0].mxu0
      %v1322 = vadd.f32 %v1113, %v1321
      %v1323 = vpop.f32.mrb[0].mxu0
      %v1324 = vpop.f32.mrb[0].mxu0
      %v1325 = vadd.f32 %v1116, %v1324
      %v1326 = vpop.f32.mrb[0].mxu0
      %1327 = vmatprep.mubr.bf16.mxu0 0
      %1328 = vmatmul.mubr.bf16.gmra.mrb[0].mxu0 %v983
      %v1329 = vpop.f32.mrb[0].mxu0
      %v1330 = vadd.f32 %v1121, %v1329
      %v1331 = vpop.f32.mrb[0].mxu0
      %v1332 = vpop.f32.mrb[0].mxu0
      %v1333 = vadd.f32 %v1124, %v1332
      %v1334 = vpop.f32.mrb[0].mxu0
      %1335 = vmatprep.mubr.bf16.mxu0 0
      %1336 = vmatmul.mubr.bf16.gmra.mrb[0].mxu0 %v984
      %v1337 = vpop.f32.mrb[0].mxu0
      %v1338 = vadd.f32 %v1129, %v1337
      %v1339 = vpop.f32.mrb[0].mxu0
      %v1340 = vpop.f32.mrb[0].mxu0
      %v1341 = vadd.f32 %v1132, %v1340
      %v1342 = vpop.f32.mrb[0].mxu0
      %1343 = vmatprep.mubr.bf16.mxu0 0
      %1344 = vmatmul.mubr.bf16.gmra.mrb[0].mxu0 %v985
      %v1345 = vpop.f32.mrb[0].mxu0
      %v1346 = vadd.f32 %v1137, %v1345
      %v1347 = vpop.f32.mrb[0].mxu0
      %v1348 = vpop.f32.mrb[0].mxu0
      %v1349 = vadd.f32 %v1140, %v1348
      %v1350 = vpop.f32.mrb[0].mxu0
      %1351 = vmatprep.mubr.bf16.mxu0 0
      %1352 = vmatmul.mubr.bf16.gmra.mrb[0].mxu0 %v986
      %v1353 = vpop.f32.mrb[0].mxu0
      %v1354 = vadd.f32 %v1145, %v1353
      %v1355 = vpop.f32.mrb[0].mxu0
      %v1356 = vpop.f32.mrb[0].mxu0
      %v1357 = vadd.f32 %v1148, %v1356
      %v1358 = vpop.f32.mrb[0].mxu0
      %1359 = vmatprep.mubr.bf16.mxu0 0
      %1360 = vmatmul.mubr.bf16.gmra.mrb[0].mxu0 %v987
      %v1361 = vpop.f32.mrb[0].mxu0
      %v1362 = vadd.f32 %v1153, %v1361
      %v1363 = vpop.f32.mrb[0].mxu0
      %v1364 = vpop.f32.mrb[0].mxu0
      %v1365 = vadd.f32 %v1156, %v1364
      %v1366 = vpop.f32.mrb[0].mxu0
      %1367 = vmatprep.mubr.bf16.mxu0 0
      %1368 = vmatmul.mubr.bf16.gmra.mrb[0].mxu0 %v988
      %v1369 = vpop.f32.mrb[0].mxu0
      %v1370 = vadd.f32 %v1161, %v1369
      %v1371 = vpop.f32.mrb[0].mxu0
      %v1372 = vpop.f32.mrb[0].mxu0
      %v1373 = vadd.f32 %v1164, %v1372
      %v1374 = vpop.f32.mrb[0].mxu0
      %1375 = vmatprep.mubr.bf16.mxu0 0
      %1376 = vmatmul.mubr.bf16.gmra.mrb[0].mxu0 %v989
      %v1377 = vpop.f32.mrb[0].mxu0
      %v1378 = vadd.f32 %v1169, %v1377
      %v1379 = vpop.f32.mrb[0].mxu0
      %v1380 = vpop.f32.mrb[0].mxu0
      %v1381 = vadd.f32 %v1172, %v1380
      %v1382 = vpop.f32.mrb[0].mxu0
      %1383 = vmatprep.mubr.bf16.mxu0 0
      %1384 = vmatmul.mubr.bf16.gmra.mrb[0].mxu0 %v990
      %v1385 = vpop.f32.mrb[0].mxu0
      %v1386 = vadd.f32 %v1177, %v1385
      %v1387 = vpop.f32.mrb[0].mxu0
      %v1388 = vpop.f32.mrb[0].mxu0
      %v1389 = vadd.f32 %v1180, %v1388
      %v1390 = vpop.f32.mrb[0].mxu0
      %1391 = vmatprep.mubr.bf16.mxu0 0
      %1392 = vmatmul.mubr.bf16.gmra.mrb[0].mxu0 %v991
      %v1393 = vpop.f32.mrb[0].mxu0
      %v1394 = vadd.f32 %v1185, %v1393
      %v1395 = vpop.f32.mrb[0].mxu0
      %v1396 = vpop.f32.mrb[0].mxu0
      %v1397 = vadd.f32 %v1188, %v1396
      %v1398 = vpop.f32.mrb[0].mxu0
      %1399 = vmatprep.mubr.bf16.mxu0 0
      %1400 = vmatmul.mubr.bf16.gmra.mrb[0].mxu0 %v992
      %v1401 = vpop.f32.mrb[0].mxu0
      %v1402 = vadd.f32 %v1193, %v1401
      %v1403 = vpop.f32.mrb[0].mxu0
      %v1404 = vpop.f32.mrb[0].mxu0
      %v1405 = vadd.f32 %v1196, %v1404
      %v1406 = vpop.f32.mrb[0].mxu0
      %1407 = vmatprep.mubr.bf16.mxu0 0
      %1408 = vmatmul.mubr.bf16.gmra.mrb[0].mxu0 %v993
      %v1409 = vpop.f32.mrb[0].mxu0
      %v1410 = vadd.f32 %v1201, %v1409
      %v1411 = vpop.f32.mrb[0].mxu0
      %v1412 = vpop.f32.mrb[0].mxu0
      %v1413 = vadd.f32 %v1204, %v1412
      %v1414 = vpop.f32.mrb[0].mxu0
      %1415 = vmatprep.mubr.bf16.mxu0 0
      %1416 = vmatmul.mubr.bf16.gmra.mrb[0].mxu0 %v994
      %v1417 = vpop.f32.mrb[0].mxu0
      %v1418 = vadd.f32 %v1209, %v1417
      %v1419 = vpop.f32.mrb[0].mxu0
      %v1420 = vpop.f32.mrb[0].mxu0
      %v1421 = vadd.f32 %v1212, %v1420
      %v1422 = vpop.f32.mrb[0].mxu0
      %1423 = vmatprep.mubr.bf16.mxu0 0
      %1424 = vmatmul.mubr.bf16.gmra.mrb[0].mxu0 %v995
      %v1425 = vpop.f32.mrb[0].mxu0
      %v1426 = vadd.f32 %v1217, %v1425
      %v1427 = vpop.f32.mrb[0].mxu0
      %v1428 = vpop.f32.mrb[0].mxu0
      %v1429 = vadd.f32 %v1220, %v1428
      %v1430 = vpop.f32.mrb[0].mxu0
      %1431 = vmatprep.mubr.bf16.mxu0 0
      %1432 = vmatmul.mubr.bf16.gmra.mrb[0].mxu0 %v996
      %v1433 = vpop.f32.mrb[0].mxu0
      %v1434 = vadd.f32 %v1225, %v1433
      %v1435 = vpop.f32.mrb[0].mxu0
      %v1436 = vpop.f32.mrb[0].mxu0
      %v1437 = vadd.f32 %v1228, %v1436
      %v1438 = vpop.f32.mrb[0].mxu0
      %1439 = vmatprep.mubr.bf16.mxu0 0
      %1440 = vmatmul.mubr.bf16.gmra.mrb[0].mxu0 %v997
      %v1441 = vpop.f32.mrb[0].mxu0
      %v1442 = vadd.f32 %v1233, %v1441
      %v1443 = vpop.f32.mrb[0].mxu0
      %v1444 = vpop.f32.mrb[0].mxu0
      %v1445 = vadd.f32 %v1236, %v1444
      %v1446 = vpop.f32.mrb[0].mxu0
      %1447 = vdwg.mxu0
      %v1448 = vld [vmem:[%s7] sm:$0x1]
      %v1450 = vlaneseq
      %v1451 = vshrl.u32 %v1450, 7
      %v1452 = vsub.s32 0, %v1451
      %v1453 = vrot.slane %v1448, %v1452
      %v1455 = vadd.f32 %v1322, %v1453
      %v1456 = vadd.f32 %v1325, %v1453
      %v1457 = vadd.f32 %v1330, %v1453
      %v1458 = vadd.f32 %v1333, %v1453
      %v1459 = vadd.f32 %v1338, %v1453
      %v1460 = vadd.f32 %v1341, %v1453
      %v1461 = vadd.f32 %v1346, %v1453
      %v1462 = vadd.f32 %v1349, %v1453
      %v1463 = vadd.f32 %v1354, %v1453
      %v1464 = vadd.f32 %v1357, %v1453
      %v1465 = vadd.f32 %v1362, %v1453
      %v1466 = vadd.f32 %v1365, %v1453
      %v1467 = vadd.f32 %v1370, %v1453
      %v1468 = vadd.f32 %v1373, %v1453
      %v1469 = vadd.f32 %v1378, %v1453
      %v1470 = vadd.f32 %v1381, %v1453
      %v1471 = vadd.f32 %v1386, %v1453
      %v1472 = vadd.f32 %v1389, %v1453
      %v1473 = vadd.f32 %v1394, %v1453
      %v1474 = vadd.f32 %v1397, %v1453
      %v1475 = vadd.f32 %v1402, %v1453
      %v1476 = vadd.f32 %v1405, %v1453
      %v1477 = vadd.f32 %v1410, %v1453
      %v1478 = vadd.f32 %v1413, %v1453
      %v1479 = vadd.f32 %v1418, %v1453
      %v1480 = vadd.f32 %v1421, %v1453
      %v1481 = vadd.f32 %v1426, %v1453
      %v1482 = vadd.f32 %v1429, %v1453
      %v1483 = vadd.f32 %v1434, %v1453
      %v1484 = vadd.f32 %v1437, %v1453
      %v1485 = vadd.f32 %v1442, %v1453
      %v1486 = vadd.f32 %v1445, %v1453
      %v1487 = vmax.f32 %v1455, 0.0
      %v1488 = vmax.f32 %v1456, 0.0
      %v1489 = vmax.f32 %v1457, 0.0
      %v1490 = vmax.f32 %v1458, 0.0
      %v1491 = vmax.f32 %v1459, 0.0
      %v1492 = vmax.f32 %v1460, 0.0
      %v1493 = vmax.f32 %v1461, 0.0
      %v1494 = vmax.f32 %v1462, 0.0
      %v1495 = vmax.f32 %v1463, 0.0
      %v1496 = vmax.f32 %v1464, 0.0
      %v1497 = vmax.f32 %v1465, 0.0
      %v1498 = vmax.f32 %v1466, 0.0
      %v1499 = vmax.f32 %v1467, 0.0
      %v1500 = vmax.f32 %v1468, 0.0
      %v1501 = vmax.f32 %v1469, 0.0
      %v1502 = vmax.f32 %v1470, 0.0
      %v1503 = vmax.f32 %v1471, 0.0
      %v1504 = vmax.f32 %v1472, 0.0
      %v1505 = vmax.f32 %v1473, 0.0
      %v1506 = vmax.f32 %v1474, 0.0
      %v1507 = vmax.f32 %v1475, 0.0
      %v1508 = vmax.f32 %v1476, 0.0
      %v1509 = vmax.f32 %v1477, 0.0
      %v1510 = vmax.f32 %v1478, 0.0
      %v1511 = vmax.f32 %v1479, 0.0
      %v1512 = vmax.f32 %v1480, 0.0
      %v1513 = vmax.f32 %v1481, 0.0
      %v1514 = vmax.f32 %v1482, 0.0
      %v1515 = vmax.f32 %v1483, 0.0
      %v1516 = vmax.f32 %v1484, 0.0
      %v1517 = vmax.f32 %v1485, 0.0
      %v1518 = vmax.f32 %v1486, 0.0
      %v1519 = vpack.c.bf16 %v1488, %v1487
      %v1520 = vpack.c.bf16 %v1490, %v1489
      %v1521 = vpack.c.bf16 %v1492, %v1491
      %v1522 = vpack.c.bf16 %v1494, %v1493
      %v1523 = vpack.c.bf16 %v1496, %v1495
      %v1524 = vpack.c.bf16 %v1498, %v1497
      %v1525 = vpack.c.bf16 %v1500, %v1499
      %v1526 = vpack.c.bf16 %v1502, %v1501
      %v1527 = vpack.c.bf16 %v1504, %v1503
      %v1528 = vpack.c.bf16 %v1506, %v1505
      %v1529 = vpack.c.bf16 %v1508, %v1507
      %v1530 = vpack.c.bf16 %v1510, %v1509
      %v1531 = vpack.c.bf16 %v1512, %v1511
      %v1532 = vpack.c.bf16 %v1514, %v1513
      %v1533 = vpack.c.bf16 %v1516, %v1515
      %v1534 = vpack.c.bf16 %v1518, %v1517
      %v1551 = vunpack.c.l.b16 %v1519
      %v1552 = vunpack.c.h.b16 %v1519
      %v1553 = vunpack.c.l.b16 %v1520
      %v1554 = vunpack.c.h.b16 %v1520
      %v1555 = vunpack.c.l.b16 %v1521
      %v1556 = vunpack.c.h.b16 %v1521
      %v1557 = vunpack.c.l.b16 %v1522
      %v1558 = vunpack.c.h.b16 %v1522
      %v1559 = vunpack.c.l.b16 %v1523
      %v1560 = vunpack.c.h.b16 %v1523
      %v1561 = vunpack.c.l.b16 %v1524
      %v1562 = vunpack.c.h.b16 %v1524
      %v1563 = vunpack.c.l.b16 %v1525
      %v1564 = vunpack.c.h.b16 %v1525
      %v1565 = vunpack.c.l.b16 %v1526
      %v1566 = vunpack.c.h.b16 %v1526
      %v1567 = vunpack.c.l.b16 %v1527
      %v1568 = vunpack.c.h.b16 %v1527
      %v1569 = vunpack.c.l.b16 %v1528
      %v1570 = vunpack.c.h.b16 %v1528
      %v1571 = vunpack.c.l.b16 %v1529
      %v1572 = vunpack.c.h.b16 %v1529
      %v1573 = vunpack.c.l.b16 %v1530
      %v1574 = vunpack.c.h.b16 %v1530
      %v1575 = vunpack.c.l.b16 %v1531
      %v1576 = vunpack.c.h.b16 %v1531
      %v1577 = vunpack.c.l.b16 %v1532
      %v1578 = vunpack.c.h.b16 %v1532
      %v1579 = vunpack.c.l.b16 %v1533
      %v1580 = vunpack.c.h.b16 %v1533
      %v1581 = vunpack.c.l.b16 %v1534
      %v1582 = vunpack.c.h.b16 %v1534
      %v1583 = vpack.c.b16 %v1551, %v1551
      %v1584 = vpack.c.b16 %v1552, %v1552
      %v1585 = vpack.c.b16 %v1553, %v1553
      %v1586 = vpack.c.b16 %v1554, %v1554
      %v1587 = vpack.c.b16 %v1555, %v1555
      %v1588 = vpack.c.b16 %v1556, %v1556
      %v1589 = vpack.c.b16 %v1557, %v1557
      %v1590 = vpack.c.b16 %v1558, %v1558
      %v1591 = vpack.c.b16 %v1559, %v1559
      %v1592 = vpack.c.b16 %v1560, %v1560
      %v1593 = vpack.c.b16 %v1561, %v1561
      %v1594 = vpack.c.b16 %v1562, %v1562
      %v1595 = vpack.c.b16 %v1563, %v1563
      %v1596 = vpack.c.b16 %v1564, %v1564
      %v1597 = vpack.c.b16 %v1565, %v1565
      %v1598 = vpack.c.b16 %v1566, %v1566
      %v1599 = vpack.c.b16 %v1567, %v1567
      %v1600 = vpack.c.b16 %v1568, %v1568
      %v1601 = vpack.c.b16 %v1569, %v1569
      %v1602 = vpack.c.b16 %v1570, %v1570
      %v1603 = vpack.c.b16 %v1571, %v1571
      %v1604 = vpack.c.b16 %v1572, %v1572
      %v1605 = vpack.c.b16 %v1573, %v1573
      %v1606 = vpack.c.b16 %v1574, %v1574
      %v1607 = vpack.c.b16 %v1575, %v1575
      %v1608 = vpack.c.b16 %v1576, %v1576
      %v1609 = vpack.c.b16 %v1577, %v1577
      %v1610 = vpack.c.b16 %v1578, %v1578
      %v1611 = vpack.c.b16 %v1579, %v1579
      %v1612 = vpack.c.b16 %v1580, %v1580
      %v1613 = vpack.c.b16 %v1581, %v1581
      %v1614 = vpack.c.b16 %v1582, %v1582
      %1647 = vst [vmem:[%s307] sm:$0xf] %v1583
      %1648 = vst [vmem:[%s307 + $0x4] sm:$0xf] %v1584
      %1649 = vst [vmem:[%s307 + $0x8] sm:$0xf] %v1585
      %1650 = vst [vmem:[%s307 + $0xc] sm:$0xf] %v1586
      %1651 = vst [vmem:[%s307 + $0x10] sm:$0xf] %v1587
      %1652 = vst [vmem:[%s307 + $0x14] sm:$0xf] %v1588
      %1653 = vst [vmem:[%s307 + $0x18] sm:$0xf] %v1589
      %1654 = vst [vmem:[%s307 + $0x1c] sm:$0xf] %v1590
      %1655 = vst [vmem:[%s307 + $0x20] sm:$0xf] %v1591
      %1656 = vst [vmem:[%s307 + $0x24] sm:$0xf] %v1592
      %1657 = vst [vmem:[%s307 + $0x28] sm:$0xf] %v1593
      %1658 = vst [vmem:[%s307 + $0x2c] sm:$0xf] %v1594
      %1659 = vst [vmem:[%s307 + $0x30] sm:$0xf] %v1595
      %1660 = vst [vmem:[%s307 + $0x34] sm:$0xf] %v1596
      %1661 = vst [vmem:[%s307 + $0x38] sm:$0xf] %v1597
      %1662 = vst [vmem:[%s307 + $0x3c] sm:$0xf] %v1598
      %1663 = vst [vmem:[%s307 + $0x40] sm:$0xf] %v1599
      %1664 = vst [vmem:[%s307 + $0x44] sm:$0xf] %v1600
      %1665 = vst [vmem:[%s307 + $0x48] sm:$0xf] %v1601
      %1666 = vst [vmem:[%s307 + $0x4c] sm:$0xf] %v1602
      %1667 = vst [vmem:[%s307 + $0x50] sm:$0xf] %v1603
      %1668 = vst [vmem:[%s307 + $0x54] sm:$0xf] %v1604
      %1669 = vst [vmem:[%s307 + $0x58] sm:$0xf] %v1605
      %1670 = vst [vmem:[%s307 + $0x5c] sm:$0xf] %v1606
      %1671 = vst [vmem:[%s307 + $0x60] sm:$0xf] %v1607
      %1672 = vst [vmem:[%s307 + $0x64] sm:$0xf] %v1608
      %1673 = vst [vmem:[%s307 + $0x68] sm:$0xf] %v1609
      %1674 = vst [vmem:[%s307 + $0x6c] sm:$0xf] %v1610
      %1675 = vst [vmem:[%s307 + $0x70] sm:$0xf] %v1611
      %1676 = vst [vmem:[%s307 + $0x74] sm:$0xf] %v1612
      %1677 = vst [vmem:[%s307 + $0x78] sm:$0xf] %v1613
      %1678 = vst [vmem:[%s307 + $0x7c] sm:$0xf] %v1614
      %s1679 = smul.u32 32, %s19
      %p1680 = scmp.lt.s32.totalorder %s1679, 63
      %s1681 = scalar_select %p1680, %s1679, 63
      %s1682 = smul.addr %s1681, 4
      %s1683 = scalar_lea.vmem %s8, %s1682
      // Predicated region
      $region53: #{bottleneck_forward.1} parent=51 // pred_check
        %p1684 = pneg %p210
      $region54: #{bottleneck_forward.1} parent=51 // pred_check_branch
        %1686 = sbr.rel (%p1684) target = $region56
      $region55: #{bottleneck_forward.1} parent=51 // pred_region
        %s1687 = smul.u32 32, %s19
      $region56: #{bottleneck_forward.1} parent=51 // pred_fallthru
        _
    $region52: #{bottleneck_forward.1} parent=5 // pred_fallthru
      _
    %p1688 = scmp.le.s32.totalorder 2, %s14
    // Predicated region
    $region57: #{bottleneck_forward.1} parent=5 // pred_check
      %p1689 = pneg %p1688
    $region58: #{bottleneck_forward.1} parent=5 // pred_check_branch
      %1691 = sbr.rel (%p1689) target = $region60
    $region59: #{bottleneck_forward.1} parent=5 // pred_region
      %s1692 = ssub.s32 %s14, 2
      // Predicated region
      $region61: #{bottleneck_forward.1} parent=59 // pred_check
        %p1693 = pneg %p216
      $region62: #{bottleneck_forward.1} parent=59 // pred_check_branch
        %1695 = sbr.rel (%p1693) target = $region64
      $region63: #{bottleneck_forward.1} parent=59 // pred_region
        %s1696 = smul.u32 32, %s20
        %p1697 = scmp.lt.s32.totalorder %s1696, 63
        %s1698 = scalar_select %p1697, %s1696, 63
        %s1699 = smul.addr %s1698, 4
        %s1700 = scalar_lea.vmem %s8, %s1699
      $region64: #{bottleneck_forward.1} parent=59 // pred_fallthru
        _
    $region60: #{bottleneck_forward.1} parent=5 // pred_fallthru
      _
  $region6: #{bottleneck_forward.1} parent=0 // loop_footer
    %s18 = sadd.s32 1, %s14
  $region7: #{bottleneck_forward.1} parent=0 // loop_footer_branch
    %13 = sbr.rel target = $region3
  $region8: #{bottleneck_forward.1} parent=0 // loop_exit
    _

// kernel: bottleneck_forward.1
$region0: #{bottleneck_forward.1}
  #allocation0 [shape = 'u32[]', space=smem, size = 0x4, offset = 0x4, fixed_abs, tag = 'smem constant byte address 0x4 - core index']
  #allocation1 [shape = 'u32[144,128]{1,0:T(1,128)}', space=vmem, size = 0x12000, scoped, tag = 'internal scratch']
  %s0 = inlined_call_operand.vmem [shape: bf16[512,128], index: 0, kind: input, shape index: {}]
  %s1 = inlined_call_operand.vmem [shape: bf16[128,128], index: 1, kind: input, shape index: {}]
  %s2 = inlined_call_operand.vmem [shape: f32[1,128], index: 2, kind: input, shape index: {}]
  %s3 = inlined_call_operand.vmem [shape: bf16[128,128], index: 3, kind: input, shape index: {}]
  %s4 = inlined_call_operand.vmem [shape: f32[1,128], index: 4, kind: input, shape index: {}]
  %s5 = inlined_call_operand.vmem [shape: bf16[128,128], index: 5, kind: input, shape index: {}]
  %s6 = inlined_call_operand.vmem [shape: bf16[128,128], index: 6, kind: input, shape index: {}]
  %s7 = inlined_call_operand.vmem [shape: f32[1,128], index: 7, kind: input, shape index: {}]
  %s8 = inlined_call_operand.vmem [shape: bf16[512,128], index: 8, kind: output, shape index: {}]
  %s9 = sld [smem:[#allocation0]]
  $region65: #{bottleneck_forward.1} parent=0
    _
  %s11 = ssub.s32 1, %s9
  %s12 = scalar_select 0, %s11, %s9
  loop: start=0, step=1, limit=4
  $region2: #{bottleneck_forward.1} parent=0 // loop_pre_header
    _
  $region3: #{bottleneck_forward.1} parent=0 // loop_header
    %s14 = sphi 0, %s18
    %p15 = scmp.ge.s32.totalorder %s14, 4
    %s24 = sphi 0, %s26
    %s27 = sphi 0, %s24
    %s28 = sphi 0, %s27
    %s44 = sphi 0, %s28
    %s48 = sphi 0, %s48
    %s50 = sphi 0, %s48
    %s51 = sphi 0, %s50
    %s65 = sphi 0, %s51
    %s69 = sphi 0, %s69
    %s71 = sphi 0, %s69
    %s72 = sphi 0, %s71
    %s86 = sphi 0, %s72
    %s90 = sphi 0, %s90
    %s92 = sphi 0, %s90
    %s93 = sphi 0, %s92
    %s107 = sphi 0, %s93
    %s111 = sphi 0, %s111
    %s113 = sphi 0, %s111
    %s114 = sphi 0, %s113
    %s128 = sphi 0, %s114
    %s132 = sphi 0, %s132
    %s134 = sphi 0, %s132
    %s135 = sphi 0, %s134
    %s149 = sphi 0, %s135
    %s153 = sphi 0, %s153
    %s155 = sphi 0, %s153
    %s156 = sphi 0, %s155
    %s170 = sphi 0, %s156
    %s174 = sphi 0, %s174
    %s176 = sphi 0, %s174
    %s177 = sphi 0, %s176
    %s191 = sphi 0, %s177
    %s197 = sphi 0, %s199
    %s200 = sphi 0, %s197
    %s201 = sphi 0, %s200
    %s217 = sphi 0, %s201
  $region4: #{bottleneck_forward.1} parent=0 // loop_header_branch
    %17 = sbr.rel (%p15) target = $region8
  $region5: #{bottleneck_forward.1} parent=0 // loop_body
    %s19 = ssub.s32 %s14, 1
    %s20 = ssub.s32 %s14, 2
    %s21 = sadd.s32 %s14, 1
    %s22 = ssub.s32 %s14, %s21
    %p23 = scmp.eq.s32.totalorder %s22, 0
    %s25 = sadd.s32 %s24, 1
    %s26 = scalar_select %p23, %s24, %s25
    %p29 = pneg %p23
    %p30 = scmp.eq.s32.totalorder %s14, 1
    %p31 = por %p29, %p30
    %p32 = scmp.ne.s32.totalorder %s24, %s27
    %p33 = scmp.eq.s32.totalorder %s14, 0
    %p34 = por %p32, %p33
    %p35 = scmp.ne.s32.totalorder %s24, %s27
    %p36 = scmp.eq.s32.totalorder %s19, 1
    %p37 = por %p35, %p36
    %p38 = scmp.ne.s32.totalorder %s27, %s28
    %p39 = scmp.eq.s32.totalorder %s19, 0
    %p40 = por %p38, %p39
    %p41 = scmp.ne.s32.totalorder %s27, %s28
    %p42 = scmp.eq.s32.totalorder %s20, 1
    %p43 = por %p41, %p42
    %p45 = scmp.ne.s32.totalorder %s28, %s44
    %p46 = scmp.eq.s32.totalorder %s20, 0
    %p47 = por %p45, %p46
    %s49 = sadd.s32 %s48, 1
    %p52 = scmp.eq.s32.totalorder %s14, 1
    %p53 = scmp.ne.s32.totalorder %s48, %s50
    %p54 = scmp.eq.s32.totalorder %s14, 0
    %p55 = por %p53, %p54
    %p56 = scmp.ne.s32.totalorder %s48, %s50
    %p57 = scmp.eq.s32.totalorder %s19, 1
    %p58 = por %p56, %p57
    %p59 = scmp.ne.s32.totalorder %s50, %s51
    %p60 = scmp.eq.s32.totalorder %s19, 0
    %p61 = por %p59, %p60
    %p62 = scmp.ne.s32.totalorder %s50, %s51
    %p63 = scmp.eq.s32.totalorder %s20, 1
    %p64 = por %p62, %p63
    %p66 = scmp.ne.s32.totalorder %s51, %s65
    %p67 = scmp.eq.s32.totalorder %s20, 0
    %p68 = por %p66, %p67
    %s70 = sadd.s32 %s69, 1
    %p73 = scmp.eq.s32.totalorder %s14, 1
    %p74 = scmp.ne.s32.totalorder %s69, %s71
    %p75 = scmp.eq.s32.totalorder %s14, 0
    %p76 = por %p74, %p75
    %p77 = scmp.ne.s32.totalorder %s69, %s71
    %p78 = scmp.eq.s32.totalorder %s19, 1
    %p79 = por %p77, %p78
    %p80 = scmp.ne.s32.totalorder %s71, %s72
    %p81 = scmp.eq.s32.totalorder %s19, 0
    %p82 = por %p80, %p81
    %p83 = scmp.ne.s32.totalorder %s71, %s72
    %p84 = scmp.eq.s32.totalorder %s20, 1
    %p85 = por %p83, %p84
    %p87 = scmp.ne.s32.totalorder %s72, %s86
    %p88 = scmp.eq.s32.totalorder %s20, 0
    %p89 = por %p87, %p88
    %s91 = sadd.s32 %s90, 1
    %p94 = scmp.eq.s32.totalorder %s14, 1
    %p95 = scmp.ne.s32.totalorder %s90, %s92
    %p96 = scmp.eq.s32.totalorder %s14, 0
    %p97 = por %p95, %p96
    %p98 = scmp.ne.s32.totalorder %s90, %s92
    %p99 = scmp.eq.s32.totalorder %s19, 1
    %p100 = por %p98, %p99
    %p101 = scmp.ne.s32.totalorder %s92, %s93
    %p102 = scmp.eq.s32.totalorder %s19, 0
    %p103 = por %p101, %p102
    %p104 = scmp.ne.s32.totalorder %s92, %s93
    %p105 = scmp.eq.s32.totalorder %s20, 1
    %p106 = por %p104, %p105
    %p108 = scmp.ne.s32.totalorder %s93, %s107
    %p109 = scmp.eq.s32.totalorder %s20, 0
    %p110 = por %p108, %p109
    %s112 = sadd.s32 %s111, 1
    %p115 = scmp.eq.s32.totalorder %s14, 1
    %p116 = scmp.ne.s32.totalorder %s111, %s113
    %p117 = scmp.eq.s32.totalorder %s14, 0
    %p118 = por %p116, %p117
    %p119 = scmp.ne.s32.totalorder %s111, %s113
    %p120 = scmp.eq.s32.totalorder %s19, 1
    %p121 = por %p119, %p120
    %p122 = scmp.ne.s32.totalorder %s113, %s114
    %p123 = scmp.eq.s32.totalorder %s19, 0
    %p124 = por %p122, %p123
    %p125 = scmp.ne.s32.totalorder %s113, %s114
    %p126 = scmp.eq.s32.totalorder %s20, 1
    %p127 = por %p125, %p126
    %p129 = scmp.ne.s32.totalorder %s114, %s128
    %p130 = scmp.eq.s32.totalorder %s20, 0
    %p131 = por %p129, %p130
    %s133 = sadd.s32 %s132, 1
    %p136 = scmp.eq.s32.totalorder %s14, 1
    %p137 = scmp.ne.s32.totalorder %s132, %s134
    %p138 = scmp.eq.s32.totalorder %s14, 0
    %p139 = por %p137, %p138
    %p140 = scmp.ne.s32.totalorder %s132, %s134
    %p141 = scmp.eq.s32.totalorder %s19, 1
    %p142 = por %p140, %p141
    %p143 = scmp.ne.s32.totalorder %s134, %s135
    %p144 = scmp.eq.s32.totalorder %s19, 0
    %p145 = por %p143, %p144
    %p146 = scmp.ne.s32.totalorder %s134, %s135
    %p147 = scmp.eq.s32.totalorder %s20, 1
    %p148 = por %p146, %p147
    %p150 = scmp.ne.s32.totalorder %s135, %s149
    %p151 = scmp.eq.s32.totalorder %s20, 0
    %p152 = por %p150, %p151
    %s154 = sadd.s32 %s153, 1
    %p157 = scmp.eq.s32.totalorder %s14, 1
    %p158 = scmp.ne.s32.totalorder %s153, %s155
    %p159 = scmp.eq.s32.totalorder %s14, 0
    %p160 = por %p158, %p159
    %p161 = scmp.ne.s32.totalorder %s153, %s155
    %p162 = scmp.eq.s32.totalorder %s19, 1
    %p163 = por %p161, %p162
    %p164 = scmp.ne.s32.totalorder %s155, %s156
    %p165 = scmp.eq.s32.totalorder %s19, 0
    %p166 = por %p164, %p165
    %p167 = scmp.ne.s32.totalorder %s155, %s156
    %p168 = scmp.eq.s32.totalorder %s20, 1
    %p169 = por %p167, %p168
    %p171 = scmp.ne.s32.totalorder %s156, %s170
    %p172 = scmp.eq.s32.totalorder %s20, 0
    %p173 = por %p171, %p172
    %s175 = sadd.s32 %s174, 1
    %p178 = scmp.eq.s32.totalorder %s14, 1
    %p179 = scmp.ne.s32.totalorder %s174, %s176
    %p180 = scmp.eq.s32.totalorder %s14, 0
    %p181 = por %p179, %p180
    %p182 = scmp.ne.s32.totalorder %s174, %s176
    %p183 = scmp.eq.s32.totalorder %s19, 1
    %p184 = por %p182, %p183
    %p185 = scmp.ne.s32.totalorder %s176, %s177
    %p186 = scmp.eq.s32.totalorder %s19, 0
    %p187 = por %p185, %p186
    %p188 = scmp.ne.s32.totalorder %s176, %s177
    %p189 = scmp.eq.s32.totalorder %s20, 1
    %p190 = por %p188, %p189
    %p192 = scmp.ne.s32.totalorder %s177, %s191
    %p193 = scmp.eq.s32.totalorder %s20, 0
    %p194 = por %p192, %p193
    %s195 = ssub.s32 %s14, %s21
    %p196 = scmp.eq.s32.totalorder %s195, 0
    %s198 = sadd.s32 %s197, 1
    %s199 = scalar_select %p196, %s197, %s198
    %p202 = pneg %p196
    %p203 = scmp.eq.s32.totalorder %s14, 1
    %p204 = por %p202, %p203
    %p205 = scmp.ne.s32.totalorder %s197, %s200
    %p206 = scmp.eq.s32.totalorder %s14, 0
    %p207 = por %p205, %p206
    %p208 = scmp.ne.s32.totalorder %s197, %s200
    %p209 = scmp.eq.s32.totalorder %s19, 1
    %p210 = por %p208, %p209
    %p211 = scmp.ne.s32.totalorder %s200, %s201
    %p212 = scmp.eq.s32.totalorder %s19, 0
    %p213 = por %p211, %p212
    %p214 = scmp.ne.s32.totalorder %s200, %s201
    %p215 = scmp.eq.s32.totalorder %s20, 1
    %p216 = por %p214, %p215
    %p218 = scmp.ne.s32.totalorder %s201, %s217
    %p219 = scmp.eq.s32.totalorder %s20, 0
    %p220 = por %p218, %p219
    %p221 = scmp.le.s32.totalorder 1, %s14
    %p222 = scmp.lt.s32.totalorder %s14, 3
    %p223 = pnand %p221, %p222
    %p224 = pneg %p223
    // Predicated region
    $region9: #{bottleneck_forward.1} parent=5 // pred_check
      _
    $region10: #{bottleneck_forward.1} parent=5 // pred_check_branch
      %226 = sbr.rel (%p223) target = $region12
    $region11: #{bottleneck_forward.1} parent=5 // pred_region
      %s227 = ssub.s32 %s14, 1
      // Predicated region
      $region13: #{bottleneck_forward.1} parent=11 // pred_check
        %p228 = pneg %p61
      $region14: #{bottleneck_forward.1} parent=11 // pred_check_branch
        %230 = sbr.rel (%p228) target = $region16
      $region15: #{bottleneck_forward.1} parent=11 // pred_region
        _
      $region16: #{bottleneck_forward.1} parent=11 // pred_fallthru
        _
      // Predicated region
      $region17: #{bottleneck_forward.1} parent=11 // pred_check
        %p231 = pneg %p82
      $region18: #{bottleneck_forward.1} parent=11 // pred_check_branch
        %233 = sbr.rel (%p231) target = $region20
      $region19: #{bottleneck_forward.1} parent=11 // pred_region
        _
      $region20: #{bottleneck_forward.1} parent=11 // pred_fallthru
        _
      // Predicated region
      $region21: #{bottleneck_forward.1} parent=11 // pred_check
        %p234 = pneg %p103
      $region22: #{bottleneck_forward.1} parent=11 // pred_check_branch
        %236 = sbr.rel (%p234) target = $region24
      $region23: #{bottleneck_forward.1} parent=11 // pred_region
        _
      $region24: #{bottleneck_forward.1} parent=11 // pred_fallthru
        _
      // Predicated region
      $region25: #{bottleneck_forward.1} parent=11 // pred_check
        %p237 = pneg %p124
      $region26: #{bottleneck_forward.1} parent=11 // pred_check_branch
        %239 = sbr.rel (%p237) target = $region28
      $region27: #{bottleneck_forward.1} parent=11 // pred_region
        _
      $region28: #{bottleneck_forward.1} parent=11 // pred_fallthru
        _
      // Predicated region
      $region29: #{bottleneck_forward.1} parent=11 // pred_check
        %p240 = pneg %p145
      $region30: #{bottleneck_forward.1} parent=11 // pred_check_branch
        %242 = sbr.rel (%p240) target = $region32
      $region31: #{bottleneck_forward.1} parent=11 // pred_region
        _
      $region32: #{bottleneck_forward.1} parent=11 // pred_fallthru
        _
      // Predicated region
      $region33: #{bottleneck_forward.1} parent=11 // pred_check
        %p243 = pneg %p166
      $region34: #{bottleneck_forward.1} parent=11 // pred_check_branch
        %245 = sbr.rel (%p243) target = $region36
      $region35: #{bottleneck_forward.1} parent=11 // pred_region
        _
      $region36: #{bottleneck_forward.1} parent=11 // pred_fallthru
        _
      // Predicated region
      $region37: #{bottleneck_forward.1} parent=11 // pred_check
        %p246 = pneg %p187
      $region38: #{bottleneck_forward.1} parent=11 // pred_check_branch
        %248 = sbr.rel (%p246) target = $region40
      $region39: #{bottleneck_forward.1} parent=11 // pred_region
        _
      $region40: #{bottleneck_forward.1} parent=11 // pred_fallthru
        _
    $region12: #{bottleneck_forward.1} parent=5 // pred_fallthru
      _
    %p249 = scmp.lt.s32.totalorder %s14, 2
    // Predicated region
    $region41: #{bottleneck_forward.1} parent=5 // pred_check
      %p250 = pneg %p249
    $region42: #{bottleneck_forward.1} parent=5 // pred_check_branch
      %252 = sbr.rel (%p250) target = $region44
    $region43: #{bottleneck_forward.1} parent=5 // pred_region
      // Predicated region
      $region45: #{bottleneck_forward.1} parent=43 // pred_check
        %p253 = pneg %p34
      $region46: #{bottleneck_forward.1} parent=43 // pred_check_branch
        %255 = sbr.rel (%p253) target = $region48
      $region47: #{bottleneck_forward.1} parent=43 // pred_region
        %s256 = smul.u32 32, %s14
        %p257 = scmp.lt.s32.totalorder %s256, 63
        %s258 = scalar_select %p257, %s256, 63
        %s259 = smul.addr %s258, 4
        %s260 = scalar_lea.vmem %s0, %s259
        %s261 = smul.u32 32, %s14
      $region48: #{bottleneck_forward.1} parent=43 // pred_fallthru
        _
    $region44: #{bottleneck_forward.1} parent=5 // pred_fallthru
      _
    %p262 = scmp.le.s32.totalorder 1, %s14
    %p263 = scmp.lt.s32.totalorder %s14, 3
    %p264 = pnand %p262, %p263
    %p265 = pneg %p264
    // Predicated region
    $region49: #{bottleneck_forward.1} parent=5 // pred_check
      _
    $region50: #{bottleneck_forward.1} parent=5 // pred_check_branch
      %267 = sbr.rel (%p264) target = $region52
    $region51: #{bottleneck_forward.1} parent=5 // pred_region
      %s268 = ssub.s32 %s14, 1
      %s269 = smul.u32 32, %s19
      %p270 = scmp.lt.s32.totalorder %s269, 63
      %s271 = scalar_select %p270, %s269, 63
      %s272 = smul.addr %s271, 4
      %s273 = scalar_lea.vmem %s0, %s272
      %p274 = pneg %p40
      %p275 = pneg %p37
      %p276 = pneg %p61
      %p277 = pneg %p58
      %p278 = pneg %p82
      %p279 = pneg %p79
      %p280 = pneg %p103
      %p281 = pneg %p100
      %p282 = pneg %p124
      %p283 = pneg %p121
      %p284 = pneg %p145
      %p285 = pneg %p142
      %p286 = pneg %p166
      %p287 = pneg %p163
      %p288 = pneg %p187
      %p289 = pneg %p184
      %p290 = pneg %p213
      %p291 = pneg %p210
      %s292 = smul.u32 32, %s19
      %p293 = scmp.lt.s32.totalorder %s292, 63
      %s294 = scalar_select %p293, %s292, 63
      %s295 = smul.addr %s294, 4
      %s296 = scalar_lea.vmem %s8, %s295
      %s297 = smul.u32 32, %s19
      %p298 = scmp.lt.s32.totalorder %s297, 63
      %s299 = scalar_select %p298, %s297, 63
      %s300 = smul.addr %s299, 4
      %s301 = scalar_lea.vmem %s0, %s300
      %s302 = smul.u32 32, %s19
      %s303 = smul.u32 32, %s19
      %p304 = scmp.lt.s32.totalorder %s303, 63
      %s305 = scalar_select %p304, %s303, 63
      %s306 = smul.addr %s305, 4
      %s307 = scalar_lea.vmem %s8, %s306
      %s308 = smul.u32 32, %s19
      %v310 = vld [vmem:[%s301] sm:$0xf]
      %v311 = vld [vmem:[%s301 + $0x4] sm:$0xf]
      %v312 = vld [vmem:[%s301 + $0x8] sm:$0xf]
      %v313 = vld [vmem:[%s301 + $0xc] sm:$0xf]
      %v314 = vld [vmem:[%s301 + $0x10] sm:$0xf]
      %v315 = vld [vmem:[%s301 + $0x14] sm:$0xf]
      %v316 = vld [vmem:[%s301 + $0x18] sm:$0xf]
      %v317 = vld [vmem:[%s301 + $0x1c] sm:$0xf]
      %v318 = vld [vmem:[%s301 + $0x20] sm:$0xf]
      %v319 = vld [vmem:[%s301 + $0x24] sm:$0xf]
      %v320 = vld [vmem:[%s301 + $0x28] sm:$0xf]
      %v321 = vld [vmem:[%s301 + $0x2c] sm:$0xf]
      %v322 = vld [vmem:[%s301 + $0x30] sm:$0xf]
      %v323 = vld [vmem:[%s301 + $0x34] sm:$0xf]
      %v324 = vld [vmem:[%s301 + $0x38] sm:$0xf]
      %v325 = vld [vmem:[%s301 + $0x3c] sm:$0xf]
      %v326 = vld [vmem:[%s301 + $0x40] sm:$0xf]
      %v327 = vld [vmem:[%s301 + $0x44] sm:$0xf]
      %v328 = vld [vmem:[%s301 + $0x48] sm:$0xf]
      %v329 = vld [vmem:[%s301 + $0x4c] sm:$0xf]
      %v330 = vld [vmem:[%s301 + $0x50] sm:$0xf]
      %v331 = vld [vmem:[%s301 + $0x54] sm:$0xf]
      %v332 = vld [vmem:[%s301 + $0x58] sm:$0xf]
      %v333 = vld [vmem:[%s301 + $0x5c] sm:$0xf]
      %v334 = vld [vmem:[%s301 + $0x60] sm:$0xf]
      %v335 = vld [vmem:[%s301 + $0x64] sm:$0xf]
      %v336 = vld [vmem:[%s301 + $0x68] sm:$0xf]
      %v337 = vld [vmem:[%s301 + $0x6c] sm:$0xf]
      %v338 = vld [vmem:[%s301 + $0x70] sm:$0xf]
      %v339 = vld [vmem:[%s301 + $0x74] sm:$0xf]
      %v340 = vld [vmem:[%s301 + $0x78] sm:$0xf]
      %v341 = vld [vmem:[%s301 + $0x7c] sm:$0xf]
      %v342 = vld [vmem:[%s1] sm:$0xf]
      %v343 = vld [vmem:[%s1 + $0x4] sm:$0xf]
      %v344 = vld [vmem:[%s1 + $0x8] sm:$0xf]
      %v345 = vld [vmem:[%s1 + $0xc] sm:$0xf]
      %v346 = vld [vmem:[%s1 + $0x10] sm:$0xf]
      %v347 = vld [vmem:[%s1 + $0x14] sm:$0xf]
      %v348 = vld [vmem:[%s1 + $0x18] sm:$0xf]
      %v349 = vld [vmem:[%s1 + $0x1c] sm:$0xf]
      %v350 = vld [vmem:[%s1 + $0x20] sm:$0xf]
      %v351 = vld [vmem:[%s1 + $0x24] sm:$0xf]
      %v352 = vld [vmem:[%s1 + $0x28] sm:$0xf]
      %v353 = vld [vmem:[%s1 + $0x2c] sm:$0xf]
      %v354 = vld [vmem:[%s1 + $0x30] sm:$0xf]
      %v355 = vld [vmem:[%s1 + $0x34] sm:$0xf]
      %v356 = vld [vmem:[%s1 + $0x38] sm:$0xf]
      %v357 = vld [vmem:[%s1 + $0x3c] sm:$0xf]
      %v358 = vld [vmem:[%s2] sm:$0x1]
      %v360 = vlaneseq
      %v361 = vshrl.u32 %v360, 7
      %v362 = vsub.s32 0, %v361
      %v363 = vrot.slane %v358, %v362
      %v397 = vunpack.c.l.b16 %v310
      %v398 = vunpack.c.l.b16 %v311
      %v399 = vunpack.c.l.b16 %v312
      %v400 = vunpack.c.l.b16 %v313
      %v401 = vunpack.c.l.b16 %v314
      %v402 = vunpack.c.l.b16 %v315
      %v403 = vunpack.c.l.b16 %v316
      %v404 = vunpack.c.l.b16 %v317
      %v405 = vunpack.c.l.b16 %v318
      %v406 = vunpack.c.l.b16 %v319
      %v407 = vunpack.c.l.b16 %v320
      %v408 = vunpack.c.l.b16 %v321
      %v409 = vunpack.c.l.b16 %v322
      %v410 = vunpack.c.l.b16 %v323
      %v411 = vunpack.c.l.b16 %v324
      %v412 = vunpack.c.l.b16 %v325
      %v413 = vunpack.c.l.b16 %v326
      %v414 = vunpack.c.l.b16 %v327
      %v415 = vunpack.c.l.b16 %v328
      %v416 = vunpack.c.l.b16 %v329
      %v417 = vunpack.c.l.b16 %v330
      %v418 = vunpack.c.l.b16 %v331
      %v419 = vunpack.c.l.b16 %v332
      %v420 = vunpack.c.l.b16 %v333
      %v421 = vunpack.c.l.b16 %v334
      %v422 = vunpack.c.l.b16 %v335
      %v423 = vunpack.c.l.b16 %v336
      %v424 = vunpack.c.l.b16 %v337
      %v425 = vunpack.c.l.b16 %v338
      %v426 = vunpack.c.l.b16 %v339
      %v427 = vunpack.c.l.b16 %v340
      %v428 = vunpack.c.l.b16 %v341
      %v429 = vpack.c.b16 %v398, %v397
      %v430 = vpack.c.b16 %v400, %v399
      %v431 = vpack.c.b16 %v402, %v401
      %v432 = vpack.c.b16 %v404, %v403
      %v433 = vpack.c.b16 %v406, %v405
      %v434 = vpack.c.b16 %v408, %v407
      %v435 = vpack.c.b16 %v410, %v409
      %v436 = vpack.c.b16 %v412, %v411
      %v437 = vpack.c.b16 %v414, %v413
      %v438 = vpack.c.b16 %v416, %v415
      %v439 = vpack.c.b16 %v418, %v417
      %v440 = vpack.c.b16 %v420, %v419
      %v441 = vpack.c.b16 %v422, %v421
      %v442 = vpack.c.b16 %v424, %v423
      %v443 = vpack.c.b16 %v426, %v425
      %v444 = vpack.c.b16 %v428, %v427
      %v477 = vunpack.c.l.b16 %v342
      %v478 = vunpack.c.l.b16 %v343
      %v479 = vunpack.c.l.b16 %v344
      %v480 = vunpack.c.l.b16 %v345
      %v481 = vunpack.c.l.b16 %v346
      %v482 = vunpack.c.l.b16 %v347
      %v483 = vunpack.c.l.b16 %v348
      %v484 = vunpack.c.l.b16 %v349
      %v485 = vunpack.c.l.b16 %v350
      %v486 = vunpack.c.l.b16 %v351
      %v487 = vunpack.c.l.b16 %v352
      %v488 = vunpack.c.l.b16 %v353
      %v489 = vunpack.c.l.b16 %v354
      %v490 = vunpack.c.l.b16 %v355
      %v491 = vunpack.c.l.b16 %v356
      %v492 = vunpack.c.l.b16 %v357
      %v493 = vpack.c.b16 %v478, %v477
      %v494 = vpack.c.b16 %v480, %v479
      %v495 = vpack.c.b16 %v482, %v481
      %v496 = vpack.c.b16 %v484, %v483
      %v497 = vpack.c.b16 %v486, %v485
      %v498 = vpack.c.b16 %v488, %v487
      %v499 = vpack.c.b16 %v490, %v489
      %v500 = vpack.c.b16 %v492, %v491
      %509 = vmatprep.subr.bf16.mxu0 0
      %510 = vmatpush1.bf16.msra.mxu0 %v493
      %511 = vmatprep.subr.bf16.mxu0 0
      %512 = vmatpush1.bf16.msra.mxu0 %v494
      %513 = vmatprep.subr.bf16.mxu0 0
      %514 = vmatpush1.bf16.msra.mxu0 %v495
      %515 = vmatprep.subr.bf16.mxu0 0
      %516 = vmatpush1.bf16.msra.mxu0 %v496
      %517 = vmatprep.subr.bf16.mxu0 0
      %518 = vmatpush1.bf16.msra.mxu0 %v497
      %519 = vmatprep.subr.bf16.mxu0 0
      %520 = vmatpush1.bf16.msra.mxu0 %v498
      %521 = vmatprep.subr.bf16.mxu0 0
      %522 = vmatpush1.bf16.msra.mxu0 %v499
      %523 = vmatprep.subr.bf16.mxu0 0
      %524 = vmatpush1.bf16.msra.mxu0 %v500
      %525 = vmatprep.subr.bf16.mxu0 0
      %526 = vmatpush1.bf16.msra.mxu0 0
      %527 = vmatprep.subr.bf16.mxu0 0
      %528 = vmatpush1.bf16.msra.mxu0 0
      %529 = vmatprep.subr.bf16.mxu0 0
      %530 = vmatpush1.bf16.msra.mxu0 0
      %531 = vmatprep.subr.bf16.mxu0 0
      %532 = vmatpush1.bf16.msra.mxu0 0
      %533 = vmatprep.subr.bf16.mxu0 0
      %534 = vmatpush1.bf16.msra.mxu0 0
      %535 = vmatprep.subr.bf16.mxu0 0
      %536 = vmatpush1.bf16.msra.mxu0 0
      %537 = vmatprep.subr.bf16.mxu0 0
      %538 = vmatpush1.bf16.msra.mxu0 0
      %539 = vmatprep.subr.bf16.mxu0 0
      %540 = vmatpush1.bf16.msra.mxu0 0
      %541 = vmatprep.mubr.bf16.mxu0 0
      %542 = vmatmul.mubr.bf16.gmra.mrb[0].mxu0 %v429
      %v543 = vpop.f32.mrb[0].mxu0
      %v544 = vadd.f32 %v363, %v543
      %v545 = vpop.f32.mrb[0].mxu0
      %v546 = vpop.f32.mrb[0].mxu0
      %v547 = vadd.f32 %v363, %v546
      %v548 = vpop.f32.mrb[0].mxu0
      %549 = vmatprep.mubr.bf16.mxu0 0
      %550 = vmatmul.mubr.bf16.gmra.mrb[0].mxu0 %v430
      %v551 = vpop.f32.mrb[0].mxu0
      %v552 = vadd.f32 %v363, %v551
      %v553 = vpop.f32.mrb[0].mxu0
      %v554 = vpop.f32.mrb[0].mxu0
      %v555 = vadd.f32 %v363, %v554
      %v556 = vpop.f32.mrb[0].mxu0
      %557 = vmatprep.mubr.bf16.mxu0 0
      %558 = vmatmul.mubr.bf16.gmra.mrb[0].mxu0 %v431
      %v559 = vpop.f32.mrb[0].mxu0
      %v560 = vadd.f32 %v363, %v559
      %v561 = vpop.f32.mrb[0].mxu0
      %v562 = vpop.f32.mrb[0].mxu0
      %v563 = vadd.f32 %v363, %v562
      %v564 = vpop.f32.mrb[0].mxu0
      %565 = vmatprep.mubr.bf16.mxu0 0
      %566 = vmatmul.mubr.bf16.gmra.mrb[0].mxu0 %v432
      %v567 = vpop.f32.mrb[0].mxu0
      %v568 = vadd.f32 %v363, %v567
      %v569 = vpop.f32.mrb[0].mxu0
      %v570 = vpop.f32.mrb[0].mxu0
      %v571 = vadd.f32 %v363, %v570
      %v572 = vpop.f32.mrb[0].mxu0
      %573 = vmatprep.mubr.bf16.mxu0 0
      %574 = vmatmul.mubr.bf16.gmra.mrb[0].mxu0 %v433
      %v575 = vpop.f32.mrb[0].mxu0
      %v576 = vadd.f32 %v363, %v575
      %v577 = vpop.f32.mrb[0].mxu0
      %v578 = vpop.f32.mrb[0].mxu0
      %v579 = vadd.f32 %v363, %v578
      %v580 = vpop.f32.mrb[0].mxu0
      %581 = vmatprep.mubr.bf16.mxu0 0
      %582 = vmatmul.mubr.bf16.gmra.mrb[0].mxu0 %v434
      %v583 = vpop.f32.mrb[0].mxu0
      %v584 = vadd.f32 %v363, %v583
      %v585 = vpop.f32.mrb[0].mxu0
      %v586 = vpop.f32.mrb[0].mxu0
      %v587 = vadd.f32 %v363, %v586
      %v588 = vpop.f32.mrb[0].mxu0
      %589 = vmatprep.mubr.bf16.mxu0 0
      %590 = vmatmul.mubr.bf16.gmra.mrb[0].mxu0 %v435
      %v591 = vpop.f32.mrb[0].mxu0
      %v592 = vadd.f32 %v363, %v591
      %v593 = vpop.f32.mrb[0].mxu0
      %v594 = vpop.f32.mrb[0].mxu0
      %v595 = vadd.f32 %v363, %v594
      %v596 = vpop.f32.mrb[0].mxu0
      %597 = vmatprep.mubr.bf16.mxu0 0
      %598 = vmatmul.mubr.bf16.gmra.mrb[0].mxu0 %v436
      %v599 = vpop.f32.mrb[0].mxu0
      %v600 = vadd.f32 %v363, %v599
      %v601 = vpop.f32.mrb[0].mxu0
      %v602 = vpop.f32.mrb[0].mxu0
      %v603 = vadd.f32 %v363, %v602
      %v604 = vpop.f32.mrb[0].mxu0
      %605 = vmatprep.mubr.bf16.mxu0 0
      %606 = vmatmul.mubr.bf16.gmra.mrb[0].mxu0 %v437
      %v607 = vpop.f32.mrb[0].mxu0
      %v608 = vadd.f32 %v363, %v607
      %v609 = vpop.f32.mrb[0].mxu0
      %v610 = vpop.f32.mrb[0].mxu0
      %v611 = vadd.f32 %v363, %v610
      %v612 = vpop.f32.mrb[0].mxu0
      %613 = vmatprep.mubr.bf16.mxu0 0
      %614 = vmatmul.mubr.bf16.gmra.mrb[0].mxu0 %v438
      %v615 = vpop.f32.mrb[0].mxu0
      %v616 = vadd.f32 %v363, %v615
      %v617 = vpop.f32.mrb[0].mxu0
      %v618 = vpop.f32.mrb[0].mxu0
      %v619 = vadd.f32 %v363, %v618
      %v620 = vpop.f32.mrb[0].mxu0
      %621 = vmatprep.mubr.bf16.mxu0 0
      %622 = vmatmul.mubr.bf16.gmra.mrb[0].mxu0 %v439
      %v623 = vpop.f32.mrb[0].mxu0
      %v624 = vadd.f32 %v363, %v623
      %v625 = vpop.f32.mrb[0].mxu0
      %v626 = vpop.f32.mrb[0].mxu0
      %v627 = vadd.f32 %v363, %v626
      %v628 = vpop.f32.mrb[0].mxu0
      %629 = vmatprep.mubr.bf16.mxu0 0
      %630 = vmatmul.mubr.bf16.gmra.mrb[0].mxu0 %v440
      %v631 = vpop.f32.mrb[0].mxu0
      %v632 = vadd.f32 %v363, %v631
      %v633 = vpop.f32.mrb[0].mxu0
      %v634 = vpop.f32.mrb[0].mxu0
      %v635 = vadd.f32 %v363, %v634
      %v636 = vpop.f32.mrb[0].mxu0
      %637 = vmatprep.mubr.bf16.mxu0 0
      %638 = vmatmul.mubr.bf16.gmra.mrb[0].mxu0 %v441
      %v639 = vpop.f32.mrb[0].mxu0
      %v640 = vadd.f32 %v363, %v639
      %v641 = vpop.f32.mrb[0].mxu0
      %v642 = vpop.f32.mrb[0].mxu0
      %v643 = vadd.f32 %v363, %v642
      %v644 = vpop.f32.mrb[0].mxu0
      %645 = vmatprep.mubr.bf16.mxu0 0
      %646 = vmatmul.mubr.bf16.gmra.mrb[0].mxu0 %v442
      %v647 = vpop.f32.mrb[0].mxu0
      %v648 = vadd.f32 %v363, %v647
      %v649 = vpop.f32.mrb[0].mxu0
      %v650 = vpop.f32.mrb[0].mxu0
      %v651 = vadd.f32 %v363, %v650
      %v652 = vpop.f32.mrb[0].mxu0
      %653 = vmatprep.mubr.bf16.mxu0 0
      %654 = vmatmul.mubr.bf16.gmra.mrb[0].mxu0 %v443
      %v655 = vpop.f32.mrb[0].mxu0
      %v656 = vadd.f32 %v363, %v655
      %v657 = vpop.f32.mrb[0].mxu0
      %v658 = vpop.f32.mrb[0].mxu0
      %v659 = vadd.f32 %v363, %v658
      %v660 = vpop.f32.mrb[0].mxu0
      %661 = vmatprep.mubr.bf16.mxu0 0
      %662 = vmatmul.mubr.bf16.gmra.mrb[0].mxu0 %v444
      %v663 = vpop.f32.mrb[0].mxu0
      %v664 = vadd.f32 %v363, %v663
      %v665 = vpop.f32.mrb[0].mxu0
      %v666 = vpop.f32.mrb[0].mxu0
      %v667 = vadd.f32 %v363, %v666
      %v668 = vpop.f32.mrb[0].mxu0
      %669 = vdwg.mxu0
      %v670 = vmax.f32 %v544, 0.0
      %v671 = vmax.f32 %v547, 0.0
      %v672 = vmax.f32 %v552, 0.0
      %v673 = vmax.f32 %v555, 0.0
      %v674 = vmax.f32 %v560, 0.0
      %v675 = vmax.f32 %v563, 0.0
      %v676 = vmax.f32 %v568, 0.0
      %v677 = vmax.f32 %v571, 0.0
      %v678 = vmax.f32 %v576, 0.0
      %v679 = vmax.f32 %v579, 0.0
      %v680 = vmax.f32 %v584, 0.0
      %v681 = vmax.f32 %v587, 0.0
      %v682 = vmax.f32 %v592, 0.0
      %v683 = vmax.f32 %v595, 0.0
      %v684 = vmax.f32 %v600, 0.0
      %v685 = vmax.f32 %v603, 0.0
      %v686 = vmax.f32 %v608, 0.0
      %v687 = vmax.f32 %v611, 0.0
      %v688 = vmax.f32 %v616, 0.0
      %v689 = vmax.f32 %v619, 0.0
      %v690 = vmax.f32 %v624, 0.0
      %v691 = vmax.f32 %v627, 0.0
      %v692 = vmax.f32 %v632, 0.0
      %v693 = vmax.f32 %v635, 0.0
      %v694 = vmax.f32 %v640, 0.0
      %v695 = vmax.f32 %v643, 0.0
      %v696 = vmax.f32 %v648, 0.0
      %v697 = vmax.f32 %v651, 0.0
      %v698 = vmax.f32 %v656, 0.0
      %v699 = vmax.f32 %v659, 0.0
      %v700 = vmax.f32 %v664, 0.0
      %v701 = vmax.f32 %v667, 0.0
      %v702 = vpack.c.bf16 %v671, %v670
      %v703 = vpack.c.bf16 %v673, %v672
      %v704 = vpack.c.bf16 %v675, %v674
      %v705 = vpack.c.bf16 %v677, %v676
      %v706 = vpack.c.bf16 %v679, %v678
      %v707 = vpack.c.bf16 %v681, %v680
      %v708 = vpack.c.bf16 %v683, %v682
      %v709 = vpack.c.bf16 %v685, %v684
      %v710 = vpack.c.bf16 %v687, %v686
      %v711 = vpack.c.bf16 %v689, %v688
      %v712 = vpack.c.bf16 %v691, %v690
      %v713 = vpack.c.bf16 %v693, %v692
      %v714 = vpack.c.bf16 %v695, %v694
      %v715 = vpack.c.bf16 %v697, %v696
      %v716 = vpack.c.bf16 %v699, %v698
      %v717 = vpack.c.bf16 %v701, %v700
      %v718 = vld [vmem:[%s3] sm:$0xf]
      %v719 = vld [vmem:[%s3 + $0x4] sm:$0xf]
      %v720 = vld [vmem:[%s3 + $0x8] sm:$0xf]
      %v721 = vld [vmem:[%s3 + $0xc] sm:$0xf]
      %v722 = vld [vmem:[%s3 + $0x10] sm:$0xf]
      %v723 = vld [vmem:[%s3 + $0x14] sm:$0xf]
      %v724 = vld [vmem:[%s3 + $0x18] sm:$0xf]
      %v725 = vld [vmem:[%s3 + $0x1c] sm:$0xf]
      %v726 = vld [vmem:[%s3 + $0x20] sm:$0xf]
      %v727 = vld [vmem:[%s3 + $0x24] sm:$0xf]
      %v728 = vld [vmem:[%s3 + $0x28] sm:$0xf]
      %v729 = vld [vmem:[%s3 + $0x2c] sm:$0xf]
      %v730 = vld [vmem:[%s3 + $0x30] sm:$0xf]
      %v731 = vld [vmem:[%s3 + $0x34] sm:$0xf]
      %v732 = vld [vmem:[%s3 + $0x38] sm:$0xf]
      %v733 = vld [vmem:[%s3 + $0x3c] sm:$0xf]
      %v734 = vld [vmem:[%s4] sm:$0x1]
      %v736 = vlaneseq
      %v737 = vshrl.u32 %v736, 7
      %v738 = vsub.s32 0, %v737
      %v739 = vrot.slane %v734, %v738
      %v757 = vunpack.c.l.b16 %v718
      %v758 = vunpack.c.l.b16 %v719
      %v759 = vunpack.c.l.b16 %v720
      %v760 = vunpack.c.l.b16 %v721
      %v761 = vunpack.c.l.b16 %v722
      %v762 = vunpack.c.l.b16 %v723
      %v763 = vunpack.c.l.b16 %v724
      %v764 = vunpack.c.l.b16 %v725
      %v765 = vunpack.c.l.b16 %v726
      %v766 = vunpack.c.l.b16 %v727
      %v767 = vunpack.c.l.b16 %v728
      %v768 = vunpack.c.l.b16 %v729
      %v769 = vunpack.c.l.b16 %v730
      %v770 = vunpack.c.l.b16 %v731
      %v771 = vunpack.c.l.b16 %v732
      %v772 = vunpack.c.l.b16 %v733
      %v773 = vpack.c.b16 %v758, %v757
      %v774 = vpack.c.b16 %v760, %v759
      %v775 = vpack.c.b16 %v762, %v761
      %v776 = vpack.c.b16 %v764, %v763
      %v777 = vpack.c.b16 %v766, %v765
      %v778 = vpack.c.b16 %v768, %v767
      %v779 = vpack.c.b16 %v770, %v769
      %v780 = vpack.c.b16 %v772, %v771
      %789 = vmatprep.subr.bf16.mxu0 0
      %790 = vmatpush1.bf16.msra.mxu0 %v773
      %791 = vmatprep.subr.bf16.mxu0 0
      %792 = vmatpush1.bf16.msra.mxu0 %v774
      %793 = vmatprep.subr.bf16.mxu0 0
      %794 = vmatpush1.bf16.msra.mxu0 %v775
      %795 = vmatprep.subr.bf16.mxu0 0
      %796 = vmatpush1.bf16.msra.mxu0 %v776
      %797 = vmatprep.subr.bf16.mxu0 0
      %798 = vmatpush1.bf16.msra.mxu0 %v777
      %799 = vmatprep.subr.bf16.mxu0 0
      %800 = vmatpush1.bf16.msra.mxu0 %v778
      %801 = vmatprep.subr.bf16.mxu0 0
      %802 = vmatpush1.bf16.msra.mxu0 %v779
      %803 = vmatprep.subr.bf16.mxu0 0
      %804 = vmatpush1.bf16.msra.mxu0 %v780
      %805 = vmatprep.subr.bf16.mxu0 0
      %806 = vmatpush1.bf16.msra.mxu0 0
      %807 = vmatprep.subr.bf16.mxu0 0
      %808 = vmatpush1.bf16.msra.mxu0 0
      %809 = vmatprep.subr.bf16.mxu0 0
      %810 = vmatpush1.bf16.msra.mxu0 0
      %811 = vmatprep.subr.bf16.mxu0 0
      %812 = vmatpush1.bf16.msra.mxu0 0
      %813 = vmatprep.subr.bf16.mxu0 0
      %814 = vmatpush1.bf16.msra.mxu0 0
      %815 = vmatprep.subr.bf16.mxu0 0
      %816 = vmatpush1.bf16.msra.mxu0 0
      %817 = vmatprep.subr.bf16.mxu0 0
      %818 = vmatpush1.bf16.msra.mxu0 0
      %819 = vmatprep.subr.bf16.mxu0 0
      %820 = vmatpush1.bf16.msra.mxu0 0
      %821 = vmatprep.mubr.bf16.mxu0 0
      %822 = vmatmul.mubr.bf16.gmra.mrb[0].mxu0 %v702
      %v823 = vpop.f32.mrb[0].mxu0
      %v824 = vadd.f32 %v739, %v823
      %v825 = vpop.f32.mrb[0].mxu0
      %v826 = vpop.f32.mrb[0].mxu0
      %v827 = vadd.f32 %v739, %v826
      %v828 = vpop.f32.mrb[0].mxu0
      %829 = vmatprep.mubr.bf16.mxu0 0
      %830 = vmatmul.mubr.bf16.gmra.mrb[0].mxu0 %v703
      %v831 = vpop.f32.mrb[0].mxu0
      %v832 = vadd.f32 %v739, %v831
      %v833 = vpop.f32.mrb[0].mxu0
      %v834 = vpop.f32.mrb[0].mxu0
      %v835 = vadd.f32 %v739, %v834
      %v836 = vpop.f32.mrb[0].mxu0
      %837 = vmatprep.mubr.bf16.mxu0 0
      %838 = vmatmul.mubr.bf16.gmra.mrb[0].mxu0 %v704
      %v839 = vpop.f32.mrb[0].mxu0
      %v840 = vadd.f32 %v739, %v839
      %v841 = vpop.f32.mrb[0].mxu0
      %v842 = vpop.f32.mrb[0].mxu0
      %v843 = vadd.f32 %v739, %v842
      %v844 = vpop.f32.mrb[0].mxu0
      %845 = vmatprep.mubr.bf16.mxu0 0
      %846 = vmatmul.mubr.bf16.gmra.mrb[0].mxu0 %v705
      %v847 = vpop.f32.mrb[0].mxu0
      %v848 = vadd.f32 %v739, %v847
      %v849 = vpop.f32.mrb[0].mxu0
      %v850 = vpop.f32.mrb[0].mxu0
      %v851 = vadd.f32 %v739, %v850
      %v852 = vpop.f32.mrb[0].mxu0
      %853 = vmatprep.mubr.bf16.mxu0 0
      %854 = vmatmul.mubr.bf16.gmra.mrb[0].mxu0 %v706
      %v855 = vpop.f32.mrb[0].mxu0
      %v856 = vadd.f32 %v739, %v855
      %v857 = vpop.f32.mrb[0].mxu0
      %v858 = vpop.f32.mrb[0].mxu0
      %v859 = vadd.f32 %v739, %v858
      %v860 = vpop.f32.mrb[0].mxu0
      %861 = vmatprep.mubr.bf16.mxu0 0
      %862 = vmatmul.mubr.bf16.gmra.mrb[0].mxu0 %v707
      %v863 = vpop.f32.mrb[0].mxu0
      %v864 = vadd.f32 %v739, %v863
      %v865 = vpop.f32.mrb[0].mxu0
      %v866 = vpop.f32.mrb[0].mxu0
      %v867 = vadd.f32 %v739, %v866
      %v868 = vpop.f32.mrb[0].mxu0
      %869 = vmatprep.mubr.bf16.mxu0 0
      %870 = vmatmul.mubr.bf16.gmra.mrb[0].mxu0 %v708
      %v871 = vpop.f32.mrb[0].mxu0
      %v872 = vadd.f32 %v739, %v871
      %v873 = vpop.f32.mrb[0].mxu0
      %v874 = vpop.f32.mrb[0].mxu0
      %v875 = vadd.f32 %v739, %v874
      %v876 = vpop.f32.mrb[0].mxu0
      %877 = vmatprep.mubr.bf16.mxu0 0
      %878 = vmatmul.mubr.bf16.gmra.mrb[0].mxu0 %v709
      %v879 = vpop.f32.mrb[0].mxu0
      %v880 = vadd.f32 %v739, %v879
      %v881 = vpop.f32.mrb[0].mxu0
      %v882 = vpop.f32.mrb[0].mxu0
      %v883 = vadd.f32 %v739, %v882
      %v884 = vpop.f32.mrb[0].mxu0
      %885 = vmatprep.mubr.bf16.mxu0 0
      %886 = vmatmul.mubr.bf16.gmra.mrb[0].mxu0 %v710
      %v887 = vpop.f32.mrb[0].mxu0
      %v888 = vadd.f32 %v739, %v887
      %v889 = vpop.f32.mrb[0].mxu0
      %v890 = vpop.f32.mrb[0].mxu0
      %v891 = vadd.f32 %v739, %v890
      %v892 = vpop.f32.mrb[0].mxu0
      %893 = vmatprep.mubr.bf16.mxu0 0
      %894 = vmatmul.mubr.bf16.gmra.mrb[0].mxu0 %v711
      %v895 = vpop.f32.mrb[0].mxu0
      %v896 = vadd.f32 %v739, %v895
      %v897 = vpop.f32.mrb[0].mxu0
      %v898 = vpop.f32.mrb[0].mxu0
      %v899 = vadd.f32 %v739, %v898
      %v900 = vpop.f32.mrb[0].mxu0
      %901 = vmatprep.mubr.bf16.mxu0 0
      %902 = vmatmul.mubr.bf16.gmra.mrb[0].mxu0 %v712
      %v903 = vpop.f32.mrb[0].mxu0
      %v904 = vadd.f32 %v739, %v903
      %v905 = vpop.f32.mrb[0].mxu0
      %v906 = vpop.f32.mrb[0].mxu0
      %v907 = vadd.f32 %v739, %v906
      %v908 = vpop.f32.mrb[0].mxu0
      %909 = vmatprep.mubr.bf16.mxu0 0
      %910 = vmatmul.mubr.bf16.gmra.mrb[0].mxu0 %v713
      %v911 = vpop.f32.mrb[0].mxu0
      %v912 = vadd.f32 %v739, %v911
      %v913 = vpop.f32.mrb[0].mxu0
      %v914 = vpop.f32.mrb[0].mxu0
      %v915 = vadd.f32 %v739, %v914
      %v916 = vpop.f32.mrb[0].mxu0
      %917 = vmatprep.mubr.bf16.mxu0 0
      %918 = vmatmul.mubr.bf16.gmra.mrb[0].mxu0 %v714
      %v919 = vpop.f32.mrb[0].mxu0
      %v920 = vadd.f32 %v739, %v919
      %v921 = vpop.f32.mrb[0].mxu0
      %v922 = vpop.f32.mrb[0].mxu0
      %v923 = vadd.f32 %v739, %v922
      %v924 = vpop.f32.mrb[0].mxu0
      %925 = vmatprep.mubr.bf16.mxu0 0
      %926 = vmatmul.mubr.bf16.gmra.mrb[0].mxu0 %v715
      %v927 = vpop.f32.mrb[0].mxu0
      %v928 = vadd.f32 %v739, %v927
      %v929 = vpop.f32.mrb[0].mxu0
      %v930 = vpop.f32.mrb[0].mxu0
      %v931 = vadd.f32 %v739, %v930
      %v932 = vpop.f32.mrb[0].mxu0
      %933 = vmatprep.mubr.bf16.mxu0 0
      %934 = vmatmul.mubr.bf16.gmra.mrb[0].mxu0 %v716
      %v935 = vpop.f32.mrb[0].mxu0
      %v936 = vadd.f32 %v739, %v935
      %v937 = vpop.f32.mrb[0].mxu0
      %v938 = vpop.f32.mrb[0].mxu0
      %v939 = vadd.f32 %v739, %v938
      %v940 = vpop.f32.mrb[0].mxu0
      %941 = vmatprep.mubr.bf16.mxu0 0
      %942 = vmatmul.mubr.bf16.gmra.mrb[0].mxu0 %v717
      %v943 = vpop.f32.mrb[0].mxu0
      %v944 = vadd.f32 %v739, %v943
      %v945 = vpop.f32.mrb[0].mxu0
      %v946 = vpop.f32.mrb[0].mxu0
      %v947 = vadd.f32 %v739, %v946
      %v948 = vpop.f32.mrb[0].mxu0
      %949 = vdwg.mxu0
      %v950 = vmax.f32 %v824, 0.0
      %v951 = vmax.f32 %v827, 0.0
      %v952 = vmax.f32 %v832, 0.0
      %v953 = vmax.f32 %v835, 0.0
      %v954 = vmax.f32 %v840, 0.0
      %v955 = vmax.f32 %v843, 0.0
      %v956 = vmax.f32 %v848, 0.0
      %v957 = vmax.f32 %v851, 0.0
      %v958 = vmax.f32 %v856, 0.0
      %v959 = vmax.f32 %v859, 0.0
      %v960 = vmax.f32 %v864, 0.0
      %v961 = vmax.f32 %v867, 0.0
      %v962 = vmax.f32 %v872, 0.0
      %v963 = vmax.f32 %v875, 0.0
      %v964 = vmax.f32 %v880, 0.0
      %v965 = vmax.f32 %v883, 0.0
      %v966 = vmax.f32 %v888, 0.0
      %v967 = vmax.f32 %v891, 0.0
      %v968 = vmax.f32 %v896, 0.0
      %v969 = vmax.f32 %v899, 0.0
      %v970 = vmax.f32 %v904, 0.0
      %v971 = vmax.f32 %v907, 0.0
      %v972 = vmax.f32 %v912, 0.0
      %v973 = vmax.f32 %v915, 0.0
      %v974 = vmax.f32 %v920, 0.0
      %v975 = vmax.f32 %v923, 0.0
      %v976 = vmax.f32 %v928, 0.0
      %v977 = vmax.f32 %v931, 0.0
      %v978 = vmax.f32 %v936, 0.0
      %v979 = vmax.f32 %v939, 0.0
      %v980 = vmax.f32 %v944, 0.0
      %v981 = vmax.f32 %v947, 0.0
      %v982 = vpack.c.bf16 %v951, %v950
      %v983 = vpack.c.bf16 %v953, %v952
      %v984 = vpack.c.bf16 %v955, %v954
      %v985 = vpack.c.bf16 %v957, %v956
      %v986 = vpack.c.bf16 %v959, %v958
      %v987 = vpack.c.bf16 %v961, %v960
      %v988 = vpack.c.bf16 %v963, %v962
      %v989 = vpack.c.bf16 %v965, %v964
      %v990 = vpack.c.bf16 %v967, %v966
      %v991 = vpack.c.bf16 %v969, %v968
      %v992 = vpack.c.bf16 %v971, %v970
      %v993 = vpack.c.bf16 %v973, %v972
      %v994 = vpack.c.bf16 %v975, %v974
      %v995 = vpack.c.bf16 %v977, %v976
      %v996 = vpack.c.bf16 %v979, %v978
      %v997 = vpack.c.bf16 %v981, %v980
      %v998 = vld [vmem:[%s5] sm:$0xf]
      %v999 = vld [vmem:[%s5 + $0x4] sm:$0xf]
      %v1000 = vld [vmem:[%s5 + $0x8] sm:$0xf]
      %v1001 = vld [vmem:[%s5 + $0xc] sm:$0xf]
      %v1002 = vld [vmem:[%s5 + $0x10] sm:$0xf]
      %v1003 = vld [vmem:[%s5 + $0x14] sm:$0xf]
      %v1004 = vld [vmem:[%s5 + $0x18] sm:$0xf]
      %v1005 = vld [vmem:[%s5 + $0x1c] sm:$0xf]
      %v1006 = vld [vmem:[%s5 + $0x20] sm:$0xf]
      %v1007 = vld [vmem:[%s5 + $0x24] sm:$0xf]
      %v1008 = vld [vmem:[%s5 + $0x28] sm:$0xf]
      %v1009 = vld [vmem:[%s5 + $0x2c] sm:$0xf]
      %v1010 = vld [vmem:[%s5 + $0x30] sm:$0xf]
      %v1011 = vld [vmem:[%s5 + $0x34] sm:$0xf]
      %v1012 = vld [vmem:[%s5 + $0x38] sm:$0xf]
      %v1013 = vld [vmem:[%s5 + $0x3c] sm:$0xf]
      %v1014 = vld [vmem:[%s6] sm:$0xf]
      %v1015 = vld [vmem:[%s6 + $0x4] sm:$0xf]
      %v1016 = vld [vmem:[%s6 + $0x8] sm:$0xf]
      %v1017 = vld [vmem:[%s6 + $0xc] sm:$0xf]
      %v1018 = vld [vmem:[%s6 + $0x10] sm:$0xf]
      %v1019 = vld [vmem:[%s6 + $0x14] sm:$0xf]
      %v1020 = vld [vmem:[%s6 + $0x18] sm:$0xf]
      %v1021 = vld [vmem:[%s6 + $0x1c] sm:$0xf]
      %v1022 = vld [vmem:[%s6 + $0x20] sm:$0xf]
      %v1023 = vld [vmem:[%s6 + $0x24] sm:$0xf]
      %v1024 = vld [vmem:[%s6 + $0x28] sm:$0xf]
      %v1025 = vld [vmem:[%s6 + $0x2c] sm:$0xf]
      %v1026 = vld [vmem:[%s6 + $0x30] sm:$0xf]
      %v1027 = vld [vmem:[%s6 + $0x34] sm:$0xf]
      %v1028 = vld [vmem:[%s6 + $0x38] sm:$0xf]
      %v1029 = vld [vmem:[%s6 + $0x3c] sm:$0xf]
      %v1046 = vunpack.c.l.b16 %v1014
      %v1047 = vunpack.c.l.b16 %v1015
      %v1048 = vunpack.c.l.b16 %v1016
      %v1049 = vunpack.c.l.b16 %v1017
      %v1050 = vunpack.c.l.b16 %v1018
      %v1051 = vunpack.c.l.b16 %v1019
      %v1052 = vunpack.c.l.b16 %v1020
      %v1053 = vunpack.c.l.b16 %v1021
      %v1054 = vunpack.c.l.b16 %v1022
      %v1055 = vunpack.c.l.b16 %v1023
      %v1056 = vunpack.c.l.b16 %v1024
      %v1057 = vunpack.c.l.b16 %v1025
      %v1058 = vunpack.c.l.b16 %v1026
      %v1059 = vunpack.c.l.b16 %v1027
      %v1060 = vunpack.c.l.b16 %v1028
      %v1061 = vunpack.c.l.b16 %v1029
      %v1062 = vpack.c.b16 %v1047, %v1046
      %v1063 = vpack.c.b16 %v1049, %v1048
      %v1064 = vpack.c.b16 %v1051, %v1050
      %v1065 = vpack.c.b16 %v1053, %v1052
      %v1066 = vpack.c.b16 %v1055, %v1054
      %v1067 = vpack.c.b16 %v1057, %v1056
      %v1068 = vpack.c.b16 %v1059, %v1058
      %v1069 = vpack.c.b16 %v1061, %v1060
      %1078 = vmatprep.subr.bf16.mxu0 0
      %1079 = vmatpush1.bf16.msra.mxu0 %v1062
      %1080 = vmatprep.subr.bf16.mxu0 0
      %1081 = vmatpush1.bf16.msra.mxu0 %v1063
      %1082 = vmatprep.subr.bf16.mxu0 0
      %1083 = vmatpush1.bf16.msra.mxu0 %v1064
      %1084 = vmatprep.subr.bf16.mxu0 0
      %1085 = vmatpush1.bf16.msra.mxu0 %v1065
      %1086 = vmatprep.subr.bf16.mxu0 0
      %1087 = vmatpush1.bf16.msra.mxu0 %v1066
      %1088 = vmatprep.subr.bf16.mxu0 0
      %1089 = vmatpush1.bf16.msra.mxu0 %v1067
      %1090 = vmatprep.subr.bf16.mxu0 0
      %1091 = vmatpush1.bf16.msra.mxu0 %v1068
      %1092 = vmatprep.subr.bf16.mxu0 0
      %1093 = vmatpush1.bf16.msra.mxu0 %v1069
      %1094 = vmatprep.subr.bf16.mxu0 0
      %1095 = vmatpush1.bf16.msra.mxu0 0
      %1096 = vmatprep.subr.bf16.mxu0 0
      %1097 = vmatpush1.bf16.msra.mxu0 0
      %1098 = vmatprep.subr.bf16.mxu0 0
      %1099 = vmatpush1.bf16.msra.mxu0 0
      %1100 = vmatprep.subr.bf16.mxu0 0
      %1101 = vmatpush1.bf16.msra.mxu0 0
      %1102 = vmatprep.subr.bf16.mxu0 0
      %1103 = vmatpush1.bf16.msra.mxu0 0
      %1104 = vmatprep.subr.bf16.mxu0 0
      %1105 = vmatpush1.bf16.msra.mxu0 0
      %1106 = vmatprep.subr.bf16.mxu0 0
      %1107 = vmatpush1.bf16.msra.mxu0 0
      %1108 = vmatprep.subr.bf16.mxu0 0
      %1109 = vmatpush1.bf16.msra.mxu0 0
      %1110 = vmatprep.mubr.bf16.mxu0 0
      %1111 = vmatmul.mubr.bf16.gmra.mrb[0].mxu0 %v429
      %v1112 = vpop.f32.mrb[0].mxu0
      %v1113 = vadd.f32 0.0, %v1112
      %v1114 = vpop.f32.mrb[0].mxu0
      %v1115 = vpop.f32.mrb[0].mxu0
      %v1116 = vadd.f32 0.0, %v1115
      %v1117 = vpop.f32.mrb[0].mxu0
      %1118 = vmatprep.mubr.bf16.mxu0 0
      %1119 = vmatmul.mubr.bf16.gmra.mrb[0].mxu0 %v430
      %v1120 = vpop.f32.mrb[0].mxu0
      %v1121 = vadd.f32 0.0, %v1120
      %v1122 = vpop.f32.mrb[0].mxu0
      %v1123 = vpop.f32.mrb[0].mxu0
      %v1124 = vadd.f32 0.0, %v1123
      %v1125 = vpop.f32.mrb[0].mxu0
      %1126 = vmatprep.mubr.bf16.mxu0 0
      %1127 = vmatmul.mubr.bf16.gmra.mrb[0].mxu0 %v431
      %v1128 = vpop.f32.mrb[0].mxu0
      %v1129 = vadd.f32 0.0, %v1128
      %v1130 = vpop.f32.mrb[0].mxu0
      %v1131 = vpop.f32.mrb[0].mxu0
      %v1132 = vadd.f32 0.0, %v1131
      %v1133 = vpop.f32.mrb[0].mxu0
      %1134 = vmatprep.mubr.bf16.mxu0 0
      %1135 = vmatmul.mubr.bf16.gmra.mrb[0].mxu0 %v432
      %v1136 = vpop.f32.mrb[0].mxu0
      %v1137 = vadd.f32 0.0, %v1136
      %v1138 = vpop.f32.mrb[0].mxu0
      %v1139 = vpop.f32.mrb[0].mxu0
      %v1140 = vadd.f32 0.0, %v1139
      %v1141 = vpop.f32.mrb[0].mxu0
      %1142 = vmatprep.mubr.bf16.mxu0 0
      %1143 = vmatmul.mubr.bf16.gmra.mrb[0].mxu0 %v433
      %v1144 = vpop.f32.mrb[0].mxu0
      %v1145 = vadd.f32 0.0, %v1144
      %v1146 = vpop.f32.mrb[0].mxu0
      %v1147 = vpop.f32.mrb[0].mxu0
      %v1148 = vadd.f32 0.0, %v1147
      %v1149 = vpop.f32.mrb[0].mxu0
      %1150 = vmatprep.mubr.bf16.mxu0 0
      %1151 = vmatmul.mubr.bf16.gmra.mrb[0].mxu0 %v434
      %v1152 = vpop.f32.mrb[0].mxu0
      %v1153 = vadd.f32 0.0, %v1152
      %v1154 = vpop.f32.mrb[0].mxu0
      %v1155 = vpop.f32.mrb[0].mxu0
      %v1156 = vadd.f32 0.0, %v1155
      %v1157 = vpop.f32.mrb[0].mxu0
      %1158 = vmatprep.mubr.bf16.mxu0 0
      %1159 = vmatmul.mubr.bf16.gmra.mrb[0].mxu0 %v435
      %v1160 = vpop.f32.mrb[0].mxu0
      %v1161 = vadd.f32 0.0, %v1160
      %v1162 = vpop.f32.mrb[0].mxu0
      %v1163 = vpop.f32.mrb[0].mxu0
      %v1164 = vadd.f32 0.0, %v1163
      %v1165 = vpop.f32.mrb[0].mxu0
      %1166 = vmatprep.mubr.bf16.mxu0 0
      %1167 = vmatmul.mubr.bf16.gmra.mrb[0].mxu0 %v436
      %v1168 = vpop.f32.mrb[0].mxu0
      %v1169 = vadd.f32 0.0, %v1168
      %v1170 = vpop.f32.mrb[0].mxu0
      %v1171 = vpop.f32.mrb[0].mxu0
      %v1172 = vadd.f32 0.0, %v1171
      %v1173 = vpop.f32.mrb[0].mxu0
      %1174 = vmatprep.mubr.bf16.mxu0 0
      %1175 = vmatmul.mubr.bf16.gmra.mrb[0].mxu0 %v437
      %v1176 = vpop.f32.mrb[0].mxu0
      %v1177 = vadd.f32 0.0, %v1176
      %v1178 = vpop.f32.mrb[0].mxu0
      %v1179 = vpop.f32.mrb[0].mxu0
      %v1180 = vadd.f32 0.0, %v1179
      %v1181 = vpop.f32.mrb[0].mxu0
      %1182 = vmatprep.mubr.bf16.mxu0 0
      %1183 = vmatmul.mubr.bf16.gmra.mrb[0].mxu0 %v438
      %v1184 = vpop.f32.mrb[0].mxu0
      %v1185 = vadd.f32 0.0, %v1184
      %v1186 = vpop.f32.mrb[0].mxu0
      %v1187 = vpop.f32.mrb[0].mxu0
      %v1188 = vadd.f32 0.0, %v1187
      %v1189 = vpop.f32.mrb[0].mxu0
      %1190 = vmatprep.mubr.bf16.mxu0 0
      %1191 = vmatmul.mubr.bf16.gmra.mrb[0].mxu0 %v439
      %v1192 = vpop.f32.mrb[0].mxu0
      %v1193 = vadd.f32 0.0, %v1192
      %v1194 = vpop.f32.mrb[0].mxu0
      %v1195 = vpop.f32.mrb[0].mxu0
      %v1196 = vadd.f32 0.0, %v1195
      %v1197 = vpop.f32.mrb[0].mxu0
      %1198 = vmatprep.mubr.bf16.mxu0 0
      %1199 = vmatmul.mubr.bf16.gmra.mrb[0].mxu0 %v440
      %v1200 = vpop.f32.mrb[0].mxu0
      %v1201 = vadd.f32 0.0, %v1200
      %v1202 = vpop.f32.mrb[0].mxu0
      %v1203 = vpop.f32.mrb[0].mxu0
      %v1204 = vadd.f32 0.0, %v1203
      %v1205 = vpop.f32.mrb[0].mxu0
      %1206 = vmatprep.mubr.bf16.mxu0 0
      %1207 = vmatmul.mubr.bf16.gmra.mrb[0].mxu0 %v441
      %v1208 = vpop.f32.mrb[0].mxu0
      %v1209 = vadd.f32 0.0, %v1208
      %v1210 = vpop.f32.mrb[0].mxu0
      %v1211 = vpop.f32.mrb[0].mxu0
      %v1212 = vadd.f32 0.0, %v1211
      %v1213 = vpop.f32.mrb[0].mxu0
      %1214 = vmatprep.mubr.bf16.mxu0 0
      %1215 = vmatmul.mubr.bf16.gmra.mrb[0].mxu0 %v442
      %v1216 = vpop.f32.mrb[0].mxu0
      %v1217 = vadd.f32 0.0, %v1216
      %v1218 = vpop.f32.mrb[0].mxu0
      %v1219 = vpop.f32.mrb[0].mxu0
      %v1220 = vadd.f32 0.0, %v1219
      %v1221 = vpop.f32.mrb[0].mxu0
      %1222 = vmatprep.mubr.bf16.mxu0 0
      %1223 = vmatmul.mubr.bf16.gmra.mrb[0].mxu0 %v443
      %v1224 = vpop.f32.mrb[0].mxu0
      %v1225 = vadd.f32 0.0, %v1224
      %v1226 = vpop.f32.mrb[0].mxu0
      %v1227 = vpop.f32.mrb[0].mxu0
      %v1228 = vadd.f32 0.0, %v1227
      %v1229 = vpop.f32.mrb[0].mxu0
      %1230 = vmatprep.mubr.bf16.mxu0 0
      %1231 = vmatmul.mubr.bf16.gmra.mrb[0].mxu0 %v444
      %v1232 = vpop.f32.mrb[0].mxu0
      %v1233 = vadd.f32 0.0, %v1232
      %v1234 = vpop.f32.mrb[0].mxu0
      %v1235 = vpop.f32.mrb[0].mxu0
      %v1236 = vadd.f32 0.0, %v1235
      %v1237 = vpop.f32.mrb[0].mxu0
      %1238 = vdwg.mxu0
      %v1255 = vunpack.c.l.b16 %v998
      %v1256 = vunpack.c.l.b16 %v999
      %v1257 = vunpack.c.l.b16 %v1000
      %v1258 = vunpack.c.l.b16 %v1001
      %v1259 = vunpack.c.l.b16 %v1002
      %v1260 = vunpack.c.l.b16 %v1003
      %v1261 = vunpack.c.l.b16 %v1004
      %v1262 = vunpack.c.l.b16 %v1005
      %v1263 = vunpack.c.l.b16 %v1006
      %v1264 = vunpack.c.l.b16 %v1007
      %v1265 = vunpack.c.l.b16 %v1008
      %v1266 = vunpack.c.l.b16 %v1009
      %v1267 = vunpack.c.l.b16 %v1010
      %v1268 = vunpack.c.l.b16 %v1011
      %v1269 = vunpack.c.l.b16 %v1012
      %v1270 = vunpack.c.l.b16 %v1013
      %v1271 = vpack.c.b16 %v1256, %v1255
      %v1272 = vpack.c.b16 %v1258, %v1257
      %v1273 = vpack.c.b16 %v1260, %v1259
      %v1274 = vpack.c.b16 %v1262, %v1261
      %v1275 = vpack.c.b16 %v1264, %v1263
      %v1276 = vpack.c.b16 %v1266, %v1265
      %v1277 = vpack.c.b16 %v1268, %v1267
      %v1278 = vpack.c.b16 %v1270, %v1269
      %1287 = vmatprep.subr.bf16.mxu0 0
      %1288 = vmatpush1.bf16.msra.mxu0 %v1271
      %1289 = vmatprep.subr.bf16.mxu0 0
      %1290 = vmatpush1.bf16.msra.mxu0 %v1272
      %1291 = vmatprep.subr.bf16.mxu0 0
      %1292 = vmatpush1.bf16.msra.mxu0 %v1273
      %1293 = vmatprep.subr.bf16.mxu0 0
      %1294 = vmatpush1.bf16.msra.mxu0 %v1274
      %1295 = vmatprep.subr.bf16.mxu0 0
      %1296 = vmatpush1.bf16.msra.mxu0 %v1275
      %1297 = vmatprep.subr.bf16.mxu0 0
      %1298 = vmatpush1.bf16.msra.mxu0 %v1276
      %1299 = vmatprep.subr.bf16.mxu0 0
      %1300 = vmatpush1.bf16.msra.mxu0 %v1277
      %1301 = vmatprep.subr.bf16.mxu0 0
      %1302 = vmatpush1.bf16.msra.mxu0 %v1278
      %1303 = vmatprep.subr.bf16.mxu0 0
      %1304 = vmatpush1.bf16.msra.mxu0 0
      %1305 = vmatprep.subr.bf16.mxu0 0
      %1306 = vmatpush1.bf16.msra.mxu0 0
      %1307 = vmatprep.subr.bf16.mxu0 0
      %1308 = vmatpush1.bf16.msra.mxu0 0
      %1309 = vmatprep.subr.bf16.mxu0 0
      %1310 = vmatpush1.bf16.msra.mxu0 0
      %1311 = vmatprep.subr.bf16.mxu0 0
      %1312 = vmatpush1.bf16.msra.mxu0 0
      %1313 = vmatprep.subr.bf16.mxu0 0
      %1314 = vmatpush1.bf16.msra.mxu0 0
      %1315 = vmatprep.subr.bf16.mxu0 0
      %1316 = vmatpush1.bf16.msra.mxu0 0
      %1317 = vmatprep.subr.bf16.mxu0 0
      %1318 = vmatpush1.bf16.msra.mxu0 0
      %1319 = vmatprep.mubr.bf16.mxu0 0
      %1320 = vmatmul.mubr.bf16.gmra.mrb[0].mxu0 %v982
      %v1321 = vpop.f32.mrb[0].mxu0
      %v1322 = vadd.f32 %v1113, %v1321
      %v1323 = vpop.f32.mrb[0].mxu0
      %v1324 = vpop.f32.mrb[0].mxu0
      %v1325 = vadd.f32 %v1116, %v1324
      %v1326 = vpop.f32.mrb[0].mxu0
      %1327 = vmatprep.mubr.bf16.mxu0 0
      %1328 = vmatmul.mubr.bf16.gmra.mrb[0].mxu0 %v983
      %v1329 = vpop.f32.mrb[0].mxu0
      %v1330 = vadd.f32 %v1121, %v1329
      %v1331 = vpop.f32.mrb[0].mxu0
      %v1332 = vpop.f32.mrb[0].mxu0
      %v1333 = vadd.f32 %v1124, %v1332
      %v1334 = vpop.f32.mrb[0].mxu0
      %1335 = vmatprep.mubr.bf16.mxu0 0
      %1336 = vmatmul.mubr.bf16.gmra.mrb[0].mxu0 %v984
      %v1337 = vpop.f32.mrb[0].mxu0
      %v1338 = vadd.f32 %v1129, %v1337
      %v1339 = vpop.f32.mrb[0].mxu0
      %v1340 = vpop.f32.mrb[0].mxu0
      %v1341 = vadd.f32 %v1132, %v1340
      %v1342 = vpop.f32.mrb[0].mxu0
      %1343 = vmatprep.mubr.bf16.mxu0 0
      %1344 = vmatmul.mubr.bf16.gmra.mrb[0].mxu0 %v985
      %v1345 = vpop.f32.mrb[0].mxu0
      %v1346 = vadd.f32 %v1137, %v1345
      %v1347 = vpop.f32.mrb[0].mxu0
      %v1348 = vpop.f32.mrb[0].mxu0
      %v1349 = vadd.f32 %v1140, %v1348
      %v1350 = vpop.f32.mrb[0].mxu0
      %1351 = vmatprep.mubr.bf16.mxu0 0
      %1352 = vmatmul.mubr.bf16.gmra.mrb[0].mxu0 %v986
      %v1353 = vpop.f32.mrb[0].mxu0
      %v1354 = vadd.f32 %v1145, %v1353
      %v1355 = vpop.f32.mrb[0].mxu0
      %v1356 = vpop.f32.mrb[0].mxu0
      %v1357 = vadd.f32 %v1148, %v1356
      %v1358 = vpop.f32.mrb[0].mxu0
      %1359 = vmatprep.mubr.bf16.mxu0 0
      %1360 = vmatmul.mubr.bf16.gmra.mrb[0].mxu0 %v987
      %v1361 = vpop.f32.mrb[0].mxu0
      %v1362 = vadd.f32 %v1153, %v1361
      %v1363 = vpop.f32.mrb[0].mxu0
      %v1364 = vpop.f32.mrb[0].mxu0
      %v1365 = vadd.f32 %v1156, %v1364
      %v1366 = vpop.f32.mrb[0].mxu0
      %1367 = vmatprep.mubr.bf16.mxu0 0
      %1368 = vmatmul.mubr.bf16.gmra.mrb[0].mxu0 %v988
      %v1369 = vpop.f32.mrb[0].mxu0
      %v1370 = vadd.f32 %v1161, %v1369
      %v1371 = vpop.f32.mrb[0].mxu0
      %v1372 = vpop.f32.mrb[0].mxu0
      %v1373 = vadd.f32 %v1164, %v1372
      %v1374 = vpop.f32.mrb[0].mxu0
      %1375 = vmatprep.mubr.bf16.mxu0 0
      %1376 = vmatmul.mubr.bf16.gmra.mrb[0].mxu0 %v989
      %v1377 = vpop.f32.mrb[0].mxu0
      %v1378 = vadd.f32 %v1169, %v1377
      %v1379 = vpop.f32.mrb[0].mxu0
      %v1380 = vpop.f32.mrb[0].mxu0
      %v1381 = vadd.f32 %v1172, %v1380
      %v1382 = vpop.f32.mrb[0].mxu0
      %1383 = vmatprep.mubr.bf16.mxu0 0
      %1384 = vmatmul.mubr.bf16.gmra.mrb[0].mxu0 %v990
      %v1385 = vpop.f32.mrb[0].mxu0
      %v1386 = vadd.f32 %v1177, %v1385
      %v1387 = vpop.f32.mrb[0].mxu0
      %v1388 = vpop.f32.mrb[0].mxu0
      %v1389 = vadd.f32 %v1180, %v1388
      %v1390 = vpop.f32.mrb[0].mxu0
      %1391 = vmatprep.mubr.bf16.mxu0 0
      %1392 = vmatmul.mubr.bf16.gmra.mrb[0].mxu0 %v991
      %v1393 = vpop.f32.mrb[0].mxu0
      %v1394 = vadd.f32 %v1185, %v1393
      %v1395 = vpop.f32.mrb[0].mxu0
      %v1396 = vpop.f32.mrb[0].mxu0
      %v1397 = vadd.f32 %v1188, %v1396
      %v1398 = vpop.f32.mrb[0].mxu0
      %1399 = vmatprep.mubr.bf16.mxu0 0
      %1400 = vmatmul.mubr.bf16.gmra.mrb[0].mxu0 %v992
      %v1401 = vpop.f32.mrb[0].mxu0
      %v1402 = vadd.f32 %v1193, %v1401
      %v1403 = vpop.f32.mrb[0].mxu0
      %v1404 = vpop.f32.mrb[0].mxu0
      %v1405 = vadd.f32 %v1196, %v1404
      %v1406 = vpop.f32.mrb[0].mxu0
      %1407 = vmatprep.mubr.bf16.mxu0 0
      %1408 = vmatmul.mubr.bf16.gmra.mrb[0].mxu0 %v993
      %v1409 = vpop.f32.mrb[0].mxu0
      %v1410 = vadd.f32 %v1201, %v1409
      %v1411 = vpop.f32.mrb[0].mxu0
      %v1412 = vpop.f32.mrb[0].mxu0
      %v1413 = vadd.f32 %v1204, %v1412
      %v1414 = vpop.f32.mrb[0].mxu0
      %1415 = vmatprep.mubr.bf16.mxu0 0
      %1416 = vmatmul.mubr.bf16.gmra.mrb[0].mxu0 %v994
      %v1417 = vpop.f32.mrb[0].mxu0
      %v1418 = vadd.f32 %v1209, %v1417
      %v1419 = vpop.f32.mrb[0].mxu0
      %v1420 = vpop.f32.mrb[0].mxu0
      %v1421 = vadd.f32 %v1212, %v1420
      %v1422 = vpop.f32.mrb[0].mxu0
      %1423 = vmatprep.mubr.bf16.mxu0 0
      %1424 = vmatmul.mubr.bf16.gmra.mrb[0].mxu0 %v995
      %v1425 = vpop.f32.mrb[0].mxu0
      %v1426 = vadd.f32 %v1217, %v1425
      %v1427 = vpop.f32.mrb[0].mxu0
      %v1428 = vpop.f32.mrb[0].mxu0
      %v1429 = vadd.f32 %v1220, %v1428
      %v1430 = vpop.f32.mrb[0].mxu0
      %1431 = vmatprep.mubr.bf16.mxu0 0
      %1432 = vmatmul.mubr.bf16.gmra.mrb[0].mxu0 %v996
      %v1433 = vpop.f32.mrb[0].mxu0
      %v1434 = vadd.f32 %v1225, %v1433
      %v1435 = vpop.f32.mrb[0].mxu0
      %v1436 = vpop.f32.mrb[0].mxu0
      %v1437 = vadd.f32 %v1228, %v1436
      %v1438 = vpop.f32.mrb[0].mxu0
      %1439 = vmatprep.mubr.bf16.mxu0 0
      %1440 = vmatmul.mubr.bf16.gmra.mrb[0].mxu0 %v997
      %v1441 = vpop.f32.mrb[0].mxu0
      %v1442 = vadd.f32 %v1233, %v1441
      %v1443 = vpop.f32.mrb[0].mxu0
      %v1444 = vpop.f32.mrb[0].mxu0
      %v1445 = vadd.f32 %v1236, %v1444
      %v1446 = vpop.f32.mrb[0].mxu0
      %1447 = vdwg.mxu0
      %v1448 = vld [vmem:[%s7] sm:$0x1]
      %v1450 = vlaneseq
      %v1451 = vshrl.u32 %v1450, 7
      %v1452 = vsub.s32 0, %v1451
      %v1453 = vrot.slane %v1448, %v1452
      %v1455 = vadd.f32 %v1322, %v1453
      %v1456 = vadd.f32 %v1325, %v1453
      %v1457 = vadd.f32 %v1330, %v1453
      %v1458 = vadd.f32 %v1333, %v1453
      %v1459 = vadd.f32 %v1338, %v1453
      %v1460 = vadd.f32 %v1341, %v1453
      %v1461 = vadd.f32 %v1346, %v1453
      %v1462 = vadd.f32 %v1349, %v1453
      %v1463 = vadd.f32 %v1354, %v1453
      %v1464 = vadd.f32 %v1357, %v1453
      %v1465 = vadd.f32 %v1362, %v1453
      %v1466 = vadd.f32 %v1365, %v1453
      %v1467 = vadd.f32 %v1370, %v1453
      %v1468 = vadd.f32 %v1373, %v1453
      %v1469 = vadd.f32 %v1378, %v1453
      %v1470 = vadd.f32 %v1381, %v1453
      %v1471 = vadd.f32 %v1386, %v1453
      %v1472 = vadd.f32 %v1389, %v1453
      %v1473 = vadd.f32 %v1394, %v1453
      %v1474 = vadd.f32 %v1397, %v1453
      %v1475 = vadd.f32 %v1402, %v1453
      %v1476 = vadd.f32 %v1405, %v1453
      %v1477 = vadd.f32 %v1410, %v1453
      %v1478 = vadd.f32 %v1413, %v1453
      %v1479 = vadd.f32 %v1418, %v1453
      %v1480 = vadd.f32 %v1421, %v1453
      %v1481 = vadd.f32 %v1426, %v1453
      %v1482 = vadd.f32 %v1429, %v1453
      %v1483 = vadd.f32 %v1434, %v1453
      %v1484 = vadd.f32 %v1437, %v1453
      %v1485 = vadd.f32 %v1442, %v1453
      %v1486 = vadd.f32 %v1445, %v1453
      %v1487 = vmax.f32 %v1455, 0.0
      %v1488 = vmax.f32 %v1456, 0.0
      %v1489 = vmax.f32 %v1457, 0.0
      %v1490 = vmax.f32 %v1458, 0.0
      %v1491 = vmax.f32 %v1459, 0.0
      %v1492 = vmax.f32 %v1460, 0.0
      %v1493 = vmax.f32 %v1461, 0.0
      %v1494 = vmax.f32 %v1462, 0.0
      %v1495 = vmax.f32 %v1463, 0.0
      %v1496 = vmax.f32 %v1464, 0.0
      %v1497 = vmax.f32 %v1465, 0.0
      %v1498 = vmax.f32 %v1466, 0.0
      %v1499 = vmax.f32 %v1467, 0.0
      %v1500 = vmax.f32 %v1468, 0.0
      %v1501 = vmax.f32 %v1469, 0.0
      %v1502 = vmax.f32 %v1470, 0.0
      %v1503 = vmax.f32 %v1471, 0.0
      %v1504 = vmax.f32 %v1472, 0.0
      %v1505 = vmax.f32 %v1473, 0.0
      %v1506 = vmax.f32 %v1474, 0.0
      %v1507 = vmax.f32 %v1475, 0.0
      %v1508 = vmax.f32 %v1476, 0.0
      %v1509 = vmax.f32 %v1477, 0.0
      %v1510 = vmax.f32 %v1478, 0.0
      %v1511 = vmax.f32 %v1479, 0.0
      %v1512 = vmax.f32 %v1480, 0.0
      %v1513 = vmax.f32 %v1481, 0.0
      %v1514 = vmax.f32 %v1482, 0.0
      %v1515 = vmax.f32 %v1483, 0.0
      %v1516 = vmax.f32 %v1484, 0.0
      %v1517 = vmax.f32 %v1485, 0.0
      %v1518 = vmax.f32 %v1486, 0.0
      %v1519 = vpack.c.bf16 %v1488, %v1487
      %v1520 = vpack.c.bf16 %v1490, %v1489
      %v1521 = vpack.c.bf16 %v1492, %v1491
      %v1522 = vpack.c.bf16 %v1494, %v1493
      %v1523 = vpack.c.bf16 %v1496, %v1495
      %v1524 = vpack.c.bf16 %v1498, %v1497
      %v1525 = vpack.c.bf16 %v1500, %v1499
      %v1526 = vpack.c.bf16 %v1502, %v1501
      %v1527 = vpack.c.bf16 %v1504, %v1503
      %v1528 = vpack.c.bf16 %v1506, %v1505
      %v1529 = vpack.c.bf16 %v1508, %v1507
      %v1530 = vpack.c.bf16 %v1510, %v1509
      %v1531 = vpack.c.bf16 %v1512, %v1511
      %v1532 = vpack.c.bf16 %v1514, %v1513
      %v1533 = vpack.c.bf16 %v1516, %v1515
      %v1534 = vpack.c.bf16 %v1518, %v1517
      %v1551 = vunpack.c.l.b16 %v1519
      %v1552 = vunpack.c.h.b16 %v1519
      %v1553 = vunpack.c.l.b16 %v1520
      %v1554 = vunpack.c.h.b16 %v1520
      %v1555 = vunpack.c.l.b16 %v1521
      %v1556 = vunpack.c.h.b16 %v1521
      %v1557 = vunpack.c.l.b16 %v1522
      %v1558 = vunpack.c.h.b16 %v1522
      %v1559 = vunpack.c.l.b16 %v1523
      %v1560 = vunpack.c.h.b16 %v1523
      %v1561 = vunpack.c.l.b16 %v1524
      %v1562 = vunpack.c.h.b16 %v1524
      %v1563 = vunpack.c.l.b16 %v1525
      %v1564 = vunpack.c.h.b16 %v1525
      %v1565 = vunpack.c.l.b16 %v1526
      %v1566 = vunpack.c.h.b16 %v1526
      %v1567 = vunpack.c.l.b16 %v1527
      %v1568 = vunpack.c.h.b16 %v1527
      %v1569 = vunpack.c.l.b16 %v1528
      %v1570 = vunpack.c.h.b16 %v1528
      %v1571 = vunpack.c.l.b16 %v1529
      %v1572 = vunpack.c.h.b16 %v1529
      %v1573 = vunpack.c.l.b16 %v1530
      %v1574 = vunpack.c.h.b16 %v1530
      %v1575 = vunpack.c.l.b16 %v1531
      %v1576 = vunpack.c.h.b16 %v1531
      %v1577 = vunpack.c.l.b16 %v1532
      %v1578 = vunpack.c.h.b16 %v1532
      %v1579 = vunpack.c.l.b16 %v1533
      %v1580 = vunpack.c.h.b16 %v1533
      %v1581 = vunpack.c.l.b16 %v1534
      %v1582 = vunpack.c.h.b16 %v1534
      %v1583 = vpack.c.b16 %v1551, %v1551
      %v1584 = vpack.c.b16 %v1552, %v1552
      %v1585 = vpack.c.b16 %v1553, %v1553
      %v1586 = vpack.c.b16 %v1554, %v1554
      %v1587 = vpack.c.b16 %v1555, %v1555
      %v1588 = vpack.c.b16 %v1556, %v1556
      %v1589 = vpack.c.b16 %v1557, %v1557
      %v1590 = vpack.c.b16 %v1558, %v1558
      %v1591 = vpack.c.b16 %v1559, %v1559
      %v1592 = vpack.c.b16 %v1560, %v1560
      %v1593 = vpack.c.b16 %v1561, %v1561
      %v1594 = vpack.c.b16 %v1562, %v1562
      %v1595 = vpack.c.b16 %v1563, %v1563
      %v1596 = vpack.c.b16 %v1564, %v1564
      %v1597 = vpack.c.b16 %v1565, %v1565
      %v1598 = vpack.c.b16 %v1566, %v1566
      %v1599 = vpack.c.b16 %v1567, %v1567
      %v1600 = vpack.c.b16 %v1568, %v1568
      %v1601 = vpack.c.b16 %v1569, %v1569
      %v1602 = vpack.c.b16 %v1570, %v1570
      %v1603 = vpack.c.b16 %v1571, %v1571
      %v1604 = vpack.c.b16 %v1572, %v1572
      %v1605 = vpack.c.b16 %v1573, %v1573
      %v1606 = vpack.c.b16 %v1574, %v1574
      %v1607 = vpack.c.b16 %v1575, %v1575
      %v1608 = vpack.c.b16 %v1576, %v1576
      %v1609 = vpack.c.b16 %v1577, %v1577
      %v1610 = vpack.c.b16 %v1578, %v1578
      %v1611 = vpack.c.b16 %v1579, %v1579
      %v1612 = vpack.c.b16 %v1580, %v1580
      %v1613 = vpack.c.b16 %v1581, %v1581
      %v1614 = vpack.c.b16 %v1582, %v1582
      %1647 = vst [vmem:[%s307] sm:$0xf] %v1583
      %1648 = vst [vmem:[%s307 + $0x4] sm:$0xf] %v1584
      %1649 = vst [vmem:[%s307 + $0x8] sm:$0xf] %v1585
      %1650 = vst [vmem:[%s307 + $0xc] sm:$0xf] %v1586
      %1651 = vst [vmem:[%s307 + $0x10] sm:$0xf] %v1587
      %1652 = vst [vmem:[%s307 + $0x14] sm:$0xf] %v1588
      %1653 = vst [vmem:[%s307 + $0x18] sm:$0xf] %v1589
      %1654 = vst [vmem:[%s307 + $0x1c] sm:$0xf] %v1590
      %1655 = vst [vmem:[%s307 + $0x20] sm:$0xf] %v1591
      %1656 = vst [vmem:[%s307 + $0x24] sm:$0xf] %v1592
      %1657 = vst [vmem:[%s307 + $0x28] sm:$0xf] %v1593
      %1658 = vst [vmem:[%s307 + $0x2c] sm:$0xf] %v1594
      %1659 = vst [vmem:[%s307 + $0x30] sm:$0xf] %v1595
      %1660 = vst [vmem:[%s307 + $0x34] sm:$0xf] %v1596
      %1661 = vst [vmem:[%s307 + $0x38] sm:$0xf] %v1597
      %1662 = vst [vmem:[%s307 + $0x3c] sm:$0xf] %v1598
      %1663 = vst [vmem:[%s307 + $0x40] sm:$0xf] %v1599
      %1664 = vst [vmem:[%s307 + $0x44] sm:$0xf] %v1600
      %1665 = vst [vmem:[%s307 + $0x48] sm:$0xf] %v1601
      %1666 = vst [vmem:[%s307 + $0x4c] sm:$0xf] %v1602
      %1667 = vst [vmem:[%s307 + $0x50] sm:$0xf] %v1603
      %1668 = vst [vmem:[%s307 + $0x54] sm:$0xf] %v1604
      %1669 = vst [vmem:[%s307 + $0x58] sm:$0xf] %v1605
      %1670 = vst [vmem:[%s307 + $0x5c] sm:$0xf] %v1606
      %1671 = vst [vmem:[%s307 + $0x60] sm:$0xf] %v1607
      %1672 = vst [vmem:[%s307 + $0x64] sm:$0xf] %v1608
      %1673 = vst [vmem:[%s307 + $0x68] sm:$0xf] %v1609
      %1674 = vst [vmem:[%s307 + $0x6c] sm:$0xf] %v1610
      %1675 = vst [vmem:[%s307 + $0x70] sm:$0xf] %v1611
      %1676 = vst [vmem:[%s307 + $0x74] sm:$0xf] %v1612
      %1677 = vst [vmem:[%s307 + $0x78] sm:$0xf] %v1613
      %1678 = vst [vmem:[%s307 + $0x7c] sm:$0xf] %v1614
      %s1679 = smul.u32 32, %s19
      %p1680 = scmp.lt.s32.totalorder %s1679, 63
      %s1681 = scalar_select %p1680, %s1679, 63
      %s1682 = smul.addr %s1681, 4
      %s1683 = scalar_lea.vmem %s8, %s1682
      // Predicated region
      $region53: #{bottleneck_forward.1} parent=51 // pred_check
        %p1684 = pneg %p210
      $region54: #{bottleneck_forward.1} parent=51 // pred_check_branch
        %1686 = sbr.rel (%p1684) target = $region56
      $region55: #{bottleneck_forward.1} parent=51 // pred_region
        %s1687 = smul.u32 32, %s19
      $region56: #{bottleneck_forward.1} parent=51 // pred_fallthru
        _
    $region52: #{bottleneck_forward.1} parent=5 // pred_fallthru
      _
    %p1688 = scmp.le.s32.totalorder 2, %s14
    // Predicated region
    $region57: #{bottleneck_forward.1} parent=5 // pred_check
      %p1689 = pneg %p1688
    $region58: #{bottleneck_forward.1} parent=5 // pred_check_branch
      %1691 = sbr.rel (%p1689) target = $region60
    $region59: #{bottleneck_forward.1} parent=5 // pred_region
      %s1692 = ssub.s32 %s14, 2
      // Predicated region
      $region61: #{bottleneck_forward.1} parent=59 // pred_check
        %p1693 = pneg %p216
      $region62: #{bottleneck_forward.1} parent=59 // pred_check_branch
        %1695 = sbr.rel (%p1693) target = $region64
      $region63: #{bottleneck_forward.1} parent=59 // pred_region
        %s1696 = smul.u32 32, %s20
        %p1697 = scmp.lt.s32.totalorder %s1696, 63
        %s1698 = scalar_select %p1697, %s1696, 63
        %s1699 = smul.addr %s1698, 4
        %s1700 = scalar_lea.vmem %s8, %s1699
      $region64: #{bottleneck_forward.1} parent=59 // pred_fallthru
        _
    $region60: #{bottleneck_forward.1} parent=5 // pred_fallthru
      _
  $region6: #{bottleneck_forward.1} parent=0 // loop_footer
    %s18 = sadd.s32 1, %s14
  $region7: #{bottleneck_forward.1} parent=0 // loop_footer_branch
    %13 = sbr.rel target = $region3
  $region8: #{bottleneck_forward.1} parent=0 // loop_exit
    _

</llo_original>
